<compile_context>
chip_gen: v5e
topology: v5e:2x2
jax: 0.10.0
libtpu: 0.0.40
codegen_flags: <defaults>
</compile_context>

<pallas_src>
import jax
import jax.numpy as jnp
from jax.experimental import pallas as pl
from jax.experimental.pallas import tpu as pltpu

# ----- config consistent with the module (d_model, nhead=8, dim_feedforward, num_layers) -----
D_MODEL = 128          # stands in for input_dim = target_dim = 768
NHEAD = 8
HEAD_DIM = D_MODEL // NHEAD
FFN_DIM = 64           # stands in for hidden_dim = 512
NUM_LAYERS = 4
EPS = 1e-5
MM_DTYPE = jnp.bfloat16    # MXU operand dtype (accumulation stays f32)
W_DTYPE = MM_DTYPE         # weights pre-cast to bf16 in HBM

# dot_general dimension numbers: contract last dims of both operands (A @ B^T, no relayout).
_TRANS_B = (((1,), (1,)), ((), ()))


# --------------------------------------------------------------------------------------
# In-kernel helpers
# --------------------------------------------------------------------------------------
def _mm(a, w_bf16):
    """Activation (f32/bf16) x pre-cast bf16 weight -> f32-accumulate MXU matmul."""
    return jnp.dot(a.astype(MM_DTYPE), w_bf16, preferred_element_type=jnp.float32)


def _ln(x, g, b):
    """LayerNorm over last dim with affine (g, b); f32 math."""
    mean = jnp.mean(x, axis=-1, keepdims=True)
    xc = x - mean
    var = jnp.mean(xc * xc, axis=-1, keepdims=True)
    return xc * jax.lax.rsqrt(var + EPS) * g + b


def _attention_into(q, k, v, out_ref):
    """q: (Sq, E), k/v: (Sk, E), all bf16 (1/sqrt(hd) already folded into the Q projection).

    Per-head results are written into the f32 VMEM scratch `out_ref[:, h*hd:(h+1)*hd]`
    (no jnp.concatenate; shorter live ranges, no XLU relayout)."""
    for h in range(NHEAD):                                   # static unroll over heads
        lo = h * HEAD_DIM
        qh = q[:, lo:lo + HEAD_DIM]
        kh = k[:, lo:lo + HEAD_DIM]
        vh = v[:, lo:lo + HEAD_DIM]
        # QK^T without a materialized transpose of k.
        s = jax.lax.dot_general(qh, kh, _TRANS_B, preferred_element_type=jnp.float32)
        s = s - jnp.max(s, axis=-1, keepdims=True)
        p = jnp.exp(s)
        denom = jnp.sum(p, axis=-1, keepdims=True)
        # approx reciprocal on the EUP slot; ~2^-12 rel. err vs exact divide.
        p = p * pl.reciprocal(denom, approx=True)
        out_ref[:, lo:lo + HEAD_DIM] = jnp.dot(
            p.astype(MM_DTYPE), vh, preferred_element_type=jnp.float32)


# --------------------------------------------------------------------------------------
# Fused encoder stack kernel: grid = (batch, layer); output block is layer-resident.
# --------------------------------------------------------------------------------------
def _encoder_stack_kernel(x_ref,
                          in_w_ref, in_b_ref, out_w_ref, out_b_ref,
                          ln1_g_ref, ln1_b_ref,
                          l1_w_ref, l1_b_ref, l2_w_ref, l2_b_ref,
                          ln2_g_ref, ln2_b_ref,
                          o_ref, attn_out):
    E = D_MODEL
    layer = pl.program_id(1)

    # Layer 0: seed the grid-resident output block with the input activation.
    @pl.when(layer == 0)
    def _():
        o_ref[0] = x_ref[0]

    x = o_ref[0].astype(jnp.float32)                              # (S, E)

    # --- self-attention: fused lane-dense QKV projection, heads split in-VMEM ---
    qkv = (_mm(x, in_w_ref[0]) + in_b_ref[0]).astype(MM_DTYPE)    # (S, 3E) bf16
    _attention_into(qkv[:, :E], qkv[:, E:2 * E], qkv[:, 2 * E:], attn_out)
    a = _mm(attn_out[...], out_w_ref[0]) + out_b_ref[0]           # (S, E) f32
    h1 = _ln(x + a, ln1_g_ref[0], ln1_b_ref[0])                   # post-norm

    # --- feed-forward (ReLU); intermediate stays in vregs/VMEM ---
    f = jnp.maximum(_mm(h1, l1_w_ref[0]) + l1_b_ref[0], 0.0)      # (S, F)
    f = _mm(f, l2_w_ref[0]) + l2_b_ref[0]                         # (S, E)
    o_ref[0] = _ln(h1 + f, ln2_g_ref[0], ln2_b_ref[0]).astype(o_ref.dtype)


# --------------------------------------------------------------------------------------
# Fused decoder layer kernel: grid = (batch,)
# --------------------------------------------------------------------------------------
def _decoder_layer_kernel(x_ref, mem_ref,
                          sa_w_ref, sa_b_ref, sa_ow_ref, sa_ob_ref,
                          ln1_g_ref, ln1_b_ref,
                          ca_w_ref, ca_b_ref, ca_ow_ref, ca_ob_ref,
                          ln2_g_ref, ln2_b_ref,
                          l1_w_ref, l1_b_ref, l2_w_ref, l2_b_ref,
                          ln3_g_ref, ln3_b_ref,
                          o_ref, attn_out):
    E = D_MODEL
    x = x_ref[0].astype(jnp.float32)                              # (St, E)
    mem = mem_ref[0].astype(jnp.float32)                          # (Ss, E)

    # --- self-attention on targets (no mask, as in the reference call) ---
    qkv = (_mm(x, sa_w_ref[...]) + sa_b_ref[...]).astype(MM_DTYPE)
    _attention_into(qkv[:, :E], qkv[:, E:2 * E], qkv[:, 2 * E:], attn_out)
    a = _mm(attn_out[...], sa_ow_ref[...]) + sa_ob_ref[...]
    x = _ln(x + a, ln1_g_ref[...], ln1_b_ref[...])

    # --- cross-attention: q from targets, k/v from encoder memory ---
    ca_w = ca_w_ref[...]
    ca_b = ca_b_ref[...]
    q = (_mm(x, ca_w[:, :E]) + ca_b[:, :E]).astype(MM_DTYPE)
    k = (_mm(mem, ca_w[:, E:2 * E]) + ca_b[:, E:2 * E]).astype(MM_DTYPE)
    v = (_mm(mem, ca_w[:, 2 * E:]) + ca_b[:, 2 * E:]).astype(MM_DTYPE)
    _attention_into(q, k, v, attn_out)
    a2 = _mm(attn_out[...], ca_ow_ref[...]) + ca_ob_ref[...]
    x = _ln(x + a2, ln2_g_ref[...], ln2_b_ref[...])

    # --- feed-forward (ReLU) ---
    f = jnp.maximum(_mm(x, l1_w_ref[...]) + l1_b_ref[...], 0.0)
    f = _mm(f, l2_w_ref[...]) + l2_b_ref[...]
    o_ref[0] = _ln(x + f, ln3_g_ref[...], ln3_b_ref[...]).astype(o_ref.dtype)


# --------------------------------------------------------------------------------------
# Wrappers
# --------------------------------------------------------------------------------------
def _full_spec(a):
    """Grid-invariant whole-array operand (decoder weights).

    TODO(synk): at real dims add pipeline_mode=pl.Buffered(1) (constant index map means
    double-buffering only doubles weight VMEM) and/or raise vmem_limit_bytes; unnecessary
    at these toy dims."""
    return pl.BlockSpec(a.shape, lambda b: tuple(0 for _ in a.shape))


def encoder_stack(x, p):
    """Run all NUM_LAYERS encoder layers in one pallas_call."""
    B, S, E = x.shape
    F = FFN_DIM
    args = [p["attn"]["in_w"], p["attn"]["in_b"],
            p["attn"]["out_w"], p["attn"]["out_b"],
            p["ln1_g"], p["ln1_b"],
            p["l1_w"], p["l1_b"], p["l2_w"], p["l2_b"],
            p["ln2_g"], p["ln2_b"]]
    L = args[0].shape[0]

    # Stacked per-layer weights: one layer's slice per grid step along the "arbitrary" axis
    # (default double-buffering prefetches layer l+1 weights while layer l computes).
    w_specs = [pl.BlockSpec((1,) + tuple(a.shape[1:]), lambda b, l: (l, 0, 0)) for a in args]
    in_specs = [pl.BlockSpec((1, S, E), lambda b, l: (b, 0, 0))] + w_specs

    w_bytes = int(sum(a.size * a.dtype.itemsize for a in args))
    per_layer_flops = 2 * S * E * (4 * E + 2 * F) + 4 * S * S * E
    cost = pl.CostEstimate(
        flops=int(B * L * per_layer_flops),
        transcendentals=int(B * L * (NHEAD * S * S + NHEAD * S + 2 * S)),
        bytes_accessed=int(2 * B * S * E * 4 + B * w_bytes),
    )

    return pl.pallas_call(
        _encoder_stack_kernel,
        out_shape=jax.ShapeDtypeStruct((B, S, E), x.dtype),
        grid=(B, L),
        in_specs=in_specs,
        # Constant index over the layer axis -> activation stays resident in VMEM across layers.
        out_specs=pl.BlockSpec((1, S, E), lambda b, l: (b, 0, 0)),
        scratch_shapes=[pltpu.VMEM((S, E), jnp.float32)],       # per-head attention output
        compiler_params=pltpu.CompilerParams(
            dimension_semantics=("parallel", "arbitrary")),      # batch across TCs, layers serial
        cost_estimate=cost,
    )(x, *args)


def decoder_layer(tgt, mem, p):
    B, St, E = tgt.shape
    Ss = mem.shape[1]
    F = FFN_DIM
    args = [p["self_attn"]["in_w"], p["self_attn"]["in_b"],
            p["self_attn"]["out_w"], p["self_attn"]["out_b"],
            p["ln1_g"], p["ln1_b"],
            p["cross_attn"]["in_w"], p["cross_attn"]["in_b"],
            p["cross_attn"]["out_w"], p["cross_attn"]["out_b"],
            p["ln2_g"], p["ln2_b"],
            p["l1_w"], p["l1_b"], p["l2_w"], p["l2_b"],
            p["ln3_g"], p["ln3_b"]]
    in_specs = [pl.BlockSpec((1, St, E), lambda b: (b, 0, 0)),
                pl.BlockSpec((1, Ss, E), lambda b: (b, 0, 0))]
    in_specs += [_full_spec(a) for a in args]

    w_bytes = int(sum(a.size * a.dtype.itemsize for a in args))
    per_flops = (2 * St * E * 3 * E + 4 * St * St * E + 2 * St * E * E         # self-attn
                 + 2 * St * E * E + 4 * Ss * E * E + 4 * St * Ss * E + 2 * St * E * E  # cross-attn
                 + 4 * St * E * F)                                              # FFN
    cost = pl.CostEstimate(
        flops=int(B * per_flops),
        transcendentals=int(B * (NHEAD * St * St + NHEAD * St * Ss + 2 * NHEAD * St + 3 * St)),
        bytes_accessed=int(B * (2 * St * E + Ss * E) * 4 + w_bytes),
    )

    return pl.pallas_call(
        _decoder_layer_kernel,
        out_shape=jax.ShapeDtypeStruct((B, St, E), tgt.dtype),
        grid=(B,),
        in_specs=in_specs,
        out_specs=pl.BlockSpec((1, St, E), lambda b: (b, 0, 0)),
        scratch_shapes=[pltpu.VMEM((St, E), jnp.float32)],
        compiler_params=pltpu.CompilerParams(dimension_semantics=("parallel",)),
        cost_estimate=cost,
    )(tgt, mem, *args)


def custom_transformer(params, inputs, targets):
    encoded = encoder_stack(inputs, params["encoder"])
    # PyTorch TransformerEncoder default has no final norm.
    return decoder_layer(targets, encoded, params["decoder"])


# --------------------------------------------------------------------------------------
# Deterministic parameter init.  Weights are stored pre-transposed (K, N) and pre-cast to
# bf16; the 1/sqrt(head_dim) attention scale is folded into the Q projection columns.
# (When converting real PyTorch weights, do the same transpose / scale-fold / bf16 cast.)
# --------------------------------------------------------------------------------------
def _uniform(key, shape, scale):
    return jax.random.uniform(key, shape, jnp.float32, -scale, scale)


def init_attn(key, E):
    k1, k2, k3, k4 = jax.random.split(key, 4)
    s = 1.0 / float(E) ** 0.5
    in_w = _uniform(k1, (E, 3 * E), s)                  # fused QKV, (K, 3E)
    in_b = _uniform(k2, (1, 3 * E), s)
    scale = 1.0 / float(HEAD_DIM) ** 0.5
    in_w = in_w.at[:, :E].multiply(scale)               # fold 1/sqrt(hd) into Q columns
    in_b = in_b.at[:, :E].multiply(scale)
    return {
        "in_w": in_w.astype(W_DTYPE),
        "in_b": in_b.astype(W_DTYPE),
        "out_w": _uniform(k3, (E, E), s).astype(W_DTYPE),
        "out_b": _uniform(k4, (1, E), s).astype(W_DTYPE),
    }


def init_ffn_and_norms(key, E, F, n_norms):
    k1, k2, k3, k4 = jax.random.split(key, 4)
    se, sf = 1.0 / float(E) ** 0.5, 1.0 / float(F) ** 0.5
    p = {
        "l1_w": _uniform(k1, (E, F), se).astype(W_DTYPE),
        "l1_b": _uniform(k2, (1, F), se).astype(W_DTYPE),
        "l2_w": _uniform(k3, (F, E), sf).astype(W_DTYPE),
        "l2_b": _uniform(k4, (1, E), sf).astype(W_DTYPE),
    }
    for n in range(1, n_norms + 1):
        p[f"ln{n}_g"] = jnp.ones((1, E), jnp.float32)    # LN affine stays f32
        p[f"ln{n}_b"] = jnp.zeros((1, E), jnp.float32)
    return p


def init_encoder_layer(key, E, F):
    k1, k2 = jax.random.split(key)
    p = {"attn": init_attn(k1, E)}
    p.update(init_ffn_and_norms(k2, E, F, n_norms=2))
    return p


def init_encoder_stack(key, L, E, F):
    keys = jax.random.split(key, L)
    layers = [init_encoder_layer(k, E, F) for k in keys]
    # Stack every parameter across layers -> leading layer dim for the (B, L) grid.
    return jax.tree_util.tree_map(lambda *xs: jnp.stack(xs, axis=0), *layers)


def init_decoder_layer(key, E, F):
    k1, k2, k3 = jax.random.split(key, 3)
    p = {"self_attn": init_attn(k1, E), "cross_attn": init_attn(k2, E)}
    p.update(init_ffn_and_norms(k3, E, F, n_norms=3))
    return p


def init_model(key):
    k_enc, k_dec = jax.random.split(key)
    return {
        "encoder": init_encoder_stack(k_enc, NUM_LAYERS, D_MODEL, FFN_DIM),
        "decoder": init_decoder_layer(k_dec, D_MODEL, FFN_DIM),
    }


# --------------------------------------------------------------------------------------
if __name__ == "__main__":
    key = jax.random.PRNGKey(0)
    k_in, k_tgt, k_par = jax.random.split(key, 3)

    # B=2 keeps an even number of "parallel" grid steps (both TensorCores busy on v7x).
    B, S_SRC, S_TGT = 2, 16, 8
    inputs = jax.random.normal(k_in, (B, S_SRC, D_MODEL), jnp.float32)
    targets = jax.random.normal(k_tgt, (B, S_TGT, D_MODEL), jnp.float32)

    params = init_model(k_par)
    fwd = jax.jit(custom_transformer)
    out = jax.block_until_ready(fwd(params, inputs, targets))

    assert out.shape == (B, S_TGT, D_MODEL), out.shape
    assert bool(jnp.all(jnp.isfinite(out)))
    print("KERNEL_OK")
</pallas_src>

<mosaic_0001>
module attributes {stable_mosaic.version = 11 : i64} {
  func.func @_encoder_stack_kernel(%arg0: i32, %arg1: i32, %arg2: memref<1x16x128xf32, #tpu.memory_space<vmem>>, %arg3: memref<1x128x384xbf16, #tpu.memory_space<vmem>>, %arg4: memref<1x1x384xbf16, #tpu.memory_space<vmem>>, %arg5: memref<1x128x128xbf16, #tpu.memory_space<vmem>>, %arg6: memref<1x1x128xbf16, #tpu.memory_space<vmem>>, %arg7: memref<1x1x128xf32, #tpu.memory_space<vmem>>, %arg8: memref<1x1x128xf32, #tpu.memory_space<vmem>>, %arg9: memref<1x128x64xbf16, #tpu.memory_space<vmem>>, %arg10: memref<1x1x64xbf16, #tpu.memory_space<vmem>>, %arg11: memref<1x64x128xbf16, #tpu.memory_space<vmem>>, %arg12: memref<1x1x128xbf16, #tpu.memory_space<vmem>>, %arg13: memref<1x1x128xf32, #tpu.memory_space<vmem>>, %arg14: memref<1x1x128xf32, #tpu.memory_space<vmem>>, %arg15: memref<1x16x128xf32, #tpu.memory_space<vmem>>, %arg16: memref<16x128xf32, #tpu.memory_space<vmem>>) attributes {dimension_semantics = [#tpu.dimension_semantics<parallel>, #tpu.dimension_semantics<arbitrary>], iteration_bounds = array<i64: 2, 4>, scalar_prefetch = 0 : i64, scratch_operands = 1 : i64, tpu.core_type = #tpu.core_type<tc>, window_params = [{transform_indices = @transform_0, window_bounds = array<i64: 1, 16, 128>}, {transform_indices = @transform_1, window_bounds = array<i64: 1, 128, 384>}, {transform_indices = @transform_2, window_bounds = array<i64: 1, 1, 384>}, {transform_indices = @transform_3, window_bounds = array<i64: 1, 128, 128>}, {transform_indices = @transform_4, window_bounds = array<i64: 1, 1, 128>}, {transform_indices = @transform_5, window_bounds = array<i64: 1, 1, 128>}, {transform_indices = @transform_6, window_bounds = array<i64: 1, 1, 128>}, {transform_indices = @transform_7, window_bounds = array<i64: 1, 128, 64>}, {transform_indices = @transform_8, window_bounds = array<i64: 1, 1, 64>}, {transform_indices = @transform_9, window_bounds = array<i64: 1, 64, 128>}, {transform_indices = @transform_10, window_bounds = array<i64: 1, 1, 128>}, {transform_indices = @transform_11, window_bounds = array<i64: 1, 1, 128>}, {transform_indices = @transform_12, window_bounds = array<i64: 1, 1, 128>}, {transform_indices = @transform_13, window_bounds = array<i64: 1, 16, 128>}]} {
    %c0_i32 = arith.constant 0 : i32
    %0 = arith.cmpi eq, %arg1, %c0_i32 : i32
    %1 = arith.extui %0 : i1 to i32
    %c0_i32_0 = arith.constant 0 : i32
    %2 = arith.cmpi ne, %1, %c0_i32_0 : i32
    scf.if %2 {
      %c0_99 = arith.constant 0 : index
      %c0_100 = arith.constant 0 : index
      %c0_101 = arith.constant 0 : index
      %237 = vector.load %arg2[%c0_99, %c0_100, %c0_101] : memref<1x16x128xf32, #tpu.memory_space<vmem>>, vector<1x16x128xf32>
      %238 = vector.shape_cast %237 : vector<1x16x128xf32> to vector<16x128xf32>
      %c0_102 = arith.constant 0 : index
      %c0_103 = arith.constant 0 : index
      %c0_104 = arith.constant 0 : index
      %239 = vector.load %arg15[%c0_102, %c0_103, %c0_104] : memref<1x16x128xf32, #tpu.memory_space<vmem>>, vector<1x16x128xf32>
      %240 = vector.shape_cast %239 : vector<1x16x128xf32> to vector<16x128xf32>
      %241 = vector.shape_cast %238 : vector<16x128xf32> to vector<1x16x128xf32>
      tpu.vector_store %arg15[%c0_102, %c0_103, %c0_104], %241 {strides = array<i32>} : memref<1x16x128xf32, #tpu.memory_space<vmem>>, vector<1x16x128xf32>,
    } else {
    }
    %c0 = arith.constant 0 : index
    %c0_1 = arith.constant 0 : index
    %c0_2 = arith.constant 0 : index
    %3 = vector.load %arg15[%c0, %c0_1, %c0_2] : memref<1x16x128xf32, #tpu.memory_space<vmem>>, vector<1x16x128xf32>
    %4 = vector.shape_cast %3 : vector<1x16x128xf32> to vector<16x128xf32>
    %c0_3 = arith.constant 0 : index
    %c0_4 = arith.constant 0 : index
    %c0_5 = arith.constant 0 : index
    %5 = vector.load %arg3[%c0_3, %c0_4, %c0_5] : memref<1x128x384xbf16, #tpu.memory_space<vmem>>, vector<1x128x384xbf16>
    %6 = vector.shape_cast %5 : vector<1x128x384xbf16> to vector<128x384xbf16>
    %7 = arith.truncf %4 : vector<16x128xf32> to vector<16x128xbf16>
    %cst = arith.constant dense<0.000000e+00> : vector<16x384xf32>
    %8 = tpu.matmul %7, %6, %cst {dimension_numbers = #tpu.dot_dimension_numbers<[1], [0], [0], [1], [0, 0, 1, 1], [], []>} : vector<16x128xbf16>, vector<128x384xbf16>, vector<16x384xf32> -> vector<16x384xf32>
    %c0_6 = arith.constant 0 : index
    %c0_7 = arith.constant 0 : index
    %c0_8 = arith.constant 0 : index
    %9 = vector.load %arg4[%c0_6, %c0_7, %c0_8] : memref<1x1x384xbf16, #tpu.memory_space<vmem>>, vector<1x1x384xbf16>
    %10 = vector.shape_cast %9 : vector<1x1x384xbf16> to vector<1x384xbf16>
    %11 = arith.extf %10 : vector<1x384xbf16> to vector<1x384xf32>
    %12 = vector.broadcast %11 : vector<1x384xf32> to vector<16x384xf32>
    %13 = arith.addf %8, %12 : vector<16x384xf32>
    %14 = arith.truncf %13 : vector<16x384xf32> to vector<16x384xbf16>
    %15 = vector.extract_strided_slice %14 {offsets = [0, 0], sizes = [16, 128], strides = [1, 1]} : vector<16x384xbf16> to vector<16x128xbf16>
    %16 = vector.extract_strided_slice %14 {offsets = [0, 128], sizes = [16, 128], strides = [1, 1]} : vector<16x384xbf16> to vector<16x128xbf16>
    %17 = vector.extract_strided_slice %14 {offsets = [0, 256], sizes = [16, 128], strides = [1, 1]} : vector<16x384xbf16> to vector<16x128xbf16>
    %18 = vector.extract_strided_slice %15 {offsets = [0, 0], sizes = [16, 16], strides = [1, 1]} : vector<16x128xbf16> to vector<16x16xbf16>
    %19 = vector.extract_strided_slice %16 {offsets = [0, 0], sizes = [16, 16], strides = [1, 1]} : vector<16x128xbf16> to vector<16x16xbf16>
    %20 = vector.extract_strided_slice %17 {offsets = [0, 0], sizes = [16, 16], strides = [1, 1]} : vector<16x128xbf16> to vector<16x16xbf16>
    %cst_9 = arith.constant dense<0.000000e+00> : vector<16x16xf32>
    %21 = tpu.matmul %18, %19, %cst_9 {dimension_numbers = #tpu.dot_dimension_numbers<[1], [1], [0], [0], [0, 0, 1, 0], [], []>} : vector<16x16xbf16>, vector<16x16xbf16>, vector<16x16xf32> -> vector<16x16xf32>
    %cst_10 = arith.constant dense<0xFF800000> : vector<16xf32>
    %22 = vector.multi_reduction <maximumf>, %21, %cst_10 [1] : vector<16x16xf32> to vector<16xf32>
    %23 = vector.shape_cast %22 : vector<16xf32> to vector<16x1xf32>
    %24 = vector.broadcast %23 : vector<16x1xf32> to vector<16x16xf32>
    %25 = arith.subf %21, %24 : vector<16x16xf32>
    %26 = math.exp %25 : vector<16x16xf32>
    %cst_11 = arith.constant dense<0.000000e+00> : vector<16xf32>
    %27 = vector.multi_reduction <add>, %26, %cst_11 [1] : vector<16x16xf32> to vector<16xf32>
    %28 = vector.shape_cast %27 : vector<16xf32> to vector<16x1xf32>
    %29 = tpu.reciprocal %28 {approx = true} : vector<16x1xf32> -> vector<16x1xf32>
    %30 = vector.broadcast %29 : vector<16x1xf32> to vector<16x16xf32>
    %31 = arith.mulf %26, %30 : vector<16x16xf32>
    %32 = arith.truncf %31 : vector<16x16xf32> to vector<16x16xbf16>
    %cst_12 = arith.constant dense<0.000000e+00> : vector<16x16xf32>
    %33 = tpu.matmul %32, %20, %cst_12 {dimension_numbers = #tpu.dot_dimension_numbers<[1], [0], [0], [1], [0, 0, 1, 1], [], []>} : vector<16x16xbf16>, vector<16x16xbf16>, vector<16x16xf32> -> vector<16x16xf32>
    %c0_13 = arith.constant 0 : index
    %c0_14 = arith.constant 0 : index
    %34 = vector.load %arg16[%c0_13, %c0_14] : memref<16x128xf32, #tpu.memory_space<vmem>>, vector<16x16xf32>
    tpu.vector_store %arg16[%c0_13, %c0_14], %33 {strides = array<i32>} : memref<16x128xf32, #tpu.memory_space<vmem>>, vector<16x16xf32>,
    %35 = vector.extract_strided_slice %15 {offsets = [0, 16], sizes = [16, 16], strides = [1, 1]} : vector<16x128xbf16> to vector<16x16xbf16>
    %36 = vector.extract_strided_slice %16 {offsets = [0, 16], sizes = [16, 16], strides = [1, 1]} : vector<16x128xbf16> to vector<16x16xbf16>
    %37 = vector.extract_strided_slice %17 {offsets = [0, 16], sizes = [16, 16], strides = [1, 1]} : vector<16x128xbf16> to vector<16x16xbf16>
    %cst_15 = arith.constant dense<0.000000e+00> : vector<16x16xf32>
    %38 = tpu.matmul %35, %36, %cst_15 {dimension_numbers = #tpu.dot_dimension_numbers<[1], [1], [0], [0], [0, 0, 1, 0], [], []>} : vector<16x16xbf16>, vector<16x16xbf16>, vector<16x16xf32> -> vector<16x16xf32>
    %cst_16 = arith.constant dense<0xFF800000> : vector<16xf32>
    %39 = vector.multi_reduction <maximumf>, %38, %cst_16 [1] : vector<16x16xf32> to vector<16xf32>
    %40 = vector.shape_cast %39 : vector<16xf32> to vector<16x1xf32>
    %41 = vector.broadcast %40 : vector<16x1xf32> to vector<16x16xf32>
    %42 = arith.subf %38, %41 : vector<16x16xf32>
    %43 = math.exp %42 : vector<16x16xf32>
    %cst_17 = arith.constant dense<0.000000e+00> : vector<16xf32>
    %44 = vector.multi_reduction <add>, %43, %cst_17 [1] : vector<16x16xf32> to vector<16xf32>
    %45 = vector.shape_cast %44 : vector<16xf32> to vector<16x1xf32>
    %46 = tpu.reciprocal %45 {approx = true} : vector<16x1xf32> -> vector<16x1xf32>
    %47 = vector.broadcast %46 : vector<16x1xf32> to vector<16x16xf32>
    %48 = arith.mulf %43, %47 : vector<16x16xf32>
    %49 = arith.truncf %48 : vector<16x16xf32> to vector<16x16xbf16>
    %cst_18 = arith.constant dense<0.000000e+00> : vector<16x16xf32>
    %50 = tpu.matmul %49, %37, %cst_18 {dimension_numbers = #tpu.dot_dimension_numbers<[1], [0], [0], [1], [0, 0, 1, 1], [], []>} : vector<16x16xbf16>, vector<16x16xbf16>, vector<16x16xf32> -> vector<16x16xf32>
    %c0_19 = arith.constant 0 : index
    %c16 = arith.constant 16 : index
    %51 = vector.load %arg16[%c0_19, %c16] : memref<16x128xf32, #tpu.memory_space<vmem>>, vector<16x16xf32>
    tpu.vector_store %arg16[%c0_19, %c16], %50 {strides = array<i32>} : memref<16x128xf32, #tpu.memory_space<vmem>>, vector<16x16xf32>,
    %52 = vector.extract_strided_slice %15 {offsets = [0, 32], sizes = [16, 16], strides = [1, 1]} : vector<16x128xbf16> to vector<16x16xbf16>
    %53 = vector.extract_strided_slice %16 {offsets = [0, 32], sizes = [16, 16], strides = [1, 1]} : vector<16x128xbf16> to vector<16x16xbf16>
    %54 = vector.extract_strided_slice %17 {offsets = [0, 32], sizes = [16, 16], strides = [1, 1]} : vector<16x128xbf16> to vector<16x16xbf16>
    %cst_20 = arith.constant dense<0.000000e+00> : vector<16x16xf32>
    %55 = tpu.matmul %52, %53, %cst_20 {dimension_numbers = #tpu.dot_dimension_numbers<[1], [1], [0], [0], [0, 0, 1, 0], [], []>} : vector<16x16xbf16>, vector<16x16xbf16>, vector<16x16xf32> -> vector<16x16xf32>
    %cst_21 = arith.constant dense<0xFF800000> : vector<16xf32>
    %56 = vector.multi_reduction <maximumf>, %55, %cst_21 [1] : vector<16x16xf32> to vector<16xf32>
    %57 = vector.shape_cast %56 : vector<16xf32> to vector<16x1xf32>
    %58 = vector.broadcast %57 : vector<16x1xf32> to vector<16x16xf32>
    %59 = arith.subf %55, %58 : vector<16x16xf32>
    %60 = math.exp %59 : vector<16x16xf32>
    %cst_22 = arith.constant dense<0.000000e+00> : vector<16xf32>
    %61 = vector.multi_reduction <add>, %60, %cst_22 [1] : vector<16x16xf32> to vector<16xf32>
    %62 = vector.shape_cast %61 : vector<16xf32> to vector<16x1xf32>
    %63 = tpu.reciprocal %62 {approx = true} : vector<16x1xf32> -> vector<16x1xf32>
    %64 = vector.broadcast %63 : vector<16x1xf32> to vector<16x16xf32>
    %65 = arith.mulf %60, %64 : vector<16x16xf32>
    %66 = arith.truncf %65 : vector<16x16xf32> to vector<16x16xbf16>
    %cst_23 = arith.constant dense<0.000000e+00> : vector<16x16xf32>
    %67 = tpu.matmul %66, %54, %cst_23 {dimension_numbers = #tpu.dot_dimension_numbers<[1], [0], [0], [1], [0, 0, 1, 1], [], []>} : vector<16x16xbf16>, vector<16x16xbf16>, vector<16x16xf32> -> vector<16x16xf32>
    %c0_24 = arith.constant 0 : index
    %c32 = arith.constant 32 : index
    %68 = vector.load %arg16[%c0_24, %c32] : memref<16x128xf32, #tpu.memory_space<vmem>>, vector<16x16xf32>
    tpu.vector_store %arg16[%c0_24, %c32], %67 {strides = array<i32>} : memref<16x128xf32, #tpu.memory_space<vmem>>, vector<16x16xf32>,
    %69 = vector.extract_strided_slice %15 {offsets = [0, 48], sizes = [16, 16], strides = [1, 1]} : vector<16x128xbf16> to vector<16x16xbf16>
    %70 = vector.extract_strided_slice %16 {offsets = [0, 48], sizes = [16, 16], strides = [1, 1]} : vector<16x128xbf16> to vector<16x16xbf16>
    %71 = vector.extract_strided_slice %17 {offsets = [0, 48], sizes = [16, 16], strides = [1, 1]} : vector<16x128xbf16> to vector<16x16xbf16>
    %cst_25 = arith.constant dense<0.000000e+00> : vector<16x16xf32>
    %72 = tpu.matmul %69, %70, %cst_25 {dimension_numbers = #tpu.dot_dimension_numbers<[1], [1], [0], [0], [0, 0, 1, 0], [], []>} : vector<16x16xbf16>, vector<16x16xbf16>, vector<16x16xf32> -> vector<16x16xf32>
    %cst_26 = arith.constant dense<0xFF800000> : vector<16xf32>
    %73 = vector.multi_reduction <maximumf>, %72, %cst_26 [1] : vector<16x16xf32> to vector<16xf32>
    %74 = vector.shape_cast %73 : vector<16xf32> to vector<16x1xf32>
    %75 = vector.broadcast %74 : vector<16x1xf32> to vector<16x16xf32>
    %76 = arith.subf %72, %75 : vector<16x16xf32>
    %77 = math.exp %76 : vector<16x16xf32>
    %cst_27 = arith.constant dense<0.000000e+00> : vector<16xf32>
    %78 = vector.multi_reduction <add>, %77, %cst_27 [1] : vector<16x16xf32> to vector<16xf32>
    %79 = vector.shape_cast %78 : vector<16xf32> to vector<16x1xf32>
    %80 = tpu.reciprocal %79 {approx = true} : vector<16x1xf32> -> vector<16x1xf32>
    %81 = vector.broadcast %80 : vector<16x1xf32> to vector<16x16xf32>
    %82 = arith.mulf %77, %81 : vector<16x16xf32>
    %83 = arith.truncf %82 : vector<16x16xf32> to vector<16x16xbf16>
    %cst_28 = arith.constant dense<0.000000e+00> : vector<16x16xf32>
    %84 = tpu.matmul %83, %71, %cst_28 {dimension_numbers = #tpu.dot_dimension_numbers<[1], [0], [0], [1], [0, 0, 1, 1], [], []>} : vector<16x16xbf16>, vector<16x16xbf16>, vector<16x16xf32> -> vector<16x16xf32>
    %c0_29 = arith.constant 0 : index
    %c48 = arith.constant 48 : index
    %85 = vector.load %arg16[%c0_29, %c48] : memref<16x128xf32, #tpu.memory_space<vmem>>, vector<16x16xf32>
    tpu.vector_store %arg16[%c0_29, %c48], %84 {strides = array<i32>} : memref<16x128xf32, #tpu.memory_space<vmem>>, vector<16x16xf32>,
    %86 = vector.extract_strided_slice %15 {offsets = [0, 64], sizes = [16, 16], strides = [1, 1]} : vector<16x128xbf16> to vector<16x16xbf16>
    %87 = vector.extract_strided_slice %16 {offsets = [0, 64], sizes = [16, 16], strides = [1, 1]} : vector<16x128xbf16> to vector<16x16xbf16>
    %88 = vector.extract_strided_slice %17 {offsets = [0, 64], sizes = [16, 16], strides = [1, 1]} : vector<16x128xbf16> to vector<16x16xbf16>
    %cst_30 = arith.constant dense<0.000000e+00> : vector<16x16xf32>
    %89 = tpu.matmul %86, %87, %cst_30 {dimension_numbers = #tpu.dot_dimension_numbers<[1], [1], [0], [0], [0, 0, 1, 0], [], []>} : vector<16x16xbf16>, vector<16x16xbf16>, vector<16x16xf32> -> vector<16x16xf32>
    %cst_31 = arith.constant dense<0xFF800000> : vector<16xf32>
    %90 = vector.multi_reduction <maximumf>, %89, %cst_31 [1] : vector<16x16xf32> to vector<16xf32>
    %91 = vector.shape_cast %90 : vector<16xf32> to vector<16x1xf32>
    %92 = vector.broadcast %91 : vector<16x1xf32> to vector<16x16xf32>
    %93 = arith.subf %89, %92 : vector<16x16xf32>
    %94 = math.exp %93 : vector<16x16xf32>
    %cst_32 = arith.constant dense<0.000000e+00> : vector<16xf32>
    %95 = vector.multi_reduction <add>, %94, %cst_32 [1] : vector<16x16xf32> to vector<16xf32>
    %96 = vector.shape_cast %95 : vector<16xf32> to vector<16x1xf32>
    %97 = tpu.reciprocal %96 {approx = true} : vector<16x1xf32> -> vector<16x1xf32>
    %98 = vector.broadcast %97 : vector<16x1xf32> to vector<16x16xf32>
    %99 = arith.mulf %94, %98 : vector<16x16xf32>
    %100 = arith.truncf %99 : vector<16x16xf32> to vector<16x16xbf16>
    %cst_33 = arith.constant dense<0.000000e+00> : vector<16x16xf32>
    %101 = tpu.matmul %100, %88, %cst_33 {dimension_numbers = #tpu.dot_dimension_numbers<[1], [0], [0], [1], [0, 0, 1, 1], [], []>} : vector<16x16xbf16>, vector<16x16xbf16>, vector<16x16xf32> -> vector<16x16xf32>
    %c0_34 = arith.constant 0 : index
    %c64 = arith.constant 64 : index
    %102 = vector.load %arg16[%c0_34, %c64] : memref<16x128xf32, #tpu.memory_space<vmem>>, vector<16x16xf32>
    tpu.vector_store %arg16[%c0_34, %c64], %101 {strides = array<i32>} : memref<16x128xf32, #tpu.memory_space<vmem>>, vector<16x16xf32>,
    %103 = vector.extract_strided_slice %15 {offsets = [0, 80], sizes = [16, 16], strides = [1, 1]} : vector<16x128xbf16> to vector<16x16xbf16>
    %104 = vector.extract_strided_slice %16 {offsets = [0, 80], sizes = [16, 16], strides = [1, 1]} : vector<16x128xbf16> to vector<16x16xbf16>
    %105 = vector.extract_strided_slice %17 {offsets = [0, 80], sizes = [16, 16], strides = [1, 1]} : vector<16x128xbf16> to vector<16x16xbf16>
    %cst_35 = arith.constant dense<0.000000e+00> : vector<16x16xf32>
    %106 = tpu.matmul %103, %104, %cst_35 {dimension_numbers = #tpu.dot_dimension_numbers<[1], [1], [0], [0], [0, 0, 1, 0], [], []>} : vector<16x16xbf16>, vector<16x16xbf16>, vector<16x16xf32> -> vector<16x16xf32>
    %cst_36 = arith.constant dense<0xFF800000> : vector<16xf32>
    %107 = vector.multi_reduction <maximumf>, %106, %cst_36 [1] : vector<16x16xf32> to vector<16xf32>
    %108 = vector.shape_cast %107 : vector<16xf32> to vector<16x1xf32>
    %109 = vector.broadcast %108 : vector<16x1xf32> to vector<16x16xf32>
    %110 = arith.subf %106, %109 : vector<16x16xf32>
    %111 = math.exp %110 : vector<16x16xf32>
    %cst_37 = arith.constant dense<0.000000e+00> : vector<16xf32>
    %112 = vector.multi_reduction <add>, %111, %cst_37 [1] : vector<16x16xf32> to vector<16xf32>
    %113 = vector.shape_cast %112 : vector<16xf32> to vector<16x1xf32>
    %114 = tpu.reciprocal %113 {approx = true} : vector<16x1xf32> -> vector<16x1xf32>
    %115 = vector.broadcast %114 : vector<16x1xf32> to vector<16x16xf32>
    %116 = arith.mulf %111, %115 : vector<16x16xf32>
    %117 = arith.truncf %116 : vector<16x16xf32> to vector<16x16xbf16>
    %cst_38 = arith.constant dense<0.000000e+00> : vector<16x16xf32>
    %118 = tpu.matmul %117, %105, %cst_38 {dimension_numbers = #tpu.dot_dimension_numbers<[1], [0], [0], [1], [0, 0, 1, 1], [], []>} : vector<16x16xbf16>, vector<16x16xbf16>, vector<16x16xf32> -> vector<16x16xf32>
    %c0_39 = arith.constant 0 : index
    %c80 = arith.constant 80 : index
    %119 = vector.load %arg16[%c0_39, %c80] : memref<16x128xf32, #tpu.memory_space<vmem>>, vector<16x16xf32>
    tpu.vector_store %arg16[%c0_39, %c80], %118 {strides = array<i32>} : memref<16x128xf32, #tpu.memory_space<vmem>>, vector<16x16xf32>,
    %120 = vector.extract_strided_slice %15 {offsets = [0, 96], sizes = [16, 16], strides = [1, 1]} : vector<16x128xbf16> to vector<16x16xbf16>
    %121 = vector.extract_strided_slice %16 {offsets = [0, 96], sizes = [16, 16], strides = [1, 1]} : vector<16x128xbf16> to vector<16x16xbf16>
    %122 = vector.extract_strided_slice %17 {offsets = [0, 96], sizes = [16, 16], strides = [1, 1]} : vector<16x128xbf16> to vector<16x16xbf16>
    %cst_40 = arith.constant dense<0.000000e+00> : vector<16x16xf32>
    %123 = tpu.matmul %120, %121, %cst_40 {dimension_numbers = #tpu.dot_dimension_numbers<[1], [1], [0], [0], [0, 0, 1, 0], [], []>} : vector<16x16xbf16>, vector<16x16xbf16>, vector<16x16xf32> -> vector<16x16xf32>
    %cst_41 = arith.constant dense<0xFF800000> : vector<16xf32>
    %124 = vector.multi_reduction <maximumf>, %123, %cst_41 [1] : vector<16x16xf32> to vector<16xf32>
    %125 = vector.shape_cast %124 : vector<16xf32> to vector<16x1xf32>
    %126 = vector.broadcast %125 : vector<16x1xf32> to vector<16x16xf32>
    %127 = arith.subf %123, %126 : vector<16x16xf32>
    %128 = math.exp %127 : vector<16x16xf32>
    %cst_42 = arith.constant dense<0.000000e+00> : vector<16xf32>
    %129 = vector.multi_reduction <add>, %128, %cst_42 [1] : vector<16x16xf32> to vector<16xf32>
    %130 = vector.shape_cast %129 : vector<16xf32> to vector<16x1xf32>
    %131 = tpu.reciprocal %130 {approx = true} : vector<16x1xf32> -> vector<16x1xf32>
    %132 = vector.broadcast %131 : vector<16x1xf32> to vector<16x16xf32>
    %133 = arith.mulf %128, %132 : vector<16x16xf32>
    %134 = arith.truncf %133 : vector<16x16xf32> to vector<16x16xbf16>
    %cst_43 = arith.constant dense<0.000000e+00> : vector<16x16xf32>
    %135 = tpu.matmul %134, %122, %cst_43 {dimension_numbers = #tpu.dot_dimension_numbers<[1], [0], [0], [1], [0, 0, 1, 1], [], []>} : vector<16x16xbf16>, vector<16x16xbf16>, vector<16x16xf32> -> vector<16x16xf32>
    %c0_44 = arith.constant 0 : index
    %c96 = arith.constant 96 : index
    %136 = vector.load %arg16[%c0_44, %c96] : memref<16x128xf32, #tpu.memory_space<vmem>>, vector<16x16xf32>
    tpu.vector_store %arg16[%c0_44, %c96], %135 {strides = array<i32>} : memref<16x128xf32, #tpu.memory_space<vmem>>, vector<16x16xf32>,
    %137 = vector.extract_strided_slice %15 {offsets = [0, 112], sizes = [16, 16], strides = [1, 1]} : vector<16x128xbf16> to vector<16x16xbf16>
    %138 = vector.extract_strided_slice %16 {offsets = [0, 112], sizes = [16, 16], strides = [1, 1]} : vector<16x128xbf16> to vector<16x16xbf16>
    %139 = vector.extract_strided_slice %17 {offsets = [0, 112], sizes = [16, 16], strides = [1, 1]} : vector<16x128xbf16> to vector<16x16xbf16>
    %cst_45 = arith.constant dense<0.000000e+00> : vector<16x16xf32>
    %140 = tpu.matmul %137, %138, %cst_45 {dimension_numbers = #tpu.dot_dimension_numbers<[1], [1], [0], [0], [0, 0, 1, 0], [], []>} : vector<16x16xbf16>, vector<16x16xbf16>, vector<16x16xf32> -> vector<16x16xf32>
    %cst_46 = arith.constant dense<0xFF800000> : vector<16xf32>
    %141 = vector.multi_reduction <maximumf>, %140, %cst_46 [1] : vector<16x16xf32> to vector<16xf32>
    %142 = vector.shape_cast %141 : vector<16xf32> to vector<16x1xf32>
    %143 = vector.broadcast %142 : vector<16x1xf32> to vector<16x16xf32>
    %144 = arith.subf %140, %143 : vector<16x16xf32>
    %145 = math.exp %144 : vector<16x16xf32>
    %cst_47 = arith.constant dense<0.000000e+00> : vector<16xf32>
    %146 = vector.multi_reduction <add>, %145, %cst_47 [1] : vector<16x16xf32> to vector<16xf32>
    %147 = vector.shape_cast %146 : vector<16xf32> to vector<16x1xf32>
    %148 = tpu.reciprocal %147 {approx = true} : vector<16x1xf32> -> vector<16x1xf32>
    %149 = vector.broadcast %148 : vector<16x1xf32> to vector<16x16xf32>
    %150 = arith.mulf %145, %149 : vector<16x16xf32>
    %151 = arith.truncf %150 : vector<16x16xf32> to vector<16x16xbf16>
    %cst_48 = arith.constant dense<0.000000e+00> : vector<16x16xf32>
    %152 = tpu.matmul %151, %139, %cst_48 {dimension_numbers = #tpu.dot_dimension_numbers<[1], [0], [0], [1], [0, 0, 1, 1], [], []>} : vector<16x16xbf16>, vector<16x16xbf16>, vector<16x16xf32> -> vector<16x16xf32>
    %c0_49 = arith.constant 0 : index
    %c112 = arith.constant 112 : index
    %153 = vector.load %arg16[%c0_49, %c112] : memref<16x128xf32, #tpu.memory_space<vmem>>, vector<16x16xf32>
    tpu.vector_store %arg16[%c0_49, %c112], %152 {strides = array<i32>} : memref<16x128xf32, #tpu.memory_space<vmem>>, vector<16x16xf32>,
    %c0_50 = arith.constant 0 : index
    %c0_51 = arith.constant 0 : index
    %154 = vector.load %arg16[%c0_50, %c0_51] : memref<16x128xf32, #tpu.memory_space<vmem>>, vector<16x128xf32>
    %c0_52 = arith.constant 0 : index
    %c0_53 = arith.constant 0 : index
    %c0_54 = arith.constant 0 : index
    %155 = vector.load %arg5[%c0_52, %c0_53, %c0_54] : memref<1x128x128xbf16, #tpu.memory_space<vmem>>, vector<1x128x128xbf16>
    %156 = vector.shape_cast %155 : vector<1x128x128xbf16> to vector<128x128xbf16>
    %157 = arith.truncf %154 : vector<16x128xf32> to vector<16x128xbf16>
    %cst_55 = arith.constant dense<0.000000e+00> : vector<16x128xf32>
    %158 = tpu.matmul %157, %156, %cst_55 {dimension_numbers = #tpu.dot_dimension_numbers<[1], [0], [0], [1], [0, 0, 1, 1], [], []>} : vector<16x128xbf16>, vector<128x128xbf16>, vector<16x128xf32> -> vector<16x128xf32>
    %c0_56 = arith.constant 0 : index
    %c0_57 = arith.constant 0 : index
    %c0_58 = arith.constant 0 : index
    %159 = vector.load %arg6[%c0_56, %c0_57, %c0_58] : memref<1x1x128xbf16, #tpu.memory_space<vmem>>, vector<1x1x128xbf16>
    %160 = vector.shape_cast %159 : vector<1x1x128xbf16> to vector<1x128xbf16>
    %161 = arith.extf %160 : vector<1x128xbf16> to vector<1x128xf32>
    %162 = vector.broadcast %161 : vector<1x128xf32> to vector<16x128xf32>
    %163 = arith.addf %158, %162 : vector<16x128xf32>
    %164 = arith.addf %4, %163 : vector<16x128xf32>
    %c0_59 = arith.constant 0 : index
    %c0_60 = arith.constant 0 : index
    %c0_61 = arith.constant 0 : index
    %165 = vector.load %arg7[%c0_59, %c0_60, %c0_61] : memref<1x1x128xf32, #tpu.memory_space<vmem>>, vector<1x1x128xf32>
    %166 = vector.shape_cast %165 : vector<1x1x128xf32> to vector<1x128xf32>
    %c0_62 = arith.constant 0 : index
    %c0_63 = arith.constant 0 : index
    %c0_64 = arith.constant 0 : index
    %167 = vector.load %arg8[%c0_62, %c0_63, %c0_64] : memref<1x1x128xf32, #tpu.memory_space<vmem>>, vector<1x1x128xf32>
    %168 = vector.shape_cast %167 : vector<1x1x128xf32> to vector<1x128xf32>
    %cst_65 = arith.constant dense<0.000000e+00> : vector<16xf32>
    %169 = vector.multi_reduction <add>, %164, %cst_65 [1] : vector<16x128xf32> to vector<16xf32>
    %170 = vector.shape_cast %169 : vector<16xf32> to vector<16x1xf32>
    %cst_66 = arith.constant 1.280000e+02 : f32
    %171 = vector.broadcast %cst_66 : f32 to vector<16x1xf32>
    %172 = arith.divf %170, %171 : vector<16x1xf32>
    %173 = vector.broadcast %172 : vector<16x1xf32> to vector<16x128xf32>
    %174 = arith.subf %164, %173 : vector<16x128xf32>
    %175 = arith.mulf %174, %174 : vector<16x128xf32>
    %cst_67 = arith.constant dense<0.000000e+00> : vector<16xf32>
    %176 = vector.multi_reduction <add>, %175, %cst_67 [1] : vector<16x128xf32> to vector<16xf32>
    %177 = vector.shape_cast %176 : vector<16xf32> to vector<16x1xf32>
    %cst_68 = arith.constant 1.280000e+02 : f32
    %178 = vector.broadcast %cst_68 : f32 to vector<16x1xf32>
    %179 = arith.divf %177, %178 : vector<16x1xf32>
    %cst_69 = arith.constant 9.99999974E-6 : f32
    %180 = vector.broadcast %cst_69 : f32 to vector<16x1xf32>
    %181 = arith.addf %179, %180 : vector<16x1xf32>
    %182 = math.rsqrt %181 : vector<16x1xf32>
    %183 = vector.broadcast %182 : vector<16x1xf32> to vector<16x128xf32>
    %184 = arith.mulf %174, %183 : vector<16x128xf32>
    %185 = vector.broadcast %166 : vector<1x128xf32> to vector<16x128xf32>
    %186 = arith.mulf %184, %185 : vector<16x128xf32>
    %187 = vector.broadcast %168 : vector<1x128xf32> to vector<16x128xf32>
    %188 = arith.addf %186, %187 : vector<16x128xf32>
    %c0_70 = arith.constant 0 : index
    %c0_71 = arith.constant 0 : index
    %c0_72 = arith.constant 0 : index
    %189 = vector.load %arg9[%c0_70, %c0_71, %c0_72] : memref<1x128x64xbf16, #tpu.memory_space<vmem>>, vector<1x128x64xbf16>
    %190 = vector.shape_cast %189 : vector<1x128x64xbf16> to vector<128x64xbf16>
    %191 = arith.truncf %188 : vector<16x128xf32> to vector<16x128xbf16>
    %cst_73 = arith.constant dense<0.000000e+00> : vector<16x64xf32>
    %192 = tpu.matmul %191, %190, %cst_73 {dimension_numbers = #tpu.dot_dimension_numbers<[1], [0], [0], [1], [0, 0, 1, 1], [], []>} : vector<16x128xbf16>, vector<128x64xbf16>, vector<16x64xf32> -> vector<16x64xf32>
    %c0_74 = arith.constant 0 : index
    %c0_75 = arith.constant 0 : index
    %c0_76 = arith.constant 0 : index
    %193 = vector.load %arg10[%c0_74, %c0_75, %c0_76] : memref<1x1x64xbf16, #tpu.memory_space<vmem>>, vector<1x1x64xbf16>
    %194 = vector.shape_cast %193 : vector<1x1x64xbf16> to vector<1x64xbf16>
    %195 = arith.extf %194 : vector<1x64xbf16> to vector<1x64xf32>
    %196 = vector.broadcast %195 : vector<1x64xf32> to vector<16x64xf32>
    %197 = arith.addf %192, %196 : vector<16x64xf32>
    %cst_77 = arith.constant 0.000000e+00 : f32
    %198 = vector.broadcast %cst_77 : f32 to vector<16x64xf32>
    %199 = arith.maximumf %197, %198 : vector<16x64xf32>
    %c0_78 = arith.constant 0 : index
    %c0_79 = arith.constant 0 : index
    %c0_80 = arith.constant 0 : index
    %200 = vector.load %arg11[%c0_78, %c0_79, %c0_80] : memref<1x64x128xbf16, #tpu.memory_space<vmem>>, vector<1x64x128xbf16>
    %201 = vector.shape_cast %200 : vector<1x64x128xbf16> to vector<64x128xbf16>
    %202 = arith.truncf %199 : vector<16x64xf32> to vector<16x64xbf16>
    %cst_81 = arith.constant dense<0.000000e+00> : vector<16x128xf32>
    %203 = tpu.matmul %202, %201, %cst_81 {dimension_numbers = #tpu.dot_dimension_numbers<[1], [0], [0], [1], [0, 0, 1, 1], [], []>} : vector<16x64xbf16>, vector<64x128xbf16>, vector<16x128xf32> -> vector<16x128xf32>
    %c0_82 = arith.constant 0 : index
    %c0_83 = arith.constant 0 : index
    %c0_84 = arith.constant 0 : index
    %204 = vector.load %arg12[%c0_82, %c0_83, %c0_84] : memref<1x1x128xbf16, #tpu.memory_space<vmem>>, vector<1x1x128xbf16>
    %205 = vector.shape_cast %204 : vector<1x1x128xbf16> to vector<1x128xbf16>
    %206 = arith.extf %205 : vector<1x128xbf16> to vector<1x128xf32>
    %207 = vector.broadcast %206 : vector<1x128xf32> to vector<16x128xf32>
    %208 = arith.addf %203, %207 : vector<16x128xf32>
    %209 = arith.addf %188, %208 : vector<16x128xf32>
    %c0_85 = arith.constant 0 : index
    %c0_86 = arith.constant 0 : index
    %c0_87 = arith.constant 0 : index
    %210 = vector.load %arg13[%c0_85, %c0_86, %c0_87] : memref<1x1x128xf32, #tpu.memory_space<vmem>>, vector<1x1x128xf32>
    %211 = vector.shape_cast %210 : vector<1x1x128xf32> to vector<1x128xf32>
    %c0_88 = arith.constant 0 : index
    %c0_89 = arith.constant 0 : index
    %c0_90 = arith.constant 0 : index
    %212 = vector.load %arg14[%c0_88, %c0_89, %c0_90] : memref<1x1x128xf32, #tpu.memory_space<vmem>>, vector<1x1x128xf32>
    %213 = vector.shape_cast %212 : vector<1x1x128xf32> to vector<1x128xf32>
    %cst_91 = arith.constant dense<0.000000e+00> : vector<16xf32>
    %214 = vector.multi_reduction <add>, %209, %cst_91 [1] : vector<16x128xf32> to vector<16xf32>
    %215 = vector.shape_cast %214 : vector<16xf32> to vector<16x1xf32>
    %cst_92 = arith.constant 1.280000e+02 : f32
    %216 = vector.broadcast %cst_92 : f32 to vector<16x1xf32>
    %217 = arith.divf %215, %216 : vector<16x1xf32>
    %218 = vector.broadcast %217 : vector<16x1xf32> to vector<16x128xf32>
    %219 = arith.subf %209, %218 : vector<16x128xf32>
    %220 = arith.mulf %219, %219 : vector<16x128xf32>
    %cst_93 = arith.constant dense<0.000000e+00> : vector<16xf32>
    %221 = vector.multi_reduction <add>, %220, %cst_93 [1] : vector<16x128xf32> to vector<16xf32>
    %222 = vector.shape_cast %221 : vector<16xf32> to vector<16x1xf32>
    %cst_94 = arith.constant 1.280000e+02 : f32
    %223 = vector.broadcast %cst_94 : f32 to vector<16x1xf32>
    %224 = arith.divf %222, %223 : vector<16x1xf32>
    %cst_95 = arith.constant 9.99999974E-6 : f32
    %225 = vector.broadcast %cst_95 : f32 to vector<16x1xf32>
    %226 = arith.addf %224, %225 : vector<16x1xf32>
    %227 = math.rsqrt %226 : vector<16x1xf32>
    %228 = vector.broadcast %227 : vector<16x1xf32> to vector<16x128xf32>
    %229 = arith.mulf %219, %228 : vector<16x128xf32>
    %230 = vector.broadcast %211 : vector<1x128xf32> to vector<16x128xf32>
    %231 = arith.mulf %229, %230 : vector<16x128xf32>
    %232 = vector.broadcast %213 : vector<1x128xf32> to vector<16x128xf32>
    %233 = arith.addf %231, %232 : vector<16x128xf32>
    %c0_96 = arith.constant 0 : index
    %c0_97 = arith.constant 0 : index
    %c0_98 = arith.constant 0 : index
    %234 = vector.load %arg15[%c0_96, %c0_97, %c0_98] : memref<1x16x128xf32, #tpu.memory_space<vmem>>, vector<1x16x128xf32>
    %235 = vector.shape_cast %234 : vector<1x16x128xf32> to vector<16x128xf32>
    %236 = vector.shape_cast %233 : vector<16x128xf32> to vector<1x16x128xf32>
    tpu.vector_store %arg15[%c0_96, %c0_97, %c0_98], %236 {strides = array<i32>} : memref<1x16x128xf32, #tpu.memory_space<vmem>>, vector<1x16x128xf32>,
    return
  }
  func.func @transform_0(%arg0: i32, %arg1: i32) -> (i32, i32, i32) {
    %c0_i32 = arith.constant 0 : i32
    %c0_i32_0 = arith.constant 0 : i32
    %c0_i32_1 = arith.constant 0 : i32
    return %arg0, %c0_i32, %c0_i32_0 : i32, i32, i32
  }
  func.func @transform_1(%arg0: i32, %arg1: i32) -> (i32, i32, i32) {
    %c0_i32 = arith.constant 0 : i32
    %c0_i32_0 = arith.constant 0 : i32
    %c0_i32_1 = arith.constant 0 : i32
    return %arg1, %c0_i32, %c0_i32_0 : i32, i32, i32
  }
  func.func @transform_2(%arg0: i32, %arg1: i32) -> (i32, i32, i32) {
    %c0_i32 = arith.constant 0 : i32
    %c0_i32_0 = arith.constant 0 : i32
    %c0_i32_1 = arith.constant 0 : i32
    return %arg1, %c0_i32, %c0_i32_0 : i32, i32, i32
  }
  func.func @transform_3(%arg0: i32, %arg1: i32) -> (i32, i32, i32) {
    %c0_i32 = arith.constant 0 : i32
    %c0_i32_0 = arith.constant 0 : i32
    %c0_i32_1 = arith.constant 0 : i32
    return %arg1, %c0_i32, %c0_i32_0 : i32, i32, i32
  }
  func.func @transform_4(%arg0: i32, %arg1: i32) -> (i32, i32, i32) {
    %c0_i32 = arith.constant 0 : i32
    %c0_i32_0 = arith.constant 0 : i32
    %c0_i32_1 = arith.constant 0 : i32
    return %arg1, %c0_i32, %c0_i32_0 : i32, i32, i32
  }
  func.func @transform_5(%arg0: i32, %arg1: i32) -> (i32, i32, i32) {
    %c0_i32 = arith.constant 0 : i32
    %c0_i32_0 = arith.constant 0 : i32
    %c0_i32_1 = arith.constant 0 : i32
    return %arg1, %c0_i32, %c0_i32_0 : i32, i32, i32
  }
  func.func @transform_6(%arg0: i32, %arg1: i32) -> (i32, i32, i32) {
    %c0_i32 = arith.constant 0 : i32
    %c0_i32_0 = arith.constant 0 : i32
    %c0_i32_1 = arith.constant 0 : i32
    return %arg1, %c0_i32, %c0_i32_0 : i32, i32, i32
  }
  func.func @transform_7(%arg0: i32, %arg1: i32) -> (i32, i32, i32) {
    %c0_i32 = arith.constant 0 : i32
    %c0_i32_0 = arith.constant 0 : i32
    %c0_i32_1 = arith.constant 0 : i32
    return %arg1, %c0_i32, %c0_i32_0 : i32, i32, i32
  }
  func.func @transform_8(%arg0: i32, %arg1: i32) -> (i32, i32, i32) {
    %c0_i32 = arith.constant 0 : i32
    %c0_i32_0 = arith.constant 0 : i32
    %c0_i32_1 = arith.constant 0 : i32
    return %arg1, %c0_i32, %c0_i32_0 : i32, i32, i32
  }
  func.func @transform_9(%arg0: i32, %arg1: i32) -> (i32, i32, i32) {
    %c0_i32 = arith.constant 0 : i32
    %c0_i32_0 = arith.constant 0 : i32
    %c0_i32_1 = arith.constant 0 : i32
    return %arg1, %c0_i32, %c0_i32_0 : i32, i32, i32
  }
  func.func @transform_10(%arg0: i32, %arg1: i32) -> (i32, i32, i32) {
    %c0_i32 = arith.constant 0 : i32
    %c0_i32_0 = arith.constant 0 : i32
    %c0_i32_1 = arith.constant 0 : i32
    return %arg1, %c0_i32, %c0_i32_0 : i32, i32, i32
  }
  func.func @transform_11(%arg0: i32, %arg1: i32) -> (i32, i32, i32) {
    %c0_i32 = arith.constant 0 : i32
    %c0_i32_0 = arith.constant 0 : i32
    %c0_i32_1 = arith.constant 0 : i32
    return %arg1, %c0_i32, %c0_i32_0 : i32, i32, i32
  }
  func.func @transform_12(%arg0: i32, %arg1: i32) -> (i32, i32, i32) {
    %c0_i32 = arith.constant 0 : i32
    %c0_i32_0 = arith.constant 0 : i32
    %c0_i32_1 = arith.constant 0 : i32
    return %arg1, %c0_i32, %c0_i32_0 : i32, i32, i32
  }
  func.func @transform_13(%arg0: i32, %arg1: i32) -> (i32, i32, i32) {
    %c0_i32 = arith.constant 0 : i32
    %c0_i32_0 = arith.constant 0 : i32
    %c0_i32_1 = arith.constant 0 : i32
    return %arg0, %c0_i32, %c0_i32_0 : i32, i32, i32
  }
}

module attributes {stable_mosaic.version = 11 : i64} {
  func.func @_decoder_layer_kernel(%arg0: i32, %arg1: memref<1x8x128xf32, #tpu.memory_space<vmem>>, %arg2: memref<1x16x128xf32, #tpu.memory_space<vmem>>, %arg3: memref<128x384xbf16, #tpu.memory_space<vmem>>, %arg4: memref<1x384xbf16, #tpu.memory_space<vmem>>, %arg5: memref<128x128xbf16, #tpu.memory_space<vmem>>, %arg6: memref<1x128xbf16, #tpu.memory_space<vmem>>, %arg7: memref<1x128xf32, #tpu.memory_space<vmem>>, %arg8: memref<1x128xf32, #tpu.memory_space<vmem>>, %arg9: memref<128x384xbf16, #tpu.memory_space<vmem>>, %arg10: memref<1x384xbf16, #tpu.memory_space<vmem>>, %arg11: memref<128x128xbf16, #tpu.memory_space<vmem>>, %arg12: memref<1x128xbf16, #tpu.memory_space<vmem>>, %arg13: memref<1x128xf32, #tpu.memory_space<vmem>>, %arg14: memref<1x128xf32, #tpu.memory_space<vmem>>, %arg15: memref<128x64xbf16, #tpu.memory_space<vmem>>, %arg16: memref<1x64xbf16, #tpu.memory_space<vmem>>, %arg17: memref<64x128xbf16, #tpu.memory_space<vmem>>, %arg18: memref<1x128xbf16, #tpu.memory_space<vmem>>, %arg19: memref<1x128xf32, #tpu.memory_space<vmem>>, %arg20: memref<1x128xf32, #tpu.memory_space<vmem>>, %arg21: memref<1x8x128xf32, #tpu.memory_space<vmem>>, %arg22: memref<8x128xf32, #tpu.memory_space<vmem>>) attributes {dimension_semantics = [#tpu.dimension_semantics<parallel>], iteration_bounds = array<i64: 2>, scalar_prefetch = 0 : i64, scratch_operands = 1 : i64, tpu.core_type = #tpu.core_type<tc>, window_params = [{transform_indices = @transform_0, window_bounds = array<i64: 1, 8, 128>}, {transform_indices = @transform_1, window_bounds = array<i64: 1, 16, 128>}, {pipeline_mode = #tpu.pipeline_mode<synchronous>, transform_indices = @transform_2, window_bounds = array<i64: 128, 384>}, {pipeline_mode = #tpu.pipeline_mode<synchronous>, transform_indices = @transform_3, window_bounds = array<i64: 1, 384>}, {pipeline_mode = #tpu.pipeline_mode<synchronous>, transform_indices = @transform_4, window_bounds = array<i64: 128, 128>}, {pipeline_mode = #tpu.pipeline_mode<synchronous>, transform_indices = @transform_5, window_bounds = array<i64: 1, 128>}, {pipeline_mode = #tpu.pipeline_mode<synchronous>, transform_indices = @transform_6, window_bounds = array<i64: 1, 128>}, {pipeline_mode = #tpu.pipeline_mode<synchronous>, transform_indices = @transform_7, window_bounds = array<i64: 1, 128>}, {pipeline_mode = #tpu.pipeline_mode<synchronous>, transform_indices = @transform_8, window_bounds = array<i64: 128, 384>}, {pipeline_mode = #tpu.pipeline_mode<synchronous>, transform_indices = @transform_9, window_bounds = array<i64: 1, 384>}, {pipeline_mode = #tpu.pipeline_mode<synchronous>, transform_indices = @transform_10, window_bounds = array<i64: 128, 128>}, {pipeline_mode = #tpu.pipeline_mode<synchronous>, transform_indices = @transform_11, window_bounds = array<i64: 1, 128>}, {pipeline_mode = #tpu.pipeline_mode<synchronous>, transform_indices = @transform_12, window_bounds = array<i64: 1, 128>}, {pipeline_mode = #tpu.pipeline_mode<synchronous>, transform_indices = @transform_13, window_bounds = array<i64: 1, 128>}, {pipeline_mode = #tpu.pipeline_mode<synchronous>, transform_indices = @transform_14, window_bounds = array<i64: 128, 64>}, {pipeline_mode = #tpu.pipeline_mode<synchronous>, transform_indices = @transform_15, window_bounds = array<i64: 1, 64>}, {pipeline_mode = #tpu.pipeline_mode<synchronous>, transform_indices = @transform_16, window_bounds = array<i64: 64, 128>}, {pipeline_mode = #tpu.pipeline_mode<synchronous>, transform_indices = @transform_17, window_bounds = array<i64: 1, 128>}, {pipeline_mode = #tpu.pipeline_mode<synchronous>, transform_indices = @transform_18, window_bounds = array<i64: 1, 128>}, {pipeline_mode = #tpu.pipeline_mode<synchronous>, transform_indices = @transform_19, window_bounds = array<i64: 1, 128>}, {transform_indices = @transform_20, window_bounds = array<i64: 1, 8, 128>}]} {
    %c0 = arith.constant 0 : index
    %c0_0 = arith.constant 0 : index
    %c0_1 = arith.constant 0 : index
    %0 = vector.load %arg1[%c0, %c0_0, %c0_1] : memref<1x8x128xf32, #tpu.memory_space<vmem>>, vector<1x8x128xf32>
    %1 = vector.shape_cast %0 : vector<1x8x128xf32> to vector<8x128xf32>
    %c0_2 = arith.constant 0 : index
    %c0_3 = arith.constant 0 : index
    %c0_4 = arith.constant 0 : index
    %2 = vector.load %arg2[%c0_2, %c0_3, %c0_4] : memref<1x16x128xf32, #tpu.memory_space<vmem>>, vector<1x16x128xf32>
    %3 = vector.shape_cast %2 : vector<1x16x128xf32> to vector<16x128xf32>
    %c0_5 = arith.constant 0 : index
    %c0_6 = arith.constant 0 : index
    %4 = vector.load %arg3[%c0_5, %c0_6] : memref<128x384xbf16, #tpu.memory_space<vmem>>, vector<128x384xbf16>
    %5 = arith.truncf %1 : vector<8x128xf32> to vector<8x128xbf16>
    %cst = arith.constant dense<0.000000e+00> : vector<8x384xf32>
    %6 = tpu.matmul %5, %4, %cst {dimension_numbers = #tpu.dot_dimension_numbers<[1], [0], [0], [1], [0, 0, 1, 1], [], []>} : vector<8x128xbf16>, vector<128x384xbf16>, vector<8x384xf32> -> vector<8x384xf32>
    %c0_7 = arith.constant 0 : index
    %c0_8 = arith.constant 0 : index
    %7 = vector.load %arg4[%c0_7, %c0_8] : memref<1x384xbf16, #tpu.memory_space<vmem>>, vector<1x384xbf16>
    %8 = arith.extf %7 : vector<1x384xbf16> to vector<1x384xf32>
    %9 = vector.broadcast %8 : vector<1x384xf32> to vector<8x384xf32>
    %10 = arith.addf %6, %9 : vector<8x384xf32>
    %11 = arith.truncf %10 : vector<8x384xf32> to vector<8x384xbf16>
    %12 = vector.extract_strided_slice %11 {offsets = [0, 0], sizes = [8, 128], strides = [1, 1]} : vector<8x384xbf16> to vector<8x128xbf16>
    %13 = vector.extract_strided_slice %11 {offsets = [0, 128], sizes = [8, 128], strides = [1, 1]} : vector<8x384xbf16> to vector<8x128xbf16>
    %14 = vector.extract_strided_slice %11 {offsets = [0, 256], sizes = [8, 128], strides = [1, 1]} : vector<8x384xbf16> to vector<8x128xbf16>
    %15 = vector.extract_strided_slice %12 {offsets = [0, 0], sizes = [8, 16], strides = [1, 1]} : vector<8x128xbf16> to vector<8x16xbf16>
    %16 = vector.extract_strided_slice %13 {offsets = [0, 0], sizes = [8, 16], strides = [1, 1]} : vector<8x128xbf16> to vector<8x16xbf16>
    %17 = vector.extract_strided_slice %14 {offsets = [0, 0], sizes = [8, 16], strides = [1, 1]} : vector<8x128xbf16> to vector<8x16xbf16>
    %cst_9 = arith.constant dense<0.000000e+00> : vector<8x8xf32>
    %18 = tpu.matmul %15, %16, %cst_9 {dimension_numbers = #tpu.dot_dimension_numbers<[1], [1], [0], [0], [0, 0, 1, 0], [], []>} : vector<8x16xbf16>, vector<8x16xbf16>, vector<8x8xf32> -> vector<8x8xf32>
    %cst_10 = arith.constant dense<0xFF800000> : vector<8xf32>
    %19 = vector.multi_reduction <maximumf>, %18, %cst_10 [1] : vector<8x8xf32> to vector<8xf32>
    %20 = vector.shape_cast %19 : vector<8xf32> to vector<8x1xf32>
    %21 = vector.broadcast %20 : vector<8x1xf32> to vector<8x8xf32>
    %22 = arith.subf %18, %21 : vector<8x8xf32>
    %23 = math.exp %22 : vector<8x8xf32>
    %cst_11 = arith.constant dense<0.000000e+00> : vector<8xf32>
    %24 = vector.multi_reduction <add>, %23, %cst_11 [1] : vector<8x8xf32> to vector<8xf32>
    %25 = vector.shape_cast %24 : vector<8xf32> to vector<8x1xf32>
    %26 = tpu.reciprocal %25 {approx = true} : vector<8x1xf32> -> vector<8x1xf32>
    %27 = vector.broadcast %26 : vector<8x1xf32> to vector<8x8xf32>
    %28 = arith.mulf %23, %27 : vector<8x8xf32>
    %29 = arith.truncf %28 : vector<8x8xf32> to vector<8x8xbf16>
    %cst_12 = arith.constant dense<0.000000e+00> : vector<8x16xf32>
    %30 = tpu.matmul %29, %17, %cst_12 {dimension_numbers = #tpu.dot_dimension_numbers<[1], [0], [0], [1], [0, 0, 1, 1], [], []>} : vector<8x8xbf16>, vector<8x16xbf16>, vector<8x16xf32> -> vector<8x16xf32>
    %c0_13 = arith.constant 0 : index
    %c0_14 = arith.constant 0 : index
    %31 = vector.load %arg22[%c0_13, %c0_14] : memref<8x128xf32, #tpu.memory_space<vmem>>, vector<8x16xf32>
    tpu.vector_store %arg22[%c0_13, %c0_14], %30 {strides = array<i32>} : memref<8x128xf32, #tpu.memory_space<vmem>>, vector<8x16xf32>,
    %32 = vector.extract_strided_slice %12 {offsets = [0, 16], sizes = [8, 16], strides = [1, 1]} : vector<8x128xbf16> to vector<8x16xbf16>
    %33 = vector.extract_strided_slice %13 {offsets = [0, 16], sizes = [8, 16], strides = [1, 1]} : vector<8x128xbf16> to vector<8x16xbf16>
    %34 = vector.extract_strided_slice %14 {offsets = [0, 16], sizes = [8, 16], strides = [1, 1]} : vector<8x128xbf16> to vector<8x16xbf16>
    %cst_15 = arith.constant dense<0.000000e+00> : vector<8x8xf32>
    %35 = tpu.matmul %32, %33, %cst_15 {dimension_numbers = #tpu.dot_dimension_numbers<[1], [1], [0], [0], [0, 0, 1, 0], [], []>} : vector<8x16xbf16>, vector<8x16xbf16>, vector<8x8xf32> -> vector<8x8xf32>
    %cst_16 = arith.constant dense<0xFF800000> : vector<8xf32>
    %36 = vector.multi_reduction <maximumf>, %35, %cst_16 [1] : vector<8x8xf32> to vector<8xf32>
    %37 = vector.shape_cast %36 : vector<8xf32> to vector<8x1xf32>
    %38 = vector.broadcast %37 : vector<8x1xf32> to vector<8x8xf32>
    %39 = arith.subf %35, %38 : vector<8x8xf32>
    %40 = math.exp %39 : vector<8x8xf32>
    %cst_17 = arith.constant dense<0.000000e+00> : vector<8xf32>
    %41 = vector.multi_reduction <add>, %40, %cst_17 [1] : vector<8x8xf32> to vector<8xf32>
    %42 = vector.shape_cast %41 : vector<8xf32> to vector<8x1xf32>
    %43 = tpu.reciprocal %42 {approx = true} : vector<8x1xf32> -> vector<8x1xf32>
    %44 = vector.broadcast %43 : vector<8x1xf32> to vector<8x8xf32>
    %45 = arith.mulf %40, %44 : vector<8x8xf32>
    %46 = arith.truncf %45 : vector<8x8xf32> to vector<8x8xbf16>
    %cst_18 = arith.constant dense<0.000000e+00> : vector<8x16xf32>
    %47 = tpu.matmul %46, %34, %cst_18 {dimension_numbers = #tpu.dot_dimension_numbers<[1], [0], [0], [1], [0, 0, 1, 1], [], []>} : vector<8x8xbf16>, vector<8x16xbf16>, vector<8x16xf32> -> vector<8x16xf32>
    %c0_19 = arith.constant 0 : index
    %c16 = arith.constant 16 : index
    %48 = vector.load %arg22[%c0_19, %c16] : memref<8x128xf32, #tpu.memory_space<vmem>>, vector<8x16xf32>
    tpu.vector_store %arg22[%c0_19, %c16], %47 {strides = array<i32>} : memref<8x128xf32, #tpu.memory_space<vmem>>, vector<8x16xf32>,
    %49 = vector.extract_strided_slice %12 {offsets = [0, 32], sizes = [8, 16], strides = [1, 1]} : vector<8x128xbf16> to vector<8x16xbf16>
    %50 = vector.extract_strided_slice %13 {offsets = [0, 32], sizes = [8, 16], strides = [1, 1]} : vector<8x128xbf16> to vector<8x16xbf16>
    %51 = vector.extract_strided_slice %14 {offsets = [0, 32], sizes = [8, 16], strides = [1, 1]} : vector<8x128xbf16> to vector<8x16xbf16>
    %cst_20 = arith.constant dense<0.000000e+00> : vector<8x8xf32>
    %52 = tpu.matmul %49, %50, %cst_20 {dimension_numbers = #tpu.dot_dimension_numbers<[1], [1], [0], [0], [0, 0, 1, 0], [], []>} : vector<8x16xbf16>, vector<8x16xbf16>, vector<8x8xf32> -> vector<8x8xf32>
    %cst_21 = arith.constant dense<0xFF800000> : vector<8xf32>
    %53 = vector.multi_reduction <maximumf>, %52, %cst_21 [1] : vector<8x8xf32> to vector<8xf32>
    %54 = vector.shape_cast %53 : vector<8xf32> to vector<8x1xf32>
    %55 = vector.broadcast %54 : vector<8x1xf32> to vector<8x8xf32>
    %56 = arith.subf %52, %55 : vector<8x8xf32>
    %57 = math.exp %56 : vector<8x8xf32>
    %cst_22 = arith.constant dense<0.000000e+00> : vector<8xf32>
    %58 = vector.multi_reduction <add>, %57, %cst_22 [1] : vector<8x8xf32> to vector<8xf32>
    %59 = vector.shape_cast %58 : vector<8xf32> to vector<8x1xf32>
    %60 = tpu.reciprocal %59 {approx = true} : vector<8x1xf32> -> vector<8x1xf32>
    %61 = vector.broadcast %60 : vector<8x1xf32> to vector<8x8xf32>
    %62 = arith.mulf %57, %61 : vector<8x8xf32>
    %63 = arith.truncf %62 : vector<8x8xf32> to vector<8x8xbf16>
    %cst_23 = arith.constant dense<0.000000e+00> : vector<8x16xf32>
    %64 = tpu.matmul %63, %51, %cst_23 {dimension_numbers = #tpu.dot_dimension_numbers<[1], [0], [0], [1], [0, 0, 1, 1], [], []>} : vector<8x8xbf16>, vector<8x16xbf16>, vector<8x16xf32> -> vector<8x16xf32>
    %c0_24 = arith.constant 0 : index
    %c32 = arith.constant 32 : index
    %65 = vector.load %arg22[%c0_24, %c32] : memref<8x128xf32, #tpu.memory_space<vmem>>, vector<8x16xf32>
    tpu.vector_store %arg22[%c0_24, %c32], %64 {strides = array<i32>} : memref<8x128xf32, #tpu.memory_space<vmem>>, vector<8x16xf32>,
    %66 = vector.extract_strided_slice %12 {offsets = [0, 48], sizes = [8, 16], strides = [1, 1]} : vector<8x128xbf16> to vector<8x16xbf16>
    %67 = vector.extract_strided_slice %13 {offsets = [0, 48], sizes = [8, 16], strides = [1, 1]} : vector<8x128xbf16> to vector<8x16xbf16>
    %68 = vector.extract_strided_slice %14 {offsets = [0, 48], sizes = [8, 16], strides = [1, 1]} : vector<8x128xbf16> to vector<8x16xbf16>
    %cst_25 = arith.constant dense<0.000000e+00> : vector<8x8xf32>
    %69 = tpu.matmul %66, %67, %cst_25 {dimension_numbers = #tpu.dot_dimension_numbers<[1], [1], [0], [0], [0, 0, 1, 0], [], []>} : vector<8x16xbf16>, vector<8x16xbf16>, vector<8x8xf32> -> vector<8x8xf32>
    %cst_26 = arith.constant dense<0xFF800000> : vector<8xf32>
    %70 = vector.multi_reduction <maximumf>, %69, %cst_26 [1] : vector<8x8xf32> to vector<8xf32>
    %71 = vector.shape_cast %70 : vector<8xf32> to vector<8x1xf32>
    %72 = vector.broadcast %71 : vector<8x1xf32> to vector<8x8xf32>
    %73 = arith.subf %69, %72 : vector<8x8xf32>
    %74 = math.exp %73 : vector<8x8xf32>
    %cst_27 = arith.constant dense<0.000000e+00> : vector<8xf32>
    %75 = vector.multi_reduction <add>, %74, %cst_27 [1] : vector<8x8xf32> to vector<8xf32>
    %76 = vector.shape_cast %75 : vector<8xf32> to vector<8x1xf32>
    %77 = tpu.reciprocal %76 {approx = true} : vector<8x1xf32> -> vector<8x1xf32>
    %78 = vector.broadcast %77 : vector<8x1xf32> to vector<8x8xf32>
    %79 = arith.mulf %74, %78 : vector<8x8xf32>
    %80 = arith.truncf %79 : vector<8x8xf32> to vector<8x8xbf16>
    %cst_28 = arith.constant dense<0.000000e+00> : vector<8x16xf32>
    %81 = tpu.matmul %80, %68, %cst_28 {dimension_numbers = #tpu.dot_dimension_numbers<[1], [0], [0], [1], [0, 0, 1, 1], [], []>} : vector<8x8xbf16>, vector<8x16xbf16>, vector<8x16xf32> -> vector<8x16xf32>
    %c0_29 = arith.constant 0 : index
    %c48 = arith.constant 48 : index
    %82 = vector.load %arg22[%c0_29, %c48] : memref<8x128xf32, #tpu.memory_space<vmem>>, vector<8x16xf32>
    tpu.vector_store %arg22[%c0_29, %c48], %81 {strides = array<i32>} : memref<8x128xf32, #tpu.memory_space<vmem>>, vector<8x16xf32>,
    %83 = vector.extract_strided_slice %12 {offsets = [0, 64], sizes = [8, 16], strides = [1, 1]} : vector<8x128xbf16> to vector<8x16xbf16>
    %84 = vector.extract_strided_slice %13 {offsets = [0, 64], sizes = [8, 16], strides = [1, 1]} : vector<8x128xbf16> to vector<8x16xbf16>
    %85 = vector.extract_strided_slice %14 {offsets = [0, 64], sizes = [8, 16], strides = [1, 1]} : vector<8x128xbf16> to vector<8x16xbf16>
    %cst_30 = arith.constant dense<0.000000e+00> : vector<8x8xf32>
    %86 = tpu.matmul %83, %84, %cst_30 {dimension_numbers = #tpu.dot_dimension_numbers<[1], [1], [0], [0], [0, 0, 1, 0], [], []>} : vector<8x16xbf16>, vector<8x16xbf16>, vector<8x8xf32> -> vector<8x8xf32>
    %cst_31 = arith.constant dense<0xFF800000> : vector<8xf32>
    %87 = vector.multi_reduction <maximumf>, %86, %cst_31 [1] : vector<8x8xf32> to vector<8xf32>
    %88 = vector.shape_cast %87 : vector<8xf32> to vector<8x1xf32>
    %89 = vector.broadcast %88 : vector<8x1xf32> to vector<8x8xf32>
    %90 = arith.subf %86, %89 : vector<8x8xf32>
    %91 = math.exp %90 : vector<8x8xf32>
    %cst_32 = arith.constant dense<0.000000e+00> : vector<8xf32>
    %92 = vector.multi_reduction <add>, %91, %cst_32 [1] : vector<8x8xf32> to vector<8xf32>
    %93 = vector.shape_cast %92 : vector<8xf32> to vector<8x1xf32>
    %94 = tpu.reciprocal %93 {approx = true} : vector<8x1xf32> -> vector<8x1xf32>
    %95 = vector.broadcast %94 : vector<8x1xf32> to vector<8x8xf32>
    %96 = arith.mulf %91, %95 : vector<8x8xf32>
    %97 = arith.truncf %96 : vector<8x8xf32> to vector<8x8xbf16>
    %cst_33 = arith.constant dense<0.000000e+00> : vector<8x16xf32>
    %98 = tpu.matmul %97, %85, %cst_33 {dimension_numbers = #tpu.dot_dimension_numbers<[1], [0], [0], [1], [0, 0, 1, 1], [], []>} : vector<8x8xbf16>, vector<8x16xbf16>, vector<8x16xf32> -> vector<8x16xf32>
    %c0_34 = arith.constant 0 : index
    %c64 = arith.constant 64 : index
    %99 = vector.load %arg22[%c0_34, %c64] : memref<8x128xf32, #tpu.memory_space<vmem>>, vector<8x16xf32>
    tpu.vector_store %arg22[%c0_34, %c64], %98 {strides = array<i32>} : memref<8x128xf32, #tpu.memory_space<vmem>>, vector<8x16xf32>,
    %100 = vector.extract_strided_slice %12 {offsets = [0, 80], sizes = [8, 16], strides = [1, 1]} : vector<8x128xbf16> to vector<8x16xbf16>
    %101 = vector.extract_strided_slice %13 {offsets = [0, 80], sizes = [8, 16], strides = [1, 1]} : vector<8x128xbf16> to vector<8x16xbf16>
    %102 = vector.extract_strided_slice %14 {offsets = [0, 80], sizes = [8, 16], strides = [1, 1]} : vector<8x128xbf16> to vector<8x16xbf16>
    %cst_35 = arith.constant dense<0.000000e+00> : vector<8x8xf32>
    %103 = tpu.matmul %100, %101, %cst_35 {dimension_numbers = #tpu.dot_dimension_numbers<[1], [1], [0], [0], [0, 0, 1, 0], [], []>} : vector<8x16xbf16>, vector<8x16xbf16>, vector<8x8xf32> -> vector<8x8xf32>
    %cst_36 = arith.constant dense<0xFF800000> : vector<8xf32>
    %104 = vector.multi_reduction <maximumf>, %103, %cst_36 [1] : vector<8x8xf32> to vector<8xf32>
    %105 = vector.shape_cast %104 : vector<8xf32> to vector<8x1xf32>
    %106 = vector.broadcast %105 : vector<8x1xf32> to vector<8x8xf32>
    %107 = arith.subf %103, %106 : vector<8x8xf32>
    %108 = math.exp %107 : vector<8x8xf32>
    %cst_37 = arith.constant dense<0.000000e+00> : vector<8xf32>
    %109 = vector.multi_reduction <add>, %108, %cst_37 [1] : vector<8x8xf32> to vector<8xf32>
    %110 = vector.shape_cast %109 : vector<8xf32> to vector<8x1xf32>
    %111 = tpu.reciprocal %110 {approx = true} : vector<8x1xf32> -> vector<8x1xf32>
    %112 = vector.broadcast %111 : vector<8x1xf32> to vector<8x8xf32>
    %113 = arith.mulf %108, %112 : vector<8x8xf32>
    %114 = arith.truncf %113 : vector<8x8xf32> to vector<8x8xbf16>
    %cst_38 = arith.constant dense<0.000000e+00> : vector<8x16xf32>
    %115 = tpu.matmul %114, %102, %cst_38 {dimension_numbers = #tpu.dot_dimension_numbers<[1], [0], [0], [1], [0, 0, 1, 1], [], []>} : vector<8x8xbf16>, vector<8x16xbf16>, vector<8x16xf32> -> vector<8x16xf32>
    %c0_39 = arith.constant 0 : index
    %c80 = arith.constant 80 : index
    %116 = vector.load %arg22[%c0_39, %c80] : memref<8x128xf32, #tpu.memory_space<vmem>>, vector<8x16xf32>
    tpu.vector_store %arg22[%c0_39, %c80], %115 {strides = array<i32>} : memref<8x128xf32, #tpu.memory_space<vmem>>, vector<8x16xf32>,
    %117 = vector.extract_strided_slice %12 {offsets = [0, 96], sizes = [8, 16], strides = [1, 1]} : vector<8x128xbf16> to vector<8x16xbf16>
    %118 = vector.extract_strided_slice %13 {offsets = [0, 96], sizes = [8, 16], strides = [1, 1]} : vector<8x128xbf16> to vector<8x16xbf16>
    %119 = vector.extract_strided_slice %14 {offsets = [0, 96], sizes = [8, 16], strides = [1, 1]} : vector<8x128xbf16> to vector<8x16xbf16>
    %cst_40 = arith.constant dense<0.000000e+00> : vector<8x8xf32>
    %120 = tpu.matmul %117, %118, %cst_40 {dimension_numbers = #tpu.dot_dimension_numbers<[1], [1], [0], [0], [0, 0, 1, 0], [], []>} : vector<8x16xbf16>, vector<8x16xbf16>, vector<8x8xf32> -> vector<8x8xf32>
    %cst_41 = arith.constant dense<0xFF800000> : vector<8xf32>
    %121 = vector.multi_reduction <maximumf>, %120, %cst_41 [1] : vector<8x8xf32> to vector<8xf32>
    %122 = vector.shape_cast %121 : vector<8xf32> to vector<8x1xf32>
    %123 = vector.broadcast %122 : vector<8x1xf32> to vector<8x8xf32>
    %124 = arith.subf %120, %123 : vector<8x8xf32>
    %125 = math.exp %124 : vector<8x8xf32>
    %cst_42 = arith.constant dense<0.000000e+00> : vector<8xf32>
    %126 = vector.multi_reduction <add>, %125, %cst_42 [1] : vector<8x8xf32> to vector<8xf32>
    %127 = vector.shape_cast %126 : vector<8xf32> to vector<8x1xf32>
    %128 = tpu.reciprocal %127 {approx = true} : vector<8x1xf32> -> vector<8x1xf32>
    %129 = vector.broadcast %128 : vector<8x1xf32> to vector<8x8xf32>
    %130 = arith.mulf %125, %129 : vector<8x8xf32>
    %131 = arith.truncf %130 : vector<8x8xf32> to vector<8x8xbf16>
    %cst_43 = arith.constant dense<0.000000e+00> : vector<8x16xf32>
    %132 = tpu.matmul %131, %119, %cst_43 {dimension_numbers = #tpu.dot_dimension_numbers<[1], [0], [0], [1], [0, 0, 1, 1], [], []>} : vector<8x8xbf16>, vector<8x16xbf16>, vector<8x16xf32> -> vector<8x16xf32>
    %c0_44 = arith.constant 0 : index
    %c96 = arith.constant 96 : index
    %133 = vector.load %arg22[%c0_44, %c96] : memref<8x128xf32, #tpu.memory_space<vmem>>, vector<8x16xf32>
    tpu.vector_store %arg22[%c0_44, %c96], %132 {strides = array<i32>} : memref<8x128xf32, #tpu.memory_space<vmem>>, vector<8x16xf32>,
    %134 = vector.extract_strided_slice %12 {offsets = [0, 112], sizes = [8, 16], strides = [1, 1]} : vector<8x128xbf16> to vector<8x16xbf16>
    %135 = vector.extract_strided_slice %13 {offsets = [0, 112], sizes = [8, 16], strides = [1, 1]} : vector<8x128xbf16> to vector<8x16xbf16>
    %136 = vector.extract_strided_slice %14 {offsets = [0, 112], sizes = [8, 16], strides = [1, 1]} : vector<8x128xbf16> to vector<8x16xbf16>
    %cst_45 = arith.constant dense<0.000000e+00> : vector<8x8xf32>
    %137 = tpu.matmul %134, %135, %cst_45 {dimension_numbers = #tpu.dot_dimension_numbers<[1], [1], [0], [0], [0, 0, 1, 0], [], []>} : vector<8x16xbf16>, vector<8x16xbf16>, vector<8x8xf32> -> vector<8x8xf32>
    %cst_46 = arith.constant dense<0xFF800000> : vector<8xf32>
    %138 = vector.multi_reduction <maximumf>, %137, %cst_46 [1] : vector<8x8xf32> to vector<8xf32>
    %139 = vector.shape_cast %138 : vector<8xf32> to vector<8x1xf32>
    %140 = vector.broadcast %139 : vector<8x1xf32> to vector<8x8xf32>
    %141 = arith.subf %137, %140 : vector<8x8xf32>
    %142 = math.exp %141 : vector<8x8xf32>
    %cst_47 = arith.constant dense<0.000000e+00> : vector<8xf32>
    %143 = vector.multi_reduction <add>, %142, %cst_47 [1] : vector<8x8xf32> to vector<8xf32>
    %144 = vector.shape_cast %143 : vector<8xf32> to vector<8x1xf32>
    %145 = tpu.reciprocal %144 {approx = true} : vector<8x1xf32> -> vector<8x1xf32>
    %146 = vector.broadcast %145 : vector<8x1xf32> to vector<8x8xf32>
    %147 = arith.mulf %142, %146 : vector<8x8xf32>
    %148 = arith.truncf %147 : vector<8x8xf32> to vector<8x8xbf16>
    %cst_48 = arith.constant dense<0.000000e+00> : vector<8x16xf32>
    %149 = tpu.matmul %148, %136, %cst_48 {dimension_numbers = #tpu.dot_dimension_numbers<[1], [0], [0], [1], [0, 0, 1, 1], [], []>} : vector<8x8xbf16>, vector<8x16xbf16>, vector<8x16xf32> -> vector<8x16xf32>
    %c0_49 = arith.constant 0 : index
    %c112 = arith.constant 112 : index
    %150 = vector.load %arg22[%c0_49, %c112] : memref<8x128xf32, #tpu.memory_space<vmem>>, vector<8x16xf32>
    tpu.vector_store %arg22[%c0_49, %c112], %149 {strides = array<i32>} : memref<8x128xf32, #tpu.memory_space<vmem>>, vector<8x16xf32>,
    %c0_50 = arith.constant 0 : index
    %c0_51 = arith.constant 0 : index
    %151 = vector.load %arg22[%c0_50, %c0_51] : memref<8x128xf32, #tpu.memory_space<vmem>>, vector<8x128xf32>
    %c0_52 = arith.constant 0 : index
    %c0_53 = arith.constant 0 : index
    %152 = vector.load %arg5[%c0_52, %c0_53] : memref<128x128xbf16, #tpu.memory_space<vmem>>, vector<128x128xbf16>
    %153 = arith.truncf %151 : vector<8x128xf32> to vector<8x128xbf16>
    %cst_54 = arith.constant dense<0.000000e+00> : vector<8x128xf32>
    %154 = tpu.matmul %153, %152, %cst_54 {dimension_numbers = #tpu.dot_dimension_numbers<[1], [0], [0], [1], [0, 0, 1, 1], [], []>} : vector<8x128xbf16>, vector<128x128xbf16>, vector<8x128xf32> -> vector<8x128xf32>
    %c0_55 = arith.constant 0 : index
    %c0_56 = arith.constant 0 : index
    %155 = vector.load %arg6[%c0_55, %c0_56] : memref<1x128xbf16, #tpu.memory_space<vmem>>, vector<1x128xbf16>
    %156 = arith.extf %155 : vector<1x128xbf16> to vector<1x128xf32>
    %157 = vector.broadcast %156 : vector<1x128xf32> to vector<8x128xf32>
    %158 = arith.addf %154, %157 : vector<8x128xf32>
    %159 = arith.addf %1, %158 : vector<8x128xf32>
    %c0_57 = arith.constant 0 : index
    %c0_58 = arith.constant 0 : index
    %160 = vector.load %arg7[%c0_57, %c0_58] : memref<1x128xf32, #tpu.memory_space<vmem>>, vector<1x128xf32>
    %c0_59 = arith.constant 0 : index
    %c0_60 = arith.constant 0 : index
    %161 = vector.load %arg8[%c0_59, %c0_60] : memref<1x128xf32, #tpu.memory_space<vmem>>, vector<1x128xf32>
    %cst_61 = arith.constant dense<0.000000e+00> : vector<8xf32>
    %162 = vector.multi_reduction <add>, %159, %cst_61 [1] : vector<8x128xf32> to vector<8xf32>
    %163 = vector.shape_cast %162 : vector<8xf32> to vector<8x1xf32>
    %cst_62 = arith.constant 1.280000e+02 : f32
    %164 = vector.broadcast %cst_62 : f32 to vector<8x1xf32>
    %165 = arith.divf %163, %164 : vector<8x1xf32>
    %166 = vector.broadcast %165 : vector<8x1xf32> to vector<8x128xf32>
    %167 = arith.subf %159, %166 : vector<8x128xf32>
    %168 = arith.mulf %167, %167 : vector<8x128xf32>
    %cst_63 = arith.constant dense<0.000000e+00> : vector<8xf32>
    %169 = vector.multi_reduction <add>, %168, %cst_63 [1] : vector<8x128xf32> to vector<8xf32>
    %170 = vector.shape_cast %169 : vector<8xf32> to vector<8x1xf32>
    %cst_64 = arith.constant 1.280000e+02 : f32
    %171 = vector.broadcast %cst_64 : f32 to vector<8x1xf32>
    %172 = arith.divf %170, %171 : vector<8x1xf32>
    %cst_65 = arith.constant 9.99999974E-6 : f32
    %173 = vector.broadcast %cst_65 : f32 to vector<8x1xf32>
    %174 = arith.addf %172, %173 : vector<8x1xf32>
    %175 = math.rsqrt %174 : vector<8x1xf32>
    %176 = vector.broadcast %175 : vector<8x1xf32> to vector<8x128xf32>
    %177 = arith.mulf %167, %176 : vector<8x128xf32>
    %178 = vector.broadcast %160 : vector<1x128xf32> to vector<8x128xf32>
    %179 = arith.mulf %177, %178 : vector<8x128xf32>
    %180 = vector.broadcast %161 : vector<1x128xf32> to vector<8x128xf32>
    %181 = arith.addf %179, %180 : vector<8x128xf32>
    %c0_66 = arith.constant 0 : index
    %c0_67 = arith.constant 0 : index
    %182 = vector.load %arg9[%c0_66, %c0_67] : memref<128x384xbf16, #tpu.memory_space<vmem>>, vector<128x384xbf16>
    %c0_68 = arith.constant 0 : index
    %c0_69 = arith.constant 0 : index
    %183 = vector.load %arg10[%c0_68, %c0_69] : memref<1x384xbf16, #tpu.memory_space<vmem>>, vector<1x384xbf16>
    %184 = vector.extract_strided_slice %182 {offsets = [0, 0], sizes = [128, 128], strides = [1, 1]} : vector<128x384xbf16> to vector<128x128xbf16>
    %185 = arith.truncf %181 : vector<8x128xf32> to vector<8x128xbf16>
    %cst_70 = arith.constant dense<0.000000e+00> : vector<8x128xf32>
    %186 = tpu.matmul %185, %184, %cst_70 {dimension_numbers = #tpu.dot_dimension_numbers<[1], [0], [0], [1], [0, 0, 1, 1], [], []>} : vector<8x128xbf16>, vector<128x128xbf16>, vector<8x128xf32> -> vector<8x128xf32>
    %187 = vector.extract_strided_slice %183 {offsets = [0, 0], sizes = [1, 128], strides = [1, 1]} : vector<1x384xbf16> to vector<1x128xbf16>
    %188 = arith.extf %187 : vector<1x128xbf16> to vector<1x128xf32>
    %189 = vector.broadcast %188 : vector<1x128xf32> to vector<8x128xf32>
    %190 = arith.addf %186, %189 : vector<8x128xf32>
    %191 = arith.truncf %190 : vector<8x128xf32> to vector<8x128xbf16>
    %192 = vector.extract_strided_slice %182 {offsets = [0, 128], sizes = [128, 128], strides = [1, 1]} : vector<128x384xbf16> to vector<128x128xbf16>
    %193 = arith.truncf %3 : vector<16x128xf32> to vector<16x128xbf16>
    %cst_71 = arith.constant dense<0.000000e+00> : vector<16x128xf32>
    %194 = tpu.matmul %193, %192, %cst_71 {dimension_numbers = #tpu.dot_dimension_numbers<[1], [0], [0], [1], [0, 0, 1, 1], [], []>} : vector<16x128xbf16>, vector<128x128xbf16>, vector<16x128xf32> -> vector<16x128xf32>
    %195 = vector.extract_strided_slice %183 {offsets = [0, 128], sizes = [1, 128], strides = [1, 1]} : vector<1x384xbf16> to vector<1x128xbf16>
    %196 = arith.extf %195 : vector<1x128xbf16> to vector<1x128xf32>
    %197 = vector.broadcast %196 : vector<1x128xf32> to vector<16x128xf32>
    %198 = arith.addf %194, %197 : vector<16x128xf32>
    %199 = arith.truncf %198 : vector<16x128xf32> to vector<16x128xbf16>
    %200 = vector.extract_strided_slice %182 {offsets = [0, 256], sizes = [128, 128], strides = [1, 1]} : vector<128x384xbf16> to vector<128x128xbf16>
    %201 = arith.truncf %3 : vector<16x128xf32> to vector<16x128xbf16>
    %cst_72 = arith.constant dense<0.000000e+00> : vector<16x128xf32>
    %202 = tpu.matmul %201, %200, %cst_72 {dimension_numbers = #tpu.dot_dimension_numbers<[1], [0], [0], [1], [0, 0, 1, 1], [], []>} : vector<16x128xbf16>, vector<128x128xbf16>, vector<16x128xf32> -> vector<16x128xf32>
    %203 = vector.extract_strided_slice %183 {offsets = [0, 256], sizes = [1, 128], strides = [1, 1]} : vector<1x384xbf16> to vector<1x128xbf16>
    %204 = arith.extf %203 : vector<1x128xbf16> to vector<1x128xf32>
    %205 = vector.broadcast %204 : vector<1x128xf32> to vector<16x128xf32>
    %206 = arith.addf %202, %205 : vector<16x128xf32>
    %207 = arith.truncf %206 : vector<16x128xf32> to vector<16x128xbf16>
    %208 = vector.extract_strided_slice %191 {offsets = [0, 0], sizes = [8, 16], strides = [1, 1]} : vector<8x128xbf16> to vector<8x16xbf16>
    %209 = vector.extract_strided_slice %199 {offsets = [0, 0], sizes = [16, 16], strides = [1, 1]} : vector<16x128xbf16> to vector<16x16xbf16>
    %210 = vector.extract_strided_slice %207 {offsets = [0, 0], sizes = [16, 16], strides = [1, 1]} : vector<16x128xbf16> to vector<16x16xbf16>
    %cst_73 = arith.constant dense<0.000000e+00> : vector<8x16xf32>
    %211 = tpu.matmul %208, %209, %cst_73 {dimension_numbers = #tpu.dot_dimension_numbers<[1], [1], [0], [0], [0, 0, 1, 0], [], []>} : vector<8x16xbf16>, vector<16x16xbf16>, vector<8x16xf32> -> vector<8x16xf32>
    %cst_74 = arith.constant dense<0xFF800000> : vector<8xf32>
    %212 = vector.multi_reduction <maximumf>, %211, %cst_74 [1] : vector<8x16xf32> to vector<8xf32>
    %213 = vector.shape_cast %212 : vector<8xf32> to vector<8x1xf32>
    %214 = vector.broadcast %213 : vector<8x1xf32> to vector<8x16xf32>
    %215 = arith.subf %211, %214 : vector<8x16xf32>
    %216 = math.exp %215 : vector<8x16xf32>
    %cst_75 = arith.constant dense<0.000000e+00> : vector<8xf32>
    %217 = vector.multi_reduction <add>, %216, %cst_75 [1] : vector<8x16xf32> to vector<8xf32>
    %218 = vector.shape_cast %217 : vector<8xf32> to vector<8x1xf32>
    %219 = tpu.reciprocal %218 {approx = true} : vector<8x1xf32> -> vector<8x1xf32>
    %220 = vector.broadcast %219 : vector<8x1xf32> to vector<8x16xf32>
    %221 = arith.mulf %216, %220 : vector<8x16xf32>
    %222 = arith.truncf %221 : vector<8x16xf32> to vector<8x16xbf16>
    %cst_76 = arith.constant dense<0.000000e+00> : vector<8x16xf32>
    %223 = tpu.matmul %222, %210, %cst_76 {dimension_numbers = #tpu.dot_dimension_numbers<[1], [0], [0], [1], [0, 0, 1, 1], [], []>} : vector<8x16xbf16>, vector<16x16xbf16>, vector<8x16xf32> -> vector<8x16xf32>
    %c0_77 = arith.constant 0 : index
    %c0_78 = arith.constant 0 : index
    %224 = vector.load %arg22[%c0_77, %c0_78] : memref<8x128xf32, #tpu.memory_space<vmem>>, vector<8x16xf32>
    tpu.vector_store %arg22[%c0_77, %c0_78], %223 {strides = array<i32>} : memref<8x128xf32, #tpu.memory_space<vmem>>, vector<8x16xf32>,
    %225 = vector.extract_strided_slice %191 {offsets = [0, 16], sizes = [8, 16], strides = [1, 1]} : vector<8x128xbf16> to vector<8x16xbf16>
    %226 = vector.extract_strided_slice %199 {offsets = [0, 16], sizes = [16, 16], strides = [1, 1]} : vector<16x128xbf16> to vector<16x16xbf16>
    %227 = vector.extract_strided_slice %207 {offsets = [0, 16], sizes = [16, 16], strides = [1, 1]} : vector<16x128xbf16> to vector<16x16xbf16>
    %cst_79 = arith.constant dense<0.000000e+00> : vector<8x16xf32>
    %228 = tpu.matmul %225, %226, %cst_79 {dimension_numbers = #tpu.dot_dimension_numbers<[1], [1], [0], [0], [0, 0, 1, 0], [], []>} : vector<8x16xbf16>, vector<16x16xbf16>, vector<8x16xf32> -> vector<8x16xf32>
    %cst_80 = arith.constant dense<0xFF800000> : vector<8xf32>
    %229 = vector.multi_reduction <maximumf>, %228, %cst_80 [1] : vector<8x16xf32> to vector<8xf32>
    %230 = vector.shape_cast %229 : vector<8xf32> to vector<8x1xf32>
    %231 = vector.broadcast %230 : vector<8x1xf32> to vector<8x16xf32>
    %232 = arith.subf %228, %231 : vector<8x16xf32>
    %233 = math.exp %232 : vector<8x16xf32>
    %cst_81 = arith.constant dense<0.000000e+00> : vector<8xf32>
    %234 = vector.multi_reduction <add>, %233, %cst_81 [1] : vector<8x16xf32> to vector<8xf32>
    %235 = vector.shape_cast %234 : vector<8xf32> to vector<8x1xf32>
    %236 = tpu.reciprocal %235 {approx = true} : vector<8x1xf32> -> vector<8x1xf32>
    %237 = vector.broadcast %236 : vector<8x1xf32> to vector<8x16xf32>
    %238 = arith.mulf %233, %237 : vector<8x16xf32>
    %239 = arith.truncf %238 : vector<8x16xf32> to vector<8x16xbf16>
    %cst_82 = arith.constant dense<0.000000e+00> : vector<8x16xf32>
    %240 = tpu.matmul %239, %227, %cst_82 {dimension_numbers = #tpu.dot_dimension_numbers<[1], [0], [0], [1], [0, 0, 1, 1], [], []>} : vector<8x16xbf16>, vector<16x16xbf16>, vector<8x16xf32> -> vector<8x16xf32>
    %c0_83 = arith.constant 0 : index
    %c16_84 = arith.constant 16 : index
    %241 = vector.load %arg22[%c0_83, %c16_84] : memref<8x128xf32, #tpu.memory_space<vmem>>, vector<8x16xf32>
    tpu.vector_store %arg22[%c0_83, %c16_84], %240 {strides = array<i32>} : memref<8x128xf32, #tpu.memory_space<vmem>>, vector<8x16xf32>,
    %242 = vector.extract_strided_slice %191 {offsets = [0, 32], sizes = [8, 16], strides = [1, 1]} : vector<8x128xbf16> to vector<8x16xbf16>
    %243 = vector.extract_strided_slice %199 {offsets = [0, 32], sizes = [16, 16], strides = [1, 1]} : vector<16x128xbf16> to vector<16x16xbf16>
    %244 = vector.extract_strided_slice %207 {offsets = [0, 32], sizes = [16, 16], strides = [1, 1]} : vector<16x128xbf16> to vector<16x16xbf16>
    %cst_85 = arith.constant dense<0.000000e+00> : vector<8x16xf32>
    %245 = tpu.matmul %242, %243, %cst_85 {dimension_numbers = #tpu.dot_dimension_numbers<[1], [1], [0], [0], [0, 0, 1, 0], [], []>} : vector<8x16xbf16>, vector<16x16xbf16>, vector<8x16xf32> -> vector<8x16xf32>
    %cst_86 = arith.constant dense<0xFF800000> : vector<8xf32>
    %246 = vector.multi_reduction <maximumf>, %245, %cst_86 [1] : vector<8x16xf32> to vector<8xf32>
    %247 = vector.shape_cast %246 : vector<8xf32> to vector<8x1xf32>
    %248 = vector.broadcast %247 : vector<8x1xf32> to vector<8x16xf32>
    %249 = arith.subf %245, %248 : vector<8x16xf32>
    %250 = math.exp %249 : vector<8x16xf32>
    %cst_87 = arith.constant dense<0.000000e+00> : vector<8xf32>
    %251 = vector.multi_reduction <add>, %250, %cst_87 [1] : vector<8x16xf32> to vector<8xf32>
    %252 = vector.shape_cast %251 : vector<8xf32> to vector<8x1xf32>
    %253 = tpu.reciprocal %252 {approx = true} : vector<8x1xf32> -> vector<8x1xf32>
    %254 = vector.broadcast %253 : vector<8x1xf32> to vector<8x16xf32>
    %255 = arith.mulf %250, %254 : vector<8x16xf32>
    %256 = arith.truncf %255 : vector<8x16xf32> to vector<8x16xbf16>
    %cst_88 = arith.constant dense<0.000000e+00> : vector<8x16xf32>
    %257 = tpu.matmul %256, %244, %cst_88 {dimension_numbers = #tpu.dot_dimension_numbers<[1], [0], [0], [1], [0, 0, 1, 1], [], []>} : vector<8x16xbf16>, vector<16x16xbf16>, vector<8x16xf32> -> vector<8x16xf32>
    %c0_89 = arith.constant 0 : index
    %c32_90 = arith.constant 32 : index
    %258 = vector.load %arg22[%c0_89, %c32_90] : memref<8x128xf32, #tpu.memory_space<vmem>>, vector<8x16xf32>
    tpu.vector_store %arg22[%c0_89, %c32_90], %257 {strides = array<i32>} : memref<8x128xf32, #tpu.memory_space<vmem>>, vector<8x16xf32>,
    %259 = vector.extract_strided_slice %191 {offsets = [0, 48], sizes = [8, 16], strides = [1, 1]} : vector<8x128xbf16> to vector<8x16xbf16>
    %260 = vector.extract_strided_slice %199 {offsets = [0, 48], sizes = [16, 16], strides = [1, 1]} : vector<16x128xbf16> to vector<16x16xbf16>
    %261 = vector.extract_strided_slice %207 {offsets = [0, 48], sizes = [16, 16], strides = [1, 1]} : vector<16x128xbf16> to vector<16x16xbf16>
    %cst_91 = arith.constant dense<0.000000e+00> : vector<8x16xf32>
    %262 = tpu.matmul %259, %260, %cst_91 {dimension_numbers = #tpu.dot_dimension_numbers<[1], [1], [0], [0], [0, 0, 1, 0], [], []>} : vector<8x16xbf16>, vector<16x16xbf16>, vector<8x16xf32> -> vector<8x16xf32>
    %cst_92 = arith.constant dense<0xFF800000> : vector<8xf32>
    %263 = vector.multi_reduction <maximumf>, %262, %cst_92 [1] : vector<8x16xf32> to vector<8xf32>
    %264 = vector.shape_cast %263 : vector<8xf32> to vector<8x1xf32>
    %265 = vector.broadcast %264 : vector<8x1xf32> to vector<8x16xf32>
    %266 = arith.subf %262, %265 : vector<8x16xf32>
    %267 = math.exp %266 : vector<8x16xf32>
    %cst_93 = arith.constant dense<0.000000e+00> : vector<8xf32>
    %268 = vector.multi_reduction <add>, %267, %cst_93 [1] : vector<8x16xf32> to vector<8xf32>
    %269 = vector.shape_cast %268 : vector<8xf32> to vector<8x1xf32>
    %270 = tpu.reciprocal %269 {approx = true} : vector<8x1xf32> -> vector<8x1xf32>
    %271 = vector.broadcast %270 : vector<8x1xf32> to vector<8x16xf32>
    %272 = arith.mulf %267, %271 : vector<8x16xf32>
    %273 = arith.truncf %272 : vector<8x16xf32> to vector<8x16xbf16>
    %cst_94 = arith.constant dense<0.000000e+00> : vector<8x16xf32>
    %274 = tpu.matmul %273, %261, %cst_94 {dimension_numbers = #tpu.dot_dimension_numbers<[1], [0], [0], [1], [0, 0, 1, 1], [], []>} : vector<8x16xbf16>, vector<16x16xbf16>, vector<8x16xf32> -> vector<8x16xf32>
    %c0_95 = arith.constant 0 : index
    %c48_96 = arith.constant 48 : index
    %275 = vector.load %arg22[%c0_95, %c48_96] : memref<8x128xf32, #tpu.memory_space<vmem>>, vector<8x16xf32>
    tpu.vector_store %arg22[%c0_95, %c48_96], %274 {strides = array<i32>} : memref<8x128xf32, #tpu.memory_space<vmem>>, vector<8x16xf32>,
    %276 = vector.extract_strided_slice %191 {offsets = [0, 64], sizes = [8, 16], strides = [1, 1]} : vector<8x128xbf16> to vector<8x16xbf16>
    %277 = vector.extract_strided_slice %199 {offsets = [0, 64], sizes = [16, 16], strides = [1, 1]} : vector<16x128xbf16> to vector<16x16xbf16>
    %278 = vector.extract_strided_slice %207 {offsets = [0, 64], sizes = [16, 16], strides = [1, 1]} : vector<16x128xbf16> to vector<16x16xbf16>
    %cst_97 = arith.constant dense<0.000000e+00> : vector<8x16xf32>
    %279 = tpu.matmul %276, %277, %cst_97 {dimension_numbers = #tpu.dot_dimension_numbers<[1], [1], [0], [0], [0, 0, 1, 0], [], []>} : vector<8x16xbf16>, vector<16x16xbf16>, vector<8x16xf32> -> vector<8x16xf32>
    %cst_98 = arith.constant dense<0xFF800000> : vector<8xf32>
    %280 = vector.multi_reduction <maximumf>, %279, %cst_98 [1] : vector<8x16xf32> to vector<8xf32>
    %281 = vector.shape_cast %280 : vector<8xf32> to vector<8x1xf32>
    %282 = vector.broadcast %281 : vector<8x1xf32> to vector<8x16xf32>
    %283 = arith.subf %279, %282 : vector<8x16xf32>
    %284 = math.exp %283 : vector<8x16xf32>
    %cst_99 = arith.constant dense<0.000000e+00> : vector<8xf32>
    %285 = vector.multi_reduction <add>, %284, %cst_99 [1] : vector<8x16xf32> to vector<8xf32>
    %286 = vector.shape_cast %285 : vector<8xf32> to vector<8x1xf32>
    %287 = tpu.reciprocal %286 {approx = true} : vector<8x1xf32> -> vector<8x1xf32>
    %288 = vector.broadcast %287 : vector<8x1xf32> to vector<8x16xf32>
    %289 = arith.mulf %284, %288 : vector<8x16xf32>
    %290 = arith.truncf %289 : vector<8x16xf32> to vector<8x16xbf16>
    %cst_100 = arith.constant dense<0.000000e+00> : vector<8x16xf32>
    %291 = tpu.matmul %290, %278, %cst_100 {dimension_numbers = #tpu.dot_dimension_numbers<[1], [0], [0], [1], [0, 0, 1, 1], [], []>} : vector<8x16xbf16>, vector<16x16xbf16>, vector<8x16xf32> -> vector<8x16xf32>
    %c0_101 = arith.constant 0 : index
    %c64_102 = arith.constant 64 : index
    %292 = vector.load %arg22[%c0_101, %c64_102] : memref<8x128xf32, #tpu.memory_space<vmem>>, vector<8x16xf32>
    tpu.vector_store %arg22[%c0_101, %c64_102], %291 {strides = array<i32>} : memref<8x128xf32, #tpu.memory_space<vmem>>, vector<8x16xf32>,
    %293 = vector.extract_strided_slice %191 {offsets = [0, 80], sizes = [8, 16], strides = [1, 1]} : vector<8x128xbf16> to vector<8x16xbf16>
    %294 = vector.extract_strided_slice %199 {offsets = [0, 80], sizes = [16, 16], strides = [1, 1]} : vector<16x128xbf16> to vector<16x16xbf16>
    %295 = vector.extract_strided_slice %207 {offsets = [0, 80], sizes = [16, 16], strides = [1, 1]} : vector<16x128xbf16> to vector<16x16xbf16>
    %cst_103 = arith.constant dense<0.000000e+00> : vector<8x16xf32>
    %296 = tpu.matmul %293, %294, %cst_103 {dimension_numbers = #tpu.dot_dimension_numbers<[1], [1], [0], [0], [0, 0, 1, 0], [], []>} : vector<8x16xbf16>, vector<16x16xbf16>, vector<8x16xf32> -> vector<8x16xf32>
    %cst_104 = arith.constant dense<0xFF800000> : vector<8xf32>
    %297 = vector.multi_reduction <maximumf>, %296, %cst_104 [1] : vector<8x16xf32> to vector<8xf32>
    %298 = vector.shape_cast %297 : vector<8xf32> to vector<8x1xf32>
    %299 = vector.broadcast %298 : vector<8x1xf32> to vector<8x16xf32>
    %300 = arith.subf %296, %299 : vector<8x16xf32>
    %301 = math.exp %300 : vector<8x16xf32>
    %cst_105 = arith.constant dense<0.000000e+00> : vector<8xf32>
    %302 = vector.multi_reduction <add>, %301, %cst_105 [1] : vector<8x16xf32> to vector<8xf32>
    %303 = vector.shape_cast %302 : vector<8xf32> to vector<8x1xf32>
    %304 = tpu.reciprocal %303 {approx = true} : vector<8x1xf32> -> vector<8x1xf32>
    %305 = vector.broadcast %304 : vector<8x1xf32> to vector<8x16xf32>
    %306 = arith.mulf %301, %305 : vector<8x16xf32>
    %307 = arith.truncf %306 : vector<8x16xf32> to vector<8x16xbf16>
    %cst_106 = arith.constant dense<0.000000e+00> : vector<8x16xf32>
    %308 = tpu.matmul %307, %295, %cst_106 {dimension_numbers = #tpu.dot_dimension_numbers<[1], [0], [0], [1], [0, 0, 1, 1], [], []>} : vector<8x16xbf16>, vector<16x16xbf16>, vector<8x16xf32> -> vector<8x16xf32>
    %c0_107 = arith.constant 0 : index
    %c80_108 = arith.constant 80 : index
    %309 = vector.load %arg22[%c0_107, %c80_108] : memref<8x128xf32, #tpu.memory_space<vmem>>, vector<8x16xf32>
    tpu.vector_store %arg22[%c0_107, %c80_108], %308 {strides = array<i32>} : memref<8x128xf32, #tpu.memory_space<vmem>>, vector<8x16xf32>,
    %310 = vector.extract_strided_slice %191 {offsets = [0, 96], sizes = [8, 16], strides = [1, 1]} : vector<8x128xbf16> to vector<8x16xbf16>
    %311 = vector.extract_strided_slice %199 {offsets = [0, 96], sizes = [16, 16], strides = [1, 1]} : vector<16x128xbf16> to vector<16x16xbf16>
    %312 = vector.extract_strided_slice %207 {offsets = [0, 96], sizes = [16, 16], strides = [1, 1]} : vector<16x128xbf16> to vector<16x16xbf16>
    %cst_109 = arith.constant dense<0.000000e+00> : vector<8x16xf32>
    %313 = tpu.matmul %310, %311, %cst_109 {dimension_numbers = #tpu.dot_dimension_numbers<[1], [1], [0], [0], [0, 0, 1, 0], [], []>} : vector<8x16xbf16>, vector<16x16xbf16>, vector<8x16xf32> -> vector<8x16xf32>
    %cst_110 = arith.constant dense<0xFF800000> : vector<8xf32>
    %314 = vector.multi_reduction <maximumf>, %313, %cst_110 [1] : vector<8x16xf32> to vector<8xf32>
    %315 = vector.shape_cast %314 : vector<8xf32> to vector<8x1xf32>
    %316 = vector.broadcast %315 : vector<8x1xf32> to vector<8x16xf32>
    %317 = arith.subf %313, %316 : vector<8x16xf32>
    %318 = math.exp %317 : vector<8x16xf32>
    %cst_111 = arith.constant dense<0.000000e+00> : vector<8xf32>
    %319 = vector.multi_reduction <add>, %318, %cst_111 [1] : vector<8x16xf32> to vector<8xf32>
    %320 = vector.shape_cast %319 : vector<8xf32> to vector<8x1xf32>
    %321 = tpu.reciprocal %320 {approx = true} : vector<8x1xf32> -> vector<8x1xf32>
    %322 = vector.broadcast %321 : vector<8x1xf32> to vector<8x16xf32>
    %323 = arith.mulf %318, %322 : vector<8x16xf32>
    %324 = arith.truncf %323 : vector<8x16xf32> to vector<8x16xbf16>
    %cst_112 = arith.constant dense<0.000000e+00> : vector<8x16xf32>
    %325 = tpu.matmul %324, %312, %cst_112 {dimension_numbers = #tpu.dot_dimension_numbers<[1], [0], [0], [1], [0, 0, 1, 1], [], []>} : vector<8x16xbf16>, vector<16x16xbf16>, vector<8x16xf32> -> vector<8x16xf32>
    %c0_113 = arith.constant 0 : index
    %c96_114 = arith.constant 96 : index
    %326 = vector.load %arg22[%c0_113, %c96_114] : memref<8x128xf32, #tpu.memory_space<vmem>>, vector<8x16xf32>
    tpu.vector_store %arg22[%c0_113, %c96_114], %325 {strides = array<i32>} : memref<8x128xf32, #tpu.memory_space<vmem>>, vector<8x16xf32>,
    %327 = vector.extract_strided_slice %191 {offsets = [0, 112], sizes = [8, 16], strides = [1, 1]} : vector<8x128xbf16> to vector<8x16xbf16>
    %328 = vector.extract_strided_slice %199 {offsets = [0, 112], sizes = [16, 16], strides = [1, 1]} : vector<16x128xbf16> to vector<16x16xbf16>
    %329 = vector.extract_strided_slice %207 {offsets = [0, 112], sizes = [16, 16], strides = [1, 1]} : vector<16x128xbf16> to vector<16x16xbf16>
    %cst_115 = arith.constant dense<0.000000e+00> : vector<8x16xf32>
    %330 = tpu.matmul %327, %328, %cst_115 {dimension_numbers = #tpu.dot_dimension_numbers<[1], [1], [0], [0], [0, 0, 1, 0], [], []>} : vector<8x16xbf16>, vector<16x16xbf16>, vector<8x16xf32> -> vector<8x16xf32>
    %cst_116 = arith.constant dense<0xFF800000> : vector<8xf32>
    %331 = vector.multi_reduction <maximumf>, %330, %cst_116 [1] : vector<8x16xf32> to vector<8xf32>
    %332 = vector.shape_cast %331 : vector<8xf32> to vector<8x1xf32>
    %333 = vector.broadcast %332 : vector<8x1xf32> to vector<8x16xf32>
    %334 = arith.subf %330, %333 : vector<8x16xf32>
    %335 = math.exp %334 : vector<8x16xf32>
    %cst_117 = arith.constant dense<0.000000e+00> : vector<8xf32>
    %336 = vector.multi_reduction <add>, %335, %cst_117 [1] : vector<8x16xf32> to vector<8xf32>
    %337 = vector.shape_cast %336 : vector<8xf32> to vector<8x1xf32>
    %338 = tpu.reciprocal %337 {approx = true} : vector<8x1xf32> -> vector<8x1xf32>
    %339 = vector.broadcast %338 : vector<8x1xf32> to vector<8x16xf32>
    %340 = arith.mulf %335, %339 : vector<8x16xf32>
    %341 = arith.truncf %340 : vector<8x16xf32> to vector<8x16xbf16>
    %cst_118 = arith.constant dense<0.000000e+00> : vector<8x16xf32>
    %342 = tpu.matmul %341, %329, %cst_118 {dimension_numbers = #tpu.dot_dimension_numbers<[1], [0], [0], [1], [0, 0, 1, 1], [], []>} : vector<8x16xbf16>, vector<16x16xbf16>, vector<8x16xf32> -> vector<8x16xf32>
    %c0_119 = arith.constant 0 : index
    %c112_120 = arith.constant 112 : index
    %343 = vector.load %arg22[%c0_119, %c112_120] : memref<8x128xf32, #tpu.memory_space<vmem>>, vector<8x16xf32>
    tpu.vector_store %arg22[%c0_119, %c112_120], %342 {strides = array<i32>} : memref<8x128xf32, #tpu.memory_space<vmem>>, vector<8x16xf32>,
    %c0_121 = arith.constant 0 : index
    %c0_122 = arith.constant 0 : index
    %344 = vector.load %arg22[%c0_121, %c0_122] : memref<8x128xf32, #tpu.memory_space<vmem>>, vector<8x128xf32>
    %c0_123 = arith.constant 0 : index
    %c0_124 = arith.constant 0 : index
    %345 = vector.load %arg11[%c0_123, %c0_124] : memref<128x128xbf16, #tpu.memory_space<vmem>>, vector<128x128xbf16>
    %346 = arith.truncf %344 : vector<8x128xf32> to vector<8x128xbf16>
    %cst_125 = arith.constant dense<0.000000e+00> : vector<8x128xf32>
    %347 = tpu.matmul %346, %345, %cst_125 {dimension_numbers = #tpu.dot_dimension_numbers<[1], [0], [0], [1], [0, 0, 1, 1], [], []>} : vector<8x128xbf16>, vector<128x128xbf16>, vector<8x128xf32> -> vector<8x128xf32>
    %c0_126 = arith.constant 0 : index
    %c0_127 = arith.constant 0 : index
    %348 = vector.load %arg12[%c0_126, %c0_127] : memref<1x128xbf16, #tpu.memory_space<vmem>>, vector<1x128xbf16>
    %349 = arith.extf %348 : vector<1x128xbf16> to vector<1x128xf32>
    %350 = vector.broadcast %349 : vector<1x128xf32> to vector<8x128xf32>
    %351 = arith.addf %347, %350 : vector<8x128xf32>
    %352 = arith.addf %181, %351 : vector<8x128xf32>
    %c0_128 = arith.constant 0 : index
    %c0_129 = arith.constant 0 : index
    %353 = vector.load %arg13[%c0_128, %c0_129] : memref<1x128xf32, #tpu.memory_space<vmem>>, vector<1x128xf32>
    %c0_130 = arith.constant 0 : index
    %c0_131 = arith.constant 0 : index
    %354 = vector.load %arg14[%c0_130, %c0_131] : memref<1x128xf32, #tpu.memory_space<vmem>>, vector<1x128xf32>
    %cst_132 = arith.constant dense<0.000000e+00> : vector<8xf32>
    %355 = vector.multi_reduction <add>, %352, %cst_132 [1] : vector<8x128xf32> to vector<8xf32>
    %356 = vector.shape_cast %355 : vector<8xf32> to vector<8x1xf32>
    %cst_133 = arith.constant 1.280000e+02 : f32
    %357 = vector.broadcast %cst_133 : f32 to vector<8x1xf32>
    %358 = arith.divf %356, %357 : vector<8x1xf32>
    %359 = vector.broadcast %358 : vector<8x1xf32> to vector<8x128xf32>
    %360 = arith.subf %352, %359 : vector<8x128xf32>
    %361 = arith.mulf %360, %360 : vector<8x128xf32>
    %cst_134 = arith.constant dense<0.000000e+00> : vector<8xf32>
    %362 = vector.multi_reduction <add>, %361, %cst_134 [1] : vector<8x128xf32> to vector<8xf32>
    %363 = vector.shape_cast %362 : vector<8xf32> to vector<8x1xf32>
    %cst_135 = arith.constant 1.280000e+02 : f32
    %364 = vector.broadcast %cst_135 : f32 to vector<8x1xf32>
    %365 = arith.divf %363, %364 : vector<8x1xf32>
    %cst_136 = arith.constant 9.99999974E-6 : f32
    %366 = vector.broadcast %cst_136 : f32 to vector<8x1xf32>
    %367 = arith.addf %365, %366 : vector<8x1xf32>
    %368 = math.rsqrt %367 : vector<8x1xf32>
    %369 = vector.broadcast %368 : vector<8x1xf32> to vector<8x128xf32>
    %370 = arith.mulf %360, %369 : vector<8x128xf32>
    %371 = vector.broadcast %353 : vector<1x128xf32> to vector<8x128xf32>
    %372 = arith.mulf %370, %371 : vector<8x128xf32>
    %373 = vector.broadcast %354 : vector<1x128xf32> to vector<8x128xf32>
    %374 = arith.addf %372, %373 : vector<8x128xf32>
    %c0_137 = arith.constant 0 : index
    %c0_138 = arith.constant 0 : index
    %375 = vector.load %arg15[%c0_137, %c0_138] : memref<128x64xbf16, #tpu.memory_space<vmem>>, vector<128x64xbf16>
    %376 = arith.truncf %374 : vector<8x128xf32> to vector<8x128xbf16>
    %cst_139 = arith.constant dense<0.000000e+00> : vector<8x64xf32>
    %377 = tpu.matmul %376, %375, %cst_139 {dimension_numbers = #tpu.dot_dimension_numbers<[1], [0], [0], [1], [0, 0, 1, 1], [], []>} : vector<8x128xbf16>, vector<128x64xbf16>, vector<8x64xf32> -> vector<8x64xf32>
    %c0_140 = arith.constant 0 : index
    %c0_141 = arith.constant 0 : index
    %378 = vector.load %arg16[%c0_140, %c0_141] : memref<1x64xbf16, #tpu.memory_space<vmem>>, vector<1x64xbf16>
    %379 = arith.extf %378 : vector<1x64xbf16> to vector<1x64xf32>
    %380 = vector.broadcast %379 : vector<1x64xf32> to vector<8x64xf32>
    %381 = arith.addf %377, %380 : vector<8x64xf32>
    %cst_142 = arith.constant 0.000000e+00 : f32
    %382 = vector.broadcast %cst_142 : f32 to vector<8x64xf32>
    %383 = arith.maximumf %381, %382 : vector<8x64xf32>
    %c0_143 = arith.constant 0 : index
    %c0_144 = arith.constant 0 : index
    %384 = vector.load %arg17[%c0_143, %c0_144] : memref<64x128xbf16, #tpu.memory_space<vmem>>, vector<64x128xbf16>
    %385 = arith.truncf %383 : vector<8x64xf32> to vector<8x64xbf16>
    %cst_145 = arith.constant dense<0.000000e+00> : vector<8x128xf32>
    %386 = tpu.matmul %385, %384, %cst_145 {dimension_numbers = #tpu.dot_dimension_numbers<[1], [0], [0], [1], [0, 0, 1, 1], [], []>} : vector<8x64xbf16>, vector<64x128xbf16>, vector<8x128xf32> -> vector<8x128xf32>
    %c0_146 = arith.constant 0 : index
    %c0_147 = arith.constant 0 : index
    %387 = vector.load %arg18[%c0_146, %c0_147] : memref<1x128xbf16, #tpu.memory_space<vmem>>, vector<1x128xbf16>
    %388 = arith.extf %387 : vector<1x128xbf16> to vector<1x128xf32>
    %389 = vector.broadcast %388 : vector<1x128xf32> to vector<8x128xf32>
    %390 = arith.addf %386, %389 : vector<8x128xf32>
    %391 = arith.addf %374, %390 : vector<8x128xf32>
    %c0_148 = arith.constant 0 : index
    %c0_149 = arith.constant 0 : index
    %392 = vector.load %arg19[%c0_148, %c0_149] : memref<1x128xf32, #tpu.memory_space<vmem>>, vector<1x128xf32>
    %c0_150 = arith.constant 0 : index
    %c0_151 = arith.constant 0 : index
    %393 = vector.load %arg20[%c0_150, %c0_151] : memref<1x128xf32, #tpu.memory_space<vmem>>, vector<1x128xf32>
    %cst_152 = arith.constant dense<0.000000e+00> : vector<8xf32>
    %394 = vector.multi_reduction <add>, %391, %cst_152 [1] : vector<8x128xf32> to vector<8xf32>
    %395 = vector.shape_cast %394 : vector<8xf32> to vector<8x1xf32>
    %cst_153 = arith.constant 1.280000e+02 : f32
    %396 = vector.broadcast %cst_153 : f32 to vector<8x1xf32>
    %397 = arith.divf %395, %396 : vector<8x1xf32>
    %398 = vector.broadcast %397 : vector<8x1xf32> to vector<8x128xf32>
    %399 = arith.subf %391, %398 : vector<8x128xf32>
    %400 = arith.mulf %399, %399 : vector<8x128xf32>
    %cst_154 = arith.constant dense<0.000000e+00> : vector<8xf32>
    %401 = vector.multi_reduction <add>, %400, %cst_154 [1] : vector<8x128xf32> to vector<8xf32>
    %402 = vector.shape_cast %401 : vector<8xf32> to vector<8x1xf32>
    %cst_155 = arith.constant 1.280000e+02 : f32
    %403 = vector.broadcast %cst_155 : f32 to vector<8x1xf32>
    %404 = arith.divf %402, %403 : vector<8x1xf32>
    %cst_156 = arith.constant 9.99999974E-6 : f32
    %405 = vector.broadcast %cst_156 : f32 to vector<8x1xf32>
    %406 = arith.addf %404, %405 : vector<8x1xf32>
    %407 = math.rsqrt %406 : vector<8x1xf32>
    %408 = vector.broadcast %407 : vector<8x1xf32> to vector<8x128xf32>
    %409 = arith.mulf %399, %408 : vector<8x128xf32>
    %410 = vector.broadcast %392 : vector<1x128xf32> to vector<8x128xf32>
    %411 = arith.mulf %409, %410 : vector<8x128xf32>
    %412 = vector.broadcast %393 : vector<1x128xf32> to vector<8x128xf32>
    %413 = arith.addf %411, %412 : vector<8x128xf32>
    %c0_157 = arith.constant 0 : index
    %c0_158 = arith.constant 0 : index
    %c0_159 = arith.constant 0 : index
    %414 = vector.load %arg21[%c0_157, %c0_158, %c0_159] : memref<1x8x128xf32, #tpu.memory_space<vmem>>, vector<1x8x128xf32>
    %415 = vector.shape_cast %414 : vector<1x8x128xf32> to vector<8x128xf32>
    %416 = vector.shape_cast %413 : vector<8x128xf32> to vector<1x8x128xf32>
    tpu.vector_store %arg21[%c0_157, %c0_158, %c0_159], %416 {strides = array<i32>} : memref<1x8x128xf32, #tpu.memory_space<vmem>>, vector<1x8x128xf32>,
    return
  }
  func.func @transform_0(%arg0: i32) -> (i32, i32, i32) {
    %c0_i32 = arith.constant 0 : i32
    %c0_i32_0 = arith.constant 0 : i32
    %c0_i32_1 = arith.constant 0 : i32
    return %arg0, %c0_i32, %c0_i32_0 : i32, i32, i32
  }
  func.func @transform_1(%arg0: i32) -> (i32, i32, i32) {
    %c0_i32 = arith.constant 0 : i32
    %c0_i32_0 = arith.constant 0 : i32
    %c0_i32_1 = arith.constant 0 : i32
    return %arg0, %c0_i32, %c0_i32_0 : i32, i32, i32
  }
  func.func @transform_2(%arg0: i32) -> (i32, i32) {
    %c0_i32 = arith.constant 0 : i32
    %c0_i32_0 = arith.constant 0 : i32
    %c0_i32_1 = arith.constant 0 : i32
    return %c0_i32, %c0_i32_0 : i32, i32
  }
  func.func @transform_3(%arg0: i32) -> (i32, i32) {
    %c0_i32 = arith.constant 0 : i32
    %c0_i32_0 = arith.constant 0 : i32
    %c0_i32_1 = arith.constant 0 : i32
    return %c0_i32, %c0_i32_0 : i32, i32
  }
  func.func @transform_4(%arg0: i32) -> (i32, i32) {
    %c0_i32 = arith.constant 0 : i32
    %c0_i32_0 = arith.constant 0 : i32
    %c0_i32_1 = arith.constant 0 : i32
    return %c0_i32, %c0_i32_0 : i32, i32
  }
  func.func @transform_5(%arg0: i32) -> (i32, i32) {
    %c0_i32 = arith.constant 0 : i32
    %c0_i32_0 = arith.constant 0 : i32
    %c0_i32_1 = arith.constant 0 : i32
    return %c0_i32, %c0_i32_0 : i32, i32
  }
  func.func @transform_6(%arg0: i32) -> (i32, i32) {
    %c0_i32 = arith.constant 0 : i32
    %c0_i32_0 = arith.constant 0 : i32
    %c0_i32_1 = arith.constant 0 : i32
    return %c0_i32, %c0_i32_0 : i32, i32
  }
  func.func @transform_7(%arg0: i32) -> (i32, i32) {
    %c0_i32 = arith.constant 0 : i32
    %c0_i32_0 = arith.constant 0 : i32
    %c0_i32_1 = arith.constant 0 : i32
    return %c0_i32, %c0_i32_0 : i32, i32
  }
  func.func @transform_8(%arg0: i32) -> (i32, i32) {
    %c0_i32 = arith.constant 0 : i32
    %c0_i32_0 = arith.constant 0 : i32
    %c0_i32_1 = arith.constant 0 : i32
    return %c0_i32, %c0_i32_0 : i32, i32
  }
  func.func @transform_9(%arg0: i32) -> (i32, i32) {
    %c0_i32 = arith.constant 0 : i32
    %c0_i32_0 = arith.constant 0 : i32
    %c0_i32_1 = arith.constant 0 : i32
    return %c0_i32, %c0_i32_0 : i32, i32
  }
  func.func @transform_10(%arg0: i32) -> (i32, i32) {
    %c0_i32 = arith.constant 0 : i32
    %c0_i32_0 = arith.constant 0 : i32
    %c0_i32_1 = arith.constant 0 : i32
    return %c0_i32, %c0_i32_0 : i32, i32
  }
  func.func @transform_11(%arg0: i32) -> (i32, i32) {
    %c0_i32 = arith.constant 0 : i32
    %c0_i32_0 = arith.constant 0 : i32
    %c0_i32_1 = arith.constant 0 : i32
    return %c0_i32, %c0_i32_0 : i32, i32
  }
  func.func @transform_12(%arg0: i32) -> (i32, i32) {
    %c0_i32 = arith.constant 0 : i32
    %c0_i32_0 = arith.constant 0 : i32
    %c0_i32_1 = arith.constant 0 : i32
    return %c0_i32, %c0_i32_0 : i32, i32
  }
  func.func @transform_13(%arg0: i32) -> (i32, i32) {
    %c0_i32 = arith.constant 0 : i32
    %c0_i32_0 = arith.constant 0 : i32
    %c0_i32_1 = arith.constant 0 : i32
    return %c0_i32, %c0_i32_0 : i32, i32
  }
  func.func @transform_14(%arg0: i32) -> (i32, i32) {
    %c0_i32 = arith.constant 0 : i32
    %c0_i32_0 = arith.constant 0 : i32
    %c0_i32_1 = arith.constant 0 : i32
    return %c0_i32, %c0_i32_0 : i32, i32
  }
  func.func @transform_15(%arg0: i32) -> (i32, i32) {
    %c0_i32 = arith.constant 0 : i32
    %c0_i32_0 = arith.constant 0 : i32
    %c0_i32_1 = arith.constant 0 : i32
    return %c0_i32, %c0_i32_0 : i32, i32
  }
  func.func @transform_16(%arg0: i32) -> (i32, i32) {
    %c0_i32 = arith.constant 0 : i32
    %c0_i32_0 = arith.constant 0 : i32
    %c0_i32_1 = arith.constant 0 : i32
    return %c0_i32, %c0_i32_0 : i32, i32
  }
  func.func @transform_17(%arg0: i32) -> (i32, i32) {
    %c0_i32 = arith.constant 0 : i32
    %c0_i32_0 = arith.constant 0 : i32
    %c0_i32_1 = arith.constant 0 : i32
    return %c0_i32, %c0_i32_0 : i32, i32
  }
  func.func @transform_18(%arg0: i32) -> (i32, i32) {
    %c0_i32 = arith.constant 0 : i32
    %c0_i32_0 = arith.constant 0 : i32
    %c0_i32_1 = arith.constant 0 : i32
    return %c0_i32, %c0_i32_0 : i32, i32
  }
  func.func @transform_19(%arg0: i32) -> (i32, i32) {
    %c0_i32 = arith.constant 0 : i32
    %c0_i32_0 = arith.constant 0 : i32
    %c0_i32_1 = arith.constant 0 : i32
    return %c0_i32, %c0_i32_0 : i32, i32
  }
  func.func @transform_20(%arg0: i32) -> (i32, i32, i32) {
    %c0_i32 = arith.constant 0 : i32
    %c0_i32_0 = arith.constant 0 : i32
    %c0_i32_1 = arith.constant 0 : i32
    return %arg0, %c0_i32, %c0_i32_0 : i32, i32, i32
  }
}

</mosaic_0001>

<llo_original>
// kernel: custom_transformer.2
$region0: #{custom_transformer.2}
  #allocation0 [shape = 'u32[]', space=smem, size = 0x4, offset = 0x4, fixed_abs, tag = 'smem constant byte address 0x4 - core index']
  #allocation1 [shape = 'u32[72,128]{1,0:T(1,128)}', space=vmem, size = 0x9000, scoped, tag = 'internal scratch']
  #allocation2 [shape = 'f32[16,128]{1,0:T(8,128)}', space=vmem, size = 0x2000, scoped, tag = 'scratch operand']
  %s0 = inlined_call_operand.vmem [shape: f32[2,16,128], index: 0, kind: input, shape index: {}]
  %s1 = inlined_call_operand.hbm [shape: bf16[4,128,384], index: 1, kind: input, shape index: {}]
  %s2 = inlined_call_operand.vmem [shape: bf16[4,1,384], index: 2, kind: input, shape index: {}]
  %s3 = inlined_call_operand.vmem [shape: bf16[4,128,128], index: 3, kind: input, shape index: {}]
  %s4 = inlined_call_operand.vmem [shape: bf16[4,1,128], index: 4, kind: input, shape index: {}]
  %s5 = inlined_call_operand.vmem [shape: f32[4,1,128], index: 5, kind: input, shape index: {}]
  %s6 = inlined_call_operand.vmem [shape: f32[4,1,128], index: 6, kind: input, shape index: {}]
  %s7 = inlined_call_operand.vmem [shape: bf16[4,128,64], index: 7, kind: input, shape index: {}]
  %s8 = inlined_call_operand.vmem [shape: bf16[4,1,64], index: 8, kind: input, shape index: {}]
  %s9 = inlined_call_operand.vmem [shape: bf16[4,64,128], index: 9, kind: input, shape index: {}]
  %s10 = inlined_call_operand.vmem [shape: bf16[4,1,128], index: 10, kind: input, shape index: {}]
  %s11 = inlined_call_operand.vmem [shape: f32[4,1,128], index: 11, kind: input, shape index: {}]
  %s12 = inlined_call_operand.vmem [shape: f32[4,1,128], index: 12, kind: input, shape index: {}]
  %s13 = inlined_call_operand.vmem [shape: f32[2,16,128], index: 13, kind: output, shape index: {}]
  %s14 = sld [smem:[#allocation0]]
  $region93: #{custom_transformer.2} parent=0
    _
  %s16 = ssub.s32 1, %s14
  %s17 = scalar_select 0, %s16, %s14
  $region1: #{custom_transformer.2} parent=0
    #allocation3 [shape = 'u8[196608]{0}', space=vmem, size = 0x30000, scoped, tag = 'input window, operand 1']
    #allocation4 [shape = 's32[2]{0}', space=sflag, size = 0x8, scoped, tag = 'scoped memory for custom_transformer.2']
    %18 = vsyncpa [#allocation4], 0
    %s19 = scalar_lea.sflag [#allocation4], 1
    %20 = vsyncpa %s19, 0
    loop: start=0, step=1, limit=10
    $region2: #{custom_transformer.2} parent=1 // loop_pre_header
      _
    $region3: #{custom_transformer.2} parent=1 // loop_header
      %s22 = sphi 0, %s26
      %p23 = scmp.ge.s32.totalorder %s22, 10
      %s29 = sphi 0, %s41
      %s30 = sphi 0, %s37
      %s31 = sphi 0, %s29
      %s32 = sphi 0, %s30
      %s33 = sphi 0, %s31
      %s34 = sphi 0, %s32
      %s44 = sphi 0, %s46
      %s47 = sphi 0, %s44
      %s48 = sphi 0, %s47
      %s64 = sphi 0, %s48
      %s70 = sphi 0, %s72
      %s73 = sphi 0, %s70
      %s74 = sphi 0, %s73
      %s90 = sphi 0, %s74
      %s96 = sphi 0, %s98
      %s99 = sphi 0, %s96
      %s100 = sphi 0, %s99
      %s116 = sphi 0, %s100
      %s122 = sphi 0, %s124
      %s125 = sphi 0, %s122
      %s126 = sphi 0, %s125
      %s142 = sphi 0, %s126
      %s148 = sphi 0, %s150
      %s151 = sphi 0, %s148
      %s152 = sphi 0, %s151
      %s168 = sphi 0, %s152
      %s174 = sphi 0, %s176
      %s177 = sphi 0, %s174
      %s178 = sphi 0, %s177
      %s194 = sphi 0, %s178
      %s200 = sphi 0, %s202
      %s203 = sphi 0, %s200
      %s204 = sphi 0, %s203
      %s220 = sphi 0, %s204
      %s226 = sphi 0, %s228
      %s229 = sphi 0, %s226
      %s230 = sphi 0, %s229
      %s246 = sphi 0, %s230
      %s252 = sphi 0, %s254
      %s255 = sphi 0, %s252
      %s256 = sphi 0, %s255
      %s272 = sphi 0, %s256
      %s278 = sphi 0, %s280
      %s281 = sphi 0, %s278
      %s282 = sphi 0, %s281
      %s298 = sphi 0, %s282
      %s304 = sphi 0, %s306
      %s307 = sphi 0, %s304
      %s308 = sphi 0, %s307
      %s324 = sphi 0, %s308
      %s330 = sphi 0, %s332
      %s333 = sphi 0, %s330
      %s334 = sphi 0, %s333
      %s350 = sphi 0, %s334
      %s356 = sphi 0, %s358
      %s359 = sphi 0, %s356
      %s360 = sphi 0, %s359
      %s376 = sphi 0, %s360
      %s382 = sphi 0, %s384
      %s385 = sphi 0, %s382
      %s386 = sphi 0, %s385
      %s402 = sphi 0, %s386
    $region4: #{custom_transformer.2} parent=1 // loop_header_branch
      %25 = sbr.rel (%p23) target = $region8
    $region5: #{custom_transformer.2} parent=1 // loop_body
      %s27 = ssub.s32 %s22, 1
      %s28 = ssub.s32 %s22, 2
      %s35 = sadd.s32 1, %s30
      %p36 = scmp.ge.s32.totalorder %s35, 4
      %s37 = scalar_select %p36, 0, %s35
      %s38 = sadd.s32 1, %s29
      %s39 = scalar_select %p36, %s38, %s29
      %p40 = scmp.ge.s32.totalorder %s39, 2
      %s41 = scalar_select %p40, 0, %s39
      %s42 = ssub.s32 %s29, %s41
      %p43 = scmp.eq.s32.totalorder %s42, 0
      %s45 = sadd.s32 %s44, 1
      %s46 = scalar_select %p43, %s44, %s45
      %p49 = pneg %p43
      %p50 = scmp.eq.s32.totalorder %s22, 7
      %p51 = por %p49, %p50
      %p52 = scmp.ne.s32.totalorder %s44, %s47
      %p53 = scmp.eq.s32.totalorder %s22, 0
      %p54 = por %p52, %p53
      %p55 = scmp.ne.s32.totalorder %s44, %s47
      %p56 = scmp.eq.s32.totalorder %s27, 7
      %p57 = por %p55, %p56
      %p58 = scmp.ne.s32.totalorder %s47, %s48
      %p59 = scmp.eq.s32.totalorder %s27, 0
      %p60 = por %p58, %p59
      %p61 = scmp.ne.s32.totalorder %s47, %s48
      %p62 = scmp.eq.s32.totalorder %s28, 7
      %p63 = por %p61, %p62
      %p65 = scmp.ne.s32.totalorder %s48, %s64
      %p66 = scmp.eq.s32.totalorder %s28, 0
      %p67 = por %p65, %p66
      %s68 = ssub.s32 %s30, %s37
      %p69 = scmp.eq.s32.totalorder %s68, 0
      %s71 = sadd.s32 %s70, 1
      %s72 = scalar_select %p69, %s70, %s71
      %p75 = pneg %p69
      %p76 = scmp.eq.s32.totalorder %s22, 7
      %p77 = por %p75, %p76
      %p78 = scmp.ne.s32.totalorder %s70, %s73
      %p79 = scmp.eq.s32.totalorder %s22, 0
      %p80 = por %p78, %p79
      %p81 = scmp.ne.s32.totalorder %s70, %s73
      %p82 = scmp.eq.s32.totalorder %s27, 7
      %p83 = por %p81, %p82
      %p84 = scmp.ne.s32.totalorder %s73, %s74
      %p85 = scmp.eq.s32.totalorder %s27, 0
      %p86 = por %p84, %p85
      %p87 = scmp.ne.s32.totalorder %s73, %s74
      %p88 = scmp.eq.s32.totalorder %s28, 7
      %p89 = por %p87, %p88
      %p91 = scmp.ne.s32.totalorder %s74, %s90
      %p92 = scmp.eq.s32.totalorder %s28, 0
      %p93 = por %p91, %p92
      %s94 = ssub.s32 %s30, %s37
      %p95 = scmp.eq.s32.totalorder %s94, 0
      %s97 = sadd.s32 %s96, 1
      %s98 = scalar_select %p95, %s96, %s97
      %p101 = pneg %p95
      %p102 = scmp.eq.s32.totalorder %s22, 7
      %p103 = por %p101, %p102
      %p104 = scmp.ne.s32.totalorder %s96, %s99
      %p105 = scmp.eq.s32.totalorder %s22, 0
      %p106 = por %p104, %p105
      %p107 = scmp.ne.s32.totalorder %s96, %s99
      %p108 = scmp.eq.s32.totalorder %s27, 7
      %p109 = por %p107, %p108
      %p110 = scmp.ne.s32.totalorder %s99, %s100
      %p111 = scmp.eq.s32.totalorder %s27, 0
      %p112 = por %p110, %p111
      %p113 = scmp.ne.s32.totalorder %s99, %s100
      %p114 = scmp.eq.s32.totalorder %s28, 7
      %p115 = por %p113, %p114
      %p117 = scmp.ne.s32.totalorder %s100, %s116
      %p118 = scmp.eq.s32.totalorder %s28, 0
      %p119 = por %p117, %p118
      %s120 = ssub.s32 %s30, %s37
      %p121 = scmp.eq.s32.totalorder %s120, 0
      %s123 = sadd.s32 %s122, 1
      %s124 = scalar_select %p121, %s122, %s123
      %p127 = pneg %p121
      %p128 = scmp.eq.s32.totalorder %s22, 7
      %p129 = por %p127, %p128
      %p130 = scmp.ne.s32.totalorder %s122, %s125
      %p131 = scmp.eq.s32.totalorder %s22, 0
      %p132 = por %p130, %p131
      %p133 = scmp.ne.s32.totalorder %s122, %s125
      %p134 = scmp.eq.s32.totalorder %s27, 7
      %p135 = por %p133, %p134
      %p136 = scmp.ne.s32.totalorder %s125, %s126
      %p137 = scmp.eq.s32.totalorder %s27, 0
      %p138 = por %p136, %p137
      %p139 = scmp.ne.s32.totalorder %s125, %s126
      %p140 = scmp.eq.s32.totalorder %s28, 7
      %p141 = por %p139, %p140
      %p143 = scmp.ne.s32.totalorder %s126, %s142
      %p144 = scmp.eq.s32.totalorder %s28, 0
      %p145 = por %p143, %p144
      %s146 = ssub.s32 %s30, %s37
      %p147 = scmp.eq.s32.totalorder %s146, 0
      %s149 = sadd.s32 %s148, 1
      %s150 = scalar_select %p147, %s148, %s149
      %p153 = pneg %p147
      %p154 = scmp.eq.s32.totalorder %s22, 7
      %p155 = por %p153, %p154
      %p156 = scmp.ne.s32.totalorder %s148, %s151
      %p157 = scmp.eq.s32.totalorder %s22, 0
      %p158 = por %p156, %p157
      %p159 = scmp.ne.s32.totalorder %s148, %s151
      %p160 = scmp.eq.s32.totalorder %s27, 7
      %p161 = por %p159, %p160
      %p162 = scmp.ne.s32.totalorder %s151, %s152
      %p163 = scmp.eq.s32.totalorder %s27, 0
      %p164 = por %p162, %p163
      %p165 = scmp.ne.s32.totalorder %s151, %s152
      %p166 = scmp.eq.s32.totalorder %s28, 7
      %p167 = por %p165, %p166
      %p169 = scmp.ne.s32.totalorder %s152, %s168
      %p170 = scmp.eq.s32.totalorder %s28, 0
      %p171 = por %p169, %p170
      %s172 = ssub.s32 %s30, %s37
      %p173 = scmp.eq.s32.totalorder %s172, 0
      %s175 = sadd.s32 %s174, 1
      %s176 = scalar_select %p173, %s174, %s175
      %p179 = pneg %p173
      %p180 = scmp.eq.s32.totalorder %s22, 7
      %p181 = por %p179, %p180
      %p182 = scmp.ne.s32.totalorder %s174, %s177
      %p183 = scmp.eq.s32.totalorder %s22, 0
      %p184 = por %p182, %p183
      %p185 = scmp.ne.s32.totalorder %s174, %s177
      %p186 = scmp.eq.s32.totalorder %s27, 7
      %p187 = por %p185, %p186
      %p188 = scmp.ne.s32.totalorder %s177, %s178
      %p189 = scmp.eq.s32.totalorder %s27, 0
      %p190 = por %p188, %p189
      %p191 = scmp.ne.s32.totalorder %s177, %s178
      %p192 = scmp.eq.s32.totalorder %s28, 7
      %p193 = por %p191, %p192
      %p195 = scmp.ne.s32.totalorder %s178, %s194
      %p196 = scmp.eq.s32.totalorder %s28, 0
      %p197 = por %p195, %p196
      %s198 = ssub.s32 %s30, %s37
      %p199 = scmp.eq.s32.totalorder %s198, 0
      %s201 = sadd.s32 %s200, 1
      %s202 = scalar_select %p199, %s200, %s201
      %p205 = pneg %p199
      %p206 = scmp.eq.s32.totalorder %s22, 7
      %p207 = por %p205, %p206
      %p208 = scmp.ne.s32.totalorder %s200, %s203
      %p209 = scmp.eq.s32.totalorder %s22, 0
      %p210 = por %p208, %p209
      %p211 = scmp.ne.s32.totalorder %s200, %s203
      %p212 = scmp.eq.s32.totalorder %s27, 7
      %p213 = por %p211, %p212
      %p214 = scmp.ne.s32.totalorder %s203, %s204
      %p215 = scmp.eq.s32.totalorder %s27, 0
      %p216 = por %p214, %p215
      %p217 = scmp.ne.s32.totalorder %s203, %s204
      %p218 = scmp.eq.s32.totalorder %s28, 7
      %p219 = por %p217, %p218
      %p221 = scmp.ne.s32.totalorder %s204, %s220
      %p222 = scmp.eq.s32.totalorder %s28, 0
      %p223 = por %p221, %p222
      %s224 = ssub.s32 %s30, %s37
      %p225 = scmp.eq.s32.totalorder %s224, 0
      %s227 = sadd.s32 %s226, 1
      %s228 = scalar_select %p225, %s226, %s227
      %p231 = pneg %p225
      %p232 = scmp.eq.s32.totalorder %s22, 7
      %p233 = por %p231, %p232
      %p234 = scmp.ne.s32.totalorder %s226, %s229
      %p235 = scmp.eq.s32.totalorder %s22, 0
      %p236 = por %p234, %p235
      %p237 = scmp.ne.s32.totalorder %s226, %s229
      %p238 = scmp.eq.s32.totalorder %s27, 7
      %p239 = por %p237, %p238
      %p240 = scmp.ne.s32.totalorder %s229, %s230
      %p241 = scmp.eq.s32.totalorder %s27, 0
      %p242 = por %p240, %p241
      %p243 = scmp.ne.s32.totalorder %s229, %s230
      %p244 = scmp.eq.s32.totalorder %s28, 7
      %p245 = por %p243, %p244
      %p247 = scmp.ne.s32.totalorder %s230, %s246
      %p248 = scmp.eq.s32.totalorder %s28, 0
      %p249 = por %p247, %p248
      %s250 = ssub.s32 %s30, %s37
      %p251 = scmp.eq.s32.totalorder %s250, 0
      %s253 = sadd.s32 %s252, 1
      %s254 = scalar_select %p251, %s252, %s253
      %p257 = pneg %p251
      %p258 = scmp.eq.s32.totalorder %s22, 7
      %p259 = por %p257, %p258
      %p260 = scmp.ne.s32.totalorder %s252, %s255
      %p261 = scmp.eq.s32.totalorder %s22, 0
      %p262 = por %p260, %p261
      %p263 = scmp.ne.s32.totalorder %s252, %s255
      %p264 = scmp.eq.s32.totalorder %s27, 7
      %p265 = por %p263, %p264
      %p266 = scmp.ne.s32.totalorder %s255, %s256
      %p267 = scmp.eq.s32.totalorder %s27, 0
      %p268 = por %p266, %p267
      %p269 = scmp.ne.s32.totalorder %s255, %s256
      %p270 = scmp.eq.s32.totalorder %s28, 7
      %p271 = por %p269, %p270
      %p273 = scmp.ne.s32.totalorder %s256, %s272
      %p274 = scmp.eq.s32.totalorder %s28, 0
      %p275 = por %p273, %p274
      %s276 = ssub.s32 %s30, %s37
      %p277 = scmp.eq.s32.totalorder %s276, 0
      %s279 = sadd.s32 %s278, 1
      %s280 = scalar_select %p277, %s278, %s279
      %p283 = pneg %p277
      %p284 = scmp.eq.s32.totalorder %s22, 7
      %p285 = por %p283, %p284
      %p286 = scmp.ne.s32.totalorder %s278, %s281
      %p287 = scmp.eq.s32.totalorder %s22, 0
      %p288 = por %p286, %p287
      %p289 = scmp.ne.s32.totalorder %s278, %s281
      %p290 = scmp.eq.s32.totalorder %s27, 7
      %p291 = por %p289, %p290
      %p292 = scmp.ne.s32.totalorder %s281, %s282
      %p293 = scmp.eq.s32.totalorder %s27, 0
      %p294 = por %p292, %p293
      %p295 = scmp.ne.s32.totalorder %s281, %s282
      %p296 = scmp.eq.s32.totalorder %s28, 7
      %p297 = por %p295, %p296
      %p299 = scmp.ne.s32.totalorder %s282, %s298
      %p300 = scmp.eq.s32.totalorder %s28, 0
      %p301 = por %p299, %p300
      %s302 = ssub.s32 %s30, %s37
      %p303 = scmp.eq.s32.totalorder %s302, 0
      %s305 = sadd.s32 %s304, 1
      %s306 = scalar_select %p303, %s304, %s305
      %p309 = pneg %p303
      %p310 = scmp.eq.s32.totalorder %s22, 7
      %p311 = por %p309, %p310
      %p312 = scmp.ne.s32.totalorder %s304, %s307
      %p313 = scmp.eq.s32.totalorder %s22, 0
      %p314 = por %p312, %p313
      %p315 = scmp.ne.s32.totalorder %s304, %s307
      %p316 = scmp.eq.s32.totalorder %s27, 7
      %p317 = por %p315, %p316
      %p318 = scmp.ne.s32.totalorder %s307, %s308
      %p319 = scmp.eq.s32.totalorder %s27, 0
      %p320 = por %p318, %p319
      %p321 = scmp.ne.s32.totalorder %s307, %s308
      %p322 = scmp.eq.s32.totalorder %s28, 7
      %p323 = por %p321, %p322
      %p325 = scmp.ne.s32.totalorder %s308, %s324
      %p326 = scmp.eq.s32.totalorder %s28, 0
      %p327 = por %p325, %p326
      %s328 = ssub.s32 %s30, %s37
      %p329 = scmp.eq.s32.totalorder %s328, 0
      %s331 = sadd.s32 %s330, 1
      %s332 = scalar_select %p329, %s330, %s331
      %p335 = pneg %p329
      %p336 = scmp.eq.s32.totalorder %s22, 7
      %p337 = por %p335, %p336
      %p338 = scmp.ne.s32.totalorder %s330, %s333
      %p339 = scmp.eq.s32.totalorder %s22, 0
      %p340 = por %p338, %p339
      %p341 = scmp.ne.s32.totalorder %s330, %s333
      %p342 = scmp.eq.s32.totalorder %s27, 7
      %p343 = por %p341, %p342
      %p344 = scmp.ne.s32.totalorder %s333, %s334
      %p345 = scmp.eq.s32.totalorder %s27, 0
      %p346 = por %p344, %p345
      %p347 = scmp.ne.s32.totalorder %s333, %s334
      %p348 = scmp.eq.s32.totalorder %s28, 7
      %p349 = por %p347, %p348
      %p351 = scmp.ne.s32.totalorder %s334, %s350
      %p352 = scmp.eq.s32.totalorder %s28, 0
      %p353 = por %p351, %p352
      %s354 = ssub.s32 %s30, %s37
      %p355 = scmp.eq.s32.totalorder %s354, 0
      %s357 = sadd.s32 %s356, 1
      %s358 = scalar_select %p355, %s356, %s357
      %p361 = pneg %p355
      %p362 = scmp.eq.s32.totalorder %s22, 7
      %p363 = por %p361, %p362
      %p364 = scmp.ne.s32.totalorder %s356, %s359
      %p365 = scmp.eq.s32.totalorder %s22, 0
      %p366 = por %p364, %p365
      %p367 = scmp.ne.s32.totalorder %s356, %s359
      %p368 = scmp.eq.s32.totalorder %s27, 7
      %p369 = por %p367, %p368
      %p370 = scmp.ne.s32.totalorder %s359, %s360
      %p371 = scmp.eq.s32.totalorder %s27, 0
      %p372 = por %p370, %p371
      %p373 = scmp.ne.s32.totalorder %s359, %s360
      %p374 = scmp.eq.s32.totalorder %s28, 7
      %p375 = por %p373, %p374
      %p377 = scmp.ne.s32.totalorder %s360, %s376
      %p378 = scmp.eq.s32.totalorder %s28, 0
      %p379 = por %p377, %p378
      %s380 = ssub.s32 %s29, %s41
      %p381 = scmp.eq.s32.totalorder %s380, 0
      %s383 = sadd.s32 %s382, 1
      %s384 = scalar_select %p381, %s382, %s383
      %p387 = pneg %p381
      %p388 = scmp.eq.s32.totalorder %s22, 7
      %p389 = por %p387, %p388
      %p390 = scmp.ne.s32.totalorder %s382, %s385
      %p391 = scmp.eq.s32.totalorder %s22, 0
      %p392 = por %p390, %p391
      %p393 = scmp.ne.s32.totalorder %s382, %s385
      %p394 = scmp.eq.s32.totalorder %s27, 7
      %p395 = por %p393, %p394
      %p396 = scmp.ne.s32.totalorder %s385, %s386
      %p397 = scmp.eq.s32.totalorder %s27, 0
      %p398 = por %p396, %p397
      %p399 = scmp.ne.s32.totalorder %s385, %s386
      %p400 = scmp.eq.s32.totalorder %s28, 7
      %p401 = por %p399, %p400
      %p403 = scmp.ne.s32.totalorder %s386, %s402
      %p404 = scmp.eq.s32.totalorder %s28, 0
      %p405 = por %p403, %p404
      %p406 = scmp.le.s32.totalorder 1, %s22
      %p407 = scmp.lt.s32.totalorder %s22, 9
      %p408 = pnand %p406, %p407
      %p409 = pneg %p408
      // Predicated region
      $region9: #{custom_transformer.2} parent=5 // pred_check
        _
      $region10: #{custom_transformer.2} parent=5 // pred_check_branch
        %411 = sbr.rel (%p408) target = $region12
      $region11: #{custom_transformer.2} parent=5 // pred_region
        %s412 = ssub.s32 %s22, 1
      $region12: #{custom_transformer.2} parent=5 // pred_fallthru
        _
      %p413 = scmp.lt.s32.totalorder %s22, 8
      // Predicated region
      $region13: #{custom_transformer.2} parent=5 // pred_check
        %p414 = pneg %p413
      $region14: #{custom_transformer.2} parent=5 // pred_check_branch
        %416 = sbr.rel (%p414) target = $region16
      $region15: #{custom_transformer.2} parent=5 // pred_region
        // Predicated region
        $region17: #{custom_transformer.2} parent=15 // pred_check
          %p417 = pneg %p54
        $region18: #{custom_transformer.2} parent=15 // pred_check_branch
          %419 = sbr.rel (%p417) target = $region20
        $region19: #{custom_transformer.2} parent=15 // pred_region
          %p420 = scmp.lt.s32.totalorder %s29, 1
          %s421 = scalar_select %p420, %s29, 1
          %s422 = smul.addr %s421, 2
          %s423 = smul.addr %s422, 8
          %s424 = scalar_lea.vmem %s0, %s423
        $region20: #{custom_transformer.2} parent=15 // pred_fallthru
          _
        // Predicated region
        $region21: #{custom_transformer.2} parent=15 // pred_check
          %p425 = pneg %p80
        $region22: #{custom_transformer.2} parent=15 // pred_check_branch
          %427 = sbr.rel (%p425) target = $region24
        $region23: #{custom_transformer.2} parent=15 // pred_region
          %s428 = sand.u32 %s70, 1
          %s429 = scalar_lea.sflag [#allocation4], %s428
          %s430 = sand.u32 %s70, 1
          %s431 = smul.addr %s430, 192
          %s432 = scalar_lea.vmem [#allocation3], %s431
          %434 = vsyncadd %s429, 0
          %s435 = smul.addr %s30, 48
          %s436 = smul.addr %s435, 4
          %s437 = scalar_lea.hbm %s1, %s436
          %s438 = sshll.u32 %s437, 4
          %s439 = int_to_ptr.hbm [resolvable:$true] %s438
          %s440 = sshll.u32 %s432, 4
          %s441 = int_to_ptr.vmem [resolvable:$true] %s440
          %446 = dma.hbm_to_vmem [thread:$0]  %s439, 3072, %s441, %s429, 192, 192, 12
        $region24: #{custom_transformer.2} parent=15 // pred_fallthru
          _
        // Predicated region
        $region25: #{custom_transformer.2} parent=15 // pred_check
          %p447 = pneg %p106
        $region26: #{custom_transformer.2} parent=15 // pred_check_branch
          %449 = sbr.rel (%p447) target = $region28
        $region27: #{custom_transformer.2} parent=15 // pred_region
          %p450 = scmp.lt.s32.totalorder %s30, 3
          %s451 = scalar_select %p450, %s30, 3
          %s452 = smul.addr %s451, 3
          %s453 = scalar_lea.vmem %s2, %s452
        $region28: #{custom_transformer.2} parent=15 // pred_fallthru
          _
        // Predicated region
        $region29: #{custom_transformer.2} parent=15 // pred_check
          %p454 = pneg %p132
        $region30: #{custom_transformer.2} parent=15 // pred_check_branch
          %456 = sbr.rel (%p454) target = $region32
        $region31: #{custom_transformer.2} parent=15 // pred_region
          %p457 = scmp.lt.s32.totalorder %s30, 3
          %s458 = scalar_select %p457, %s30, 3
          %s459 = smul.addr %s458, 16
          %s460 = smul.addr %s459, 4
          %s461 = scalar_lea.vmem %s3, %s460
        $region32: #{custom_transformer.2} parent=15 // pred_fallthru
          _
        // Predicated region
        $region33: #{custom_transformer.2} parent=15 // pred_check
          %p462 = pneg %p158
        $region34: #{custom_transformer.2} parent=15 // pred_check_branch
          %464 = sbr.rel (%p462) target = $region36
        $region35: #{custom_transformer.2} parent=15 // pred_region
          %p465 = scmp.lt.s32.totalorder %s30, 3
          %s466 = scalar_select %p465, %s30, 3
          %s467 = scalar_lea.vmem %s4, %s466
        $region36: #{custom_transformer.2} parent=15 // pred_fallthru
          _
        // Predicated region
        $region37: #{custom_transformer.2} parent=15 // pred_check
          %p468 = pneg %p184
        $region38: #{custom_transformer.2} parent=15 // pred_check_branch
          %470 = sbr.rel (%p468) target = $region40
        $region39: #{custom_transformer.2} parent=15 // pred_region
          %p471 = scmp.lt.s32.totalorder %s30, 3
          %s472 = scalar_select %p471, %s30, 3
          %s473 = scalar_lea.vmem %s5, %s472
        $region40: #{custom_transformer.2} parent=15 // pred_fallthru
          _
        // Predicated region
        $region41: #{custom_transformer.2} parent=15 // pred_check
          %p474 = pneg %p210
        $region42: #{custom_transformer.2} parent=15 // pred_check_branch
          %476 = sbr.rel (%p474) target = $region44
        $region43: #{custom_transformer.2} parent=15 // pred_region
          %p477 = scmp.lt.s32.totalorder %s30, 3
          %s478 = scalar_select %p477, %s30, 3
          %s479 = scalar_lea.vmem %s6, %s478
        $region44: #{custom_transformer.2} parent=15 // pred_fallthru
          _
        // Predicated region
        $region45: #{custom_transformer.2} parent=15 // pred_check
          %p480 = pneg %p236
        $region46: #{custom_transformer.2} parent=15 // pred_check_branch
          %482 = sbr.rel (%p480) target = $region48
        $region47: #{custom_transformer.2} parent=15 // pred_region
          %p483 = scmp.lt.s32.totalorder %s30, 3
          %s484 = scalar_select %p483, %s30, 3
          %s485 = smul.addr %s484, 16
          %s486 = smul.addr %s485, 4
          %s487 = scalar_lea.vmem %s7, %s486
        $region48: #{custom_transformer.2} parent=15 // pred_fallthru
          _
        // Predicated region
        $region49: #{custom_transformer.2} parent=15 // pred_check
          %p488 = pneg %p262
        $region50: #{custom_transformer.2} parent=15 // pred_check_branch
          %490 = sbr.rel (%p488) target = $region52
        $region51: #{custom_transformer.2} parent=15 // pred_region
          %p491 = scmp.lt.s32.totalorder %s30, 3
          %s492 = scalar_select %p491, %s30, 3
          %s493 = scalar_lea.vmem %s8, %s492
        $region52: #{custom_transformer.2} parent=15 // pred_fallthru
          _
        // Predicated region
        $region53: #{custom_transformer.2} parent=15 // pred_check
          %p494 = pneg %p288
        $region54: #{custom_transformer.2} parent=15 // pred_check_branch
          %496 = sbr.rel (%p494) target = $region56
        $region55: #{custom_transformer.2} parent=15 // pred_region
          %p497 = scmp.lt.s32.totalorder %s30, 3
          %s498 = scalar_select %p497, %s30, 3
          %s499 = smul.addr %s498, 8
          %s500 = smul.addr %s499, 4
          %s501 = scalar_lea.vmem %s9, %s500
        $region56: #{custom_transformer.2} parent=15 // pred_fallthru
          _
        // Predicated region
        $region57: #{custom_transformer.2} parent=15 // pred_check
          %p502 = pneg %p314
        $region58: #{custom_transformer.2} parent=15 // pred_check_branch
          %504 = sbr.rel (%p502) target = $region60
        $region59: #{custom_transformer.2} parent=15 // pred_region
          %p505 = scmp.lt.s32.totalorder %s30, 3
          %s506 = scalar_select %p505, %s30, 3
          %s507 = scalar_lea.vmem %s10, %s506
        $region60: #{custom_transformer.2} parent=15 // pred_fallthru
          _
        // Predicated region
        $region61: #{custom_transformer.2} parent=15 // pred_check
          %p508 = pneg %p340
        $region62: #{custom_transformer.2} parent=15 // pred_check_branch
          %510 = sbr.rel (%p508) target = $region64
        $region63: #{custom_transformer.2} parent=15 // pred_region
          %p511 = scmp.lt.s32.totalorder %s30, 3
          %s512 = scalar_select %p511, %s30, 3
          %s513 = scalar_lea.vmem %s11, %s512
        $region64: #{custom_transformer.2} parent=15 // pred_fallthru
          _
        // Predicated region
        $region65: #{custom_transformer.2} parent=15 // pred_check
          %p514 = pneg %p366
        $region66: #{custom_transformer.2} parent=15 // pred_check_branch
          %516 = sbr.rel (%p514) target = $region68
        $region67: #{custom_transformer.2} parent=15 // pred_region
          %p517 = scmp.lt.s32.totalorder %s30, 3
          %s518 = scalar_select %p517, %s30, 3
          %s519 = scalar_lea.vmem %s12, %s518
        $region68: #{custom_transformer.2} parent=15 // pred_fallthru
          _
      $region16: #{custom_transformer.2} parent=5 // pred_fallthru
        _
      %p520 = scmp.le.s32.totalorder 1, %s22
      %p521 = scmp.lt.s32.totalorder %s22, 9
      %p522 = pnand %p520, %p521
      %p523 = pneg %p522
      // Predicated region
      $region69: #{custom_transformer.2} parent=5 // pred_check
        _
      $region70: #{custom_transformer.2} parent=5 // pred_check_branch
        %525 = sbr.rel (%p522) target = $region72
      $region71: #{custom_transformer.2} parent=5 // pred_region
        %s526 = ssub.s32 %s22, 1
        %s527 = sand.u32 %s73, 1
        %s528 = scalar_lea.sflag [#allocation4], %s527
        %s529 = sand.u32 %s73, 1
        %s530 = smul.addr %s529, 192
        %s531 = scalar_lea.vmem [#allocation3], %s530
        // Predicated region
        $region73: #{custom_transformer.2} parent=71 // pred_check
          %p532 = pneg %p86
        $region74: #{custom_transformer.2} parent=71 // pred_check_branch
          %534 = sbr.rel (%p532) target = $region76
        $region75: #{custom_transformer.2} parent=71 // pred_region
          %536 = dma.done %s528, 3072
        $region76: #{custom_transformer.2} parent=71 // pred_fallthru
          _
        %p537 = scmp.lt.s32.totalorder %s31, 1
        %s538 = scalar_select %p537, %s31, 1
        %s539 = smul.addr %s538, 2
        %s540 = smul.addr %s539, 8
        %s541 = scalar_lea.vmem %s0, %s540
        %p542 = pneg %p60
        %p543 = pneg %p57
        %s544 = sand.u32 %s73, 1
        %s545 = scalar_lea.sflag [#allocation4], %s544
        %s546 = sand.u32 %s73, 1
        %s547 = smul.addr %s546, 192
        %s548 = scalar_lea.vmem [#allocation3], %s547
        %p549 = pneg %p86
        %p550 = pneg %p83
        %p551 = scmp.lt.s32.totalorder %s32, 3
        %s552 = scalar_select %p551, %s32, 3
        %s553 = smul.addr %s552, 3
        %s554 = scalar_lea.vmem %s2, %s553
        %p555 = pneg %p112
        %p556 = pneg %p109
        %p557 = scmp.lt.s32.totalorder %s32, 3
        %s558 = scalar_select %p557, %s32, 3
        %s559 = smul.addr %s558, 16
        %s560 = smul.addr %s559, 4
        %s561 = scalar_lea.vmem %s3, %s560
        %p562 = pneg %p138
        %p563 = pneg %p135
        %p564 = scmp.lt.s32.totalorder %s32, 3
        %s565 = scalar_select %p564, %s32, 3
        %s566 = scalar_lea.vmem %s4, %s565
        %p567 = pneg %p164
        %p568 = pneg %p161
        %p569 = scmp.lt.s32.totalorder %s32, 3
        %s570 = scalar_select %p569, %s32, 3
        %s571 = scalar_lea.vmem %s5, %s570
        %p572 = pneg %p190
        %p573 = pneg %p187
        %p574 = scmp.lt.s32.totalorder %s32, 3
        %s575 = scalar_select %p574, %s32, 3
        %s576 = scalar_lea.vmem %s6, %s575
        %p577 = pneg %p216
        %p578 = pneg %p213
        %p579 = scmp.lt.s32.totalorder %s32, 3
        %s580 = scalar_select %p579, %s32, 3
        %s581 = smul.addr %s580, 16
        %s582 = smul.addr %s581, 4
        %s583 = scalar_lea.vmem %s7, %s582
        %p584 = pneg %p242
        %p585 = pneg %p239
        %p586 = scmp.lt.s32.totalorder %s32, 3
        %s587 = scalar_select %p586, %s32, 3
        %s588 = scalar_lea.vmem %s8, %s587
        %p589 = pneg %p268
        %p590 = pneg %p265
        %p591 = scmp.lt.s32.totalorder %s32, 3
        %s592 = scalar_select %p591, %s32, 3
        %s593 = smul.addr %s592, 8
        %s594 = smul.addr %s593, 4
        %s595 = scalar_lea.vmem %s9, %s594
        %p596 = pneg %p294
        %p597 = pneg %p291
        %p598 = scmp.lt.s32.totalorder %s32, 3
        %s599 = scalar_select %p598, %s32, 3
        %s600 = scalar_lea.vmem %s10, %s599
        %p601 = pneg %p320
        %p602 = pneg %p317
        %p603 = scmp.lt.s32.totalorder %s32, 3
        %s604 = scalar_select %p603, %s32, 3
        %s605 = scalar_lea.vmem %s11, %s604
        %p606 = pneg %p346
        %p607 = pneg %p343
        %p608 = scmp.lt.s32.totalorder %s32, 3
        %s609 = scalar_select %p608, %s32, 3
        %s610 = scalar_lea.vmem %s12, %s609
        %p611 = pneg %p372
        %p612 = pneg %p369
        %p613 = pneg %p398
        %p614 = pneg %p395
        %p615 = scmp.lt.s32.totalorder %s31, 1
        %s616 = scalar_select %p615, %s31, 1
        %s617 = smul.addr %s616, 2
        %s618 = smul.addr %s617, 8
        %s619 = scalar_lea.vmem %s13, %s618
        %p620 = scmp.lt.s32.totalorder %s31, 1
        %s621 = scalar_select %p620, %s31, 1
        %s622 = smul.addr %s621, 2
        %s623 = smul.addr %s622, 8
        %s624 = scalar_lea.vmem %s0, %s623
        %p625 = scmp.lt.s32.totalorder %s32, 3
        %s626 = scalar_select %p625, %s32, 3
        %s627 = smul.addr %s626, 3
        %s628 = scalar_lea.vmem %s2, %s627
        %p629 = scmp.lt.s32.totalorder %s32, 3
        %s630 = scalar_select %p629, %s32, 3
        %s631 = smul.addr %s630, 16
        %s632 = smul.addr %s631, 4
        %s633 = scalar_lea.vmem %s3, %s632
        %p634 = scmp.lt.s32.totalorder %s32, 3
        %s635 = scalar_select %p634, %s32, 3
        %s636 = scalar_lea.vmem %s4, %s635
        %p637 = scmp.lt.s32.totalorder %s32, 3
        %s638 = scalar_select %p637, %s32, 3
        %s639 = scalar_lea.vmem %s5, %s638
        %p640 = scmp.lt.s32.totalorder %s32, 3
        %s641 = scalar_select %p640, %s32, 3
        %s642 = scalar_lea.vmem %s6, %s641
        %p643 = scmp.lt.s32.totalorder %s32, 3
        %s644 = scalar_select %p643, %s32, 3
        %s645 = smul.addr %s644, 16
        %s646 = smul.addr %s645, 4
        %s647 = scalar_lea.vmem %s7, %s646
        %p648 = scmp.lt.s32.totalorder %s32, 3
        %s649 = scalar_select %p648, %s32, 3
        %s650 = scalar_lea.vmem %s8, %s649
        %p651 = scmp.lt.s32.totalorder %s32, 3
        %s652 = scalar_select %p651, %s32, 3
        %s653 = smul.addr %s652, 8
        %s654 = smul.addr %s653, 4
        %s655 = scalar_lea.vmem %s9, %s654
        %p656 = scmp.lt.s32.totalorder %s32, 3
        %s657 = scalar_select %p656, %s32, 3
        %s658 = scalar_lea.vmem %s10, %s657
        %p659 = scmp.lt.s32.totalorder %s32, 3
        %s660 = scalar_select %p659, %s32, 3
        %s661 = scalar_lea.vmem %s11, %s660
        %p662 = scmp.lt.s32.totalorder %s32, 3
        %s663 = scalar_select %p662, %s32, 3
        %s664 = scalar_lea.vmem %s12, %s663
        %p665 = scmp.lt.s32.totalorder %s31, 1
        %s666 = scalar_select %p665, %s31, 1
        %s667 = smul.addr %s666, 2
        %s668 = smul.addr %s667, 8
        %s669 = scalar_lea.vmem %s13, %s668
        %p671 = scmp.eq.s32.totalorder %s32, 0
        // Predicated region
        $region77: #{custom_transformer.2} parent=71 // pred_check
          %p672 = pneg %p671
        $region78: #{custom_transformer.2} parent=71 // pred_check_branch
          %674 = sbr.rel (%p672) target = $region80
        $region79: #{custom_transformer.2} parent=71 // pred_region
          %v675 = vld [vmem:[%s624] sm:$0xff]
          %v676 = vld [vmem:[%s624 + $0x8] sm:$0xff]
          %677 = vst [vmem:[%s669] sm:$0xff] %v675
          %678 = vst [vmem:[%s669 + $0x8] sm:$0xff] %v676
        $region80: #{custom_transformer.2} parent=71 // pred_fallthru
          _
        %v679 = vld [vmem:[%s669] sm:$0xff]
        %v680 = vld [vmem:[%s669 + $0x8] sm:$0xff]
        %v681 = vld [vmem:[%s531] sm:$0xff]
        %v682 = vld [vmem:[%s531 + $0x8] sm:$0xf]
        %v683 = vld [vmem:[%s531 + $0xc] sm:$0xff]
        %v684 = vld [vmem:[%s531 + $0x14] sm:$0xf]
        %v685 = vld [vmem:[%s531 + $0x18] sm:$0xff]
        %v686 = vld [vmem:[%s531 + $0x20] sm:$0xf]
        %v687 = vld [vmem:[%s531 + $0x24] sm:$0xff]
        %v688 = vld [vmem:[%s531 + $0x2c] sm:$0xf]
        %v689 = vld [vmem:[%s531 + $0x30] sm:$0xff]
        %v690 = vld [vmem:[%s531 + $0x38] sm:$0xf]
        %v691 = vld [vmem:[%s531 + $0x3c] sm:$0xff]
        %v692 = vld [vmem:[%s531 + $0x44] sm:$0xf]
        %v693 = vld [vmem:[%s531 + $0x48] sm:$0xff]
        %v694 = vld [vmem:[%s531 + $0x50] sm:$0xf]
        %v695 = vld [vmem:[%s531 + $0x54] sm:$0xff]
        %v696 = vld [vmem:[%s531 + $0x5c] sm:$0xf]
        %v697 = vld [vmem:[%s531 + $0x60] sm:$0xff]
        %v698 = vld [vmem:[%s531 + $0x68] sm:$0xf]
        %v699 = vld [vmem:[%s531 + $0x6c] sm:$0xff]
        %v700 = vld [vmem:[%s531 + $0x74] sm:$0xf]
        %v701 = vld [vmem:[%s531 + $0x78] sm:$0xff]
        %v702 = vld [vmem:[%s531 + $0x80] sm:$0xf]
        %v703 = vld [vmem:[%s531 + $0x84] sm:$0xff]
        %v704 = vld [vmem:[%s531 + $0x8c] sm:$0xf]
        %v705 = vld [vmem:[%s531 + $0x90] sm:$0xff]
        %v706 = vld [vmem:[%s531 + $0x98] sm:$0xf]
        %v707 = vld [vmem:[%s531 + $0x9c] sm:$0xff]
        %v708 = vld [vmem:[%s531 + $0xa4] sm:$0xf]
        %v709 = vld [vmem:[%s531 + $0xa8] sm:$0xff]
        %v710 = vld [vmem:[%s531 + $0xb0] sm:$0xf]
        %v711 = vld [vmem:[%s531 + $0xb4] sm:$0xff]
        %v712 = vld [vmem:[%s531 + $0xbc] sm:$0xf]
        %v713 = vpack.c.bf16 %v680, %v679
        %v714 = vld [vmem:[%s628] sm:$0x7]
        %v715 = vunpack.c.l.bf16 %v714
        %v717 = vperm.slane %v715, 0
        %v718 = vperm.slane %v715, 2
        %v719 = vperm.slane %v715, 4
        %v723 = vperm.slane %v717, 0
        %v724 = vperm.slane %v718, 0
        %v725 = vperm.slane %v719, 0
        %v758 = vunpack.c.l.b16 %v681
        %v759 = vunpack.c.h.b16 %v681
        %v760 = vunpack.c.l.b16 %v682
        %v761 = vunpack.c.l.b16 %v683
        %v762 = vunpack.c.h.b16 %v683
        %v763 = vunpack.c.l.b16 %v684
        %v764 = vunpack.c.l.b16 %v685
        %v765 = vunpack.c.h.b16 %v685
        %v766 = vunpack.c.l.b16 %v686
        %v767 = vunpack.c.l.b16 %v687
        %v768 = vunpack.c.h.b16 %v687
        %v769 = vunpack.c.l.b16 %v688
        %v770 = vunpack.c.l.b16 %v689
        %v771 = vunpack.c.h.b16 %v689
        %v772 = vunpack.c.l.b16 %v690
        %v773 = vunpack.c.l.b16 %v691
        %v774 = vunpack.c.h.b16 %v691
        %v775 = vunpack.c.l.b16 %v692
        %v776 = vunpack.c.l.b16 %v693
        %v777 = vunpack.c.h.b16 %v693
        %v778 = vunpack.c.l.b16 %v694
        %v779 = vunpack.c.l.b16 %v695
        %v780 = vunpack.c.h.b16 %v695
        %v781 = vunpack.c.l.b16 %v696
        %v782 = vunpack.c.l.b16 %v697
        %v783 = vunpack.c.h.b16 %v697
        %v784 = vunpack.c.l.b16 %v698
        %v785 = vunpack.c.l.b16 %v699
        %v786 = vunpack.c.h.b16 %v699
        %v787 = vunpack.c.l.b16 %v700
        %v788 = vunpack.c.l.b16 %v701
        %v789 = vunpack.c.h.b16 %v701
        %v790 = vunpack.c.l.b16 %v702
        %v791 = vunpack.c.l.b16 %v703
        %v792 = vunpack.c.h.b16 %v703
        %v793 = vunpack.c.l.b16 %v704
        %v794 = vunpack.c.l.b16 %v705
        %v795 = vunpack.c.h.b16 %v705
        %v796 = vunpack.c.l.b16 %v706
        %v797 = vunpack.c.l.b16 %v707
        %v798 = vunpack.c.h.b16 %v707
        %v799 = vunpack.c.l.b16 %v708
        %v800 = vunpack.c.l.b16 %v709
        %v801 = vunpack.c.h.b16 %v709
        %v802 = vunpack.c.l.b16 %v710
        %v803 = vunpack.c.l.b16 %v711
        %v804 = vunpack.c.h.b16 %v711
        %v805 = vunpack.c.l.b16 %v712
        %v806 = vpack.c.b16 %v761, %v758
        %v807 = vpack.c.b16 %v762, %v759
        %v808 = vpack.c.b16 %v763, %v760
        %v809 = vpack.c.b16 %v767, %v764
        %v810 = vpack.c.b16 %v768, %v765
        %v811 = vpack.c.b16 %v769, %v766
        %v812 = vpack.c.b16 %v773, %v770
        %v813 = vpack.c.b16 %v774, %v771
        %v814 = vpack.c.b16 %v775, %v772
        %v815 = vpack.c.b16 %v779, %v776
        %v816 = vpack.c.b16 %v780, %v777
        %v817 = vpack.c.b16 %v781, %v778
        %v818 = vpack.c.b16 %v785, %v782
        %v819 = vpack.c.b16 %v786, %v783
        %v820 = vpack.c.b16 %v787, %v784
        %v821 = vpack.c.b16 %v791, %v788
        %v822 = vpack.c.b16 %v792, %v789
        %v823 = vpack.c.b16 %v793, %v790
        %v824 = vpack.c.b16 %v797, %v794
        %v825 = vpack.c.b16 %v798, %v795
        %v826 = vpack.c.b16 %v799, %v796
        %v827 = vpack.c.b16 %v803, %v800
        %v828 = vpack.c.b16 %v804, %v801
        %v829 = vpack.c.b16 %v805, %v802
        %854 = vmatpush.bf16.msra.mxu0 %v827
        %855 = vmatpush.bf16.msra.mxu0 %v824
        %856 = vmatpush.bf16.msra.mxu0 %v821
        %857 = vmatpush.bf16.msra.mxu0 %v818
        %858 = vmatpush.bf16.msra.mxu0 %v815
        %859 = vmatpush.bf16.msra.mxu0 %v812
        %860 = vmatpush.bf16.msra.mxu0 %v809
        %861 = vmatpush.bf16.msra.mxu0 %v806
        %862 = vmatmul.bf16.gmra.mxu0 %v713
        %v863 = vpop.f32.mrf.mxu0
        %v864 = vadd.f32 %v723, %v863
        %v865 = vpop.f32.mrf.mxu0
        %v866 = vadd.f32 %v723, %v865
        %867 = vdwg.mxu0
        %868 = vmatpush.bf16.msra.mxu0 %v828
        %869 = vmatpush.bf16.msra.mxu0 %v825
        %870 = vmatpush.bf16.msra.mxu0 %v822
        %871 = vmatpush.bf16.msra.mxu0 %v819
        %872 = vmatpush.bf16.msra.mxu0 %v816
        %873 = vmatpush.bf16.msra.mxu0 %v813
        %874 = vmatpush.bf16.msra.mxu0 %v810
        %875 = vmatpush.bf16.msra.mxu0 %v807
        %876 = vmatmul.bf16.gmra.mxu0 %v713
        %v877 = vpop.f32.mrf.mxu0
        %v878 = vadd.f32 %v724, %v877
        %v879 = vpop.f32.mrf.mxu0
        %v880 = vadd.f32 %v724, %v879
        %881 = vdwg.mxu0
        %882 = vmatpush.bf16.msra.mxu0 %v829
        %883 = vmatpush.bf16.msra.mxu0 %v826
        %884 = vmatpush.bf16.msra.mxu0 %v823
        %885 = vmatpush.bf16.msra.mxu0 %v820
        %886 = vmatpush.bf16.msra.mxu0 %v817
        %887 = vmatpush.bf16.msra.mxu0 %v814
        %888 = vmatpush.bf16.msra.mxu0 %v811
        %889 = vmatpush.bf16.msra.mxu0 %v808
        %890 = vmatmul.bf16.gmra.mxu0 %v713
        %v891 = vpop.f32.mrf.mxu0
        %v892 = vadd.f32 %v725, %v891
        %v893 = vpop.f32.mrf.mxu0
        %v894 = vadd.f32 %v725, %v893
        %895 = vdwg.mxu0
        %v896 = vpack.c.bf16 %v878, %v864
        %v897 = vpack.c.bf16 %v892, %v892
        %v898 = vpack.c.bf16 %v880, %v866
        %v899 = vpack.c.bf16 %v894, %v894
        %v902 = vunpack.c.l.b16 %v896
        %v903 = vunpack.c.l.b16 %v898
        %v904 = vpack.c.b16 %v903, %v902
        %v905 = vunpack.c.h.b16 %v896
        %v906 = vunpack.c.h.b16 %v898
        %v907 = vpack.c.b16 %v906, %v905
        %vm908 = vcmask 130048
        %v910 = vsel %vm908, %v904, 0
        %v913 = vsel %vm908, %v907, 0
        %915 = vmatpush.bf16.xpose.msra.mxu0 0
        %916 = vmatpush.bf16.xpose.msra.mxu0 0
        %917 = vmatpush.bf16.xpose.msra.mxu0 0
        %918 = vmatpush.bf16.xpose.msra.mxu0 0
        %919 = vmatpush.bf16.xpose.msra.mxu0 0
        %920 = vmatpush.bf16.xpose.msra.mxu0 0
        %921 = vmatpush.bf16.xpose.msra.mxu0 0
        %922 = vmatpush.bf16.xpose.msra.mxu0 %v913
        %923 = vmatmul.bf16.gmra.mxu0 %v910
        %v924 = vpop.f32.mrf.mxu0
        %v925 = vadd.f32 0.0, %v924
        %v926 = vpop.f32.mrf.mxu0
        %v927 = vadd.f32 0.0, %v926
        %928 = vdwg.mxu0
        %v929 = vsel %vm908, %v925, -inf
        %930 = vmax.xlane.f32.xlu0 %v929
        %v931 = vpop.xlane.xlu0 %930
        %v932 = vsel %vm908, %v927, -inf
        %933 = vmax.xlane.f32.xlu0 %v932
        %v934 = vpop.xlane.xlu0 %933
        %v935 = vsub.f32 %v925, %v931
        %v936 = vsub.f32 %v927, %v934
        %v937 = vmul.f32 %v935, 1.442695
        %v938 = vpow.pop %v937
        %v939 = vmul.f32 %v936, 1.442695
        %v940 = vpow.pop %v939
        %v941 = vsel %vm908, %v938, 0.0
        %942 = vadd.xlane.f32.xlu0 %v941
        %v943 = vpop.xlane.xlu0 %942
        %v944 = vsel %vm908, %v940, 0.0
        %945 = vadd.xlane.f32.xlu0 %v944
        %v946 = vpop.xlane.xlu0 %945
        %v947 = vrcp.pop %v943
        %v948 = vrcp.pop %v946
        %v949 = vmul.f32 %v938, %v947
        %v950 = vmul.f32 %v940, %v948
        %v951 = vpack.c.bf16 %v950, %v949
        %v954 = vunpack.c.l.b16 %v897
        %v955 = vunpack.c.l.b16 %v899
        %v956 = vpack.c.b16 %v955, %v954
        %v959 = vsel %vm908, %v951, 0
        %961 = vmatpush.bf16.msra.mxu0 0
        %962 = vmatpush.bf16.msra.mxu0 0
        %963 = vmatpush.bf16.msra.mxu0 0
        %964 = vmatpush.bf16.msra.mxu0 0
        %965 = vmatpush.bf16.msra.mxu0 0
        %966 = vmatpush.bf16.msra.mxu0 0
        %967 = vmatpush.bf16.msra.mxu0 0
        %968 = vmatpush.bf16.msra.mxu0 %v956
        %969 = vmatmul.bf16.gmra.mxu0 %v959
        %v970 = vpop.f32.mrf.mxu0
        %v971 = vadd.f32 0.0, %v970
        %v972 = vpop.f32.mrf.mxu0
        %v973 = vadd.f32 0.0, %v972
        %974 = vdwg.mxu0
        %975 = vst.msk [vmem:[#allocation2] sm:$0xff] %vm908, %v971
        %976 = vst.msk [vmem:[#allocation2 + $0x8] sm:$0xff] %vm908, %v973
        %977 = vrot.lane.b32.xlu0 %v904, 112
        %v978 = vpop.permute.xlu0 %977
        %979 = vrot.lane.b32.xlu0 %v907, 112
        %v980 = vpop.permute.xlu0 %979
        %v982 = vsel %vm908, %v978, 0
        %v985 = vsel %vm908, %v980, 0
        %987 = vmatpush.bf16.xpose.msra.mxu0 0
        %988 = vmatpush.bf16.xpose.msra.mxu0 0
        %989 = vmatpush.bf16.xpose.msra.mxu0 0
        %990 = vmatpush.bf16.xpose.msra.mxu0 0
        %991 = vmatpush.bf16.xpose.msra.mxu0 0
        %992 = vmatpush.bf16.xpose.msra.mxu0 0
        %993 = vmatpush.bf16.xpose.msra.mxu0 0
        %994 = vmatpush.bf16.xpose.msra.mxu0 %v985
        %995 = vmatmul.bf16.gmra.mxu0 %v982
        %v996 = vpop.f32.mrf.mxu0
        %v997 = vadd.f32 0.0, %v996
        %v998 = vpop.f32.mrf.mxu0
        %v999 = vadd.f32 0.0, %v998
        %1000 = vdwg.mxu0
        %v1001 = vsel %vm908, %v997, -inf
        %1002 = vmax.xlane.f32.xlu0 %v1001
        %v1003 = vpop.xlane.xlu0 %1002
        %v1004 = vsel %vm908, %v999, -inf
        %1005 = vmax.xlane.f32.xlu0 %v1004
        %v1006 = vpop.xlane.xlu0 %1005
        %v1007 = vsub.f32 %v997, %v1003
        %v1008 = vsub.f32 %v999, %v1006
        %v1009 = vmul.f32 %v1007, 1.442695
        %v1010 = vpow.pop %v1009
        %v1011 = vmul.f32 %v1008, 1.442695
        %v1012 = vpow.pop %v1011
        %v1013 = vsel %vm908, %v1010, 0.0
        %1014 = vadd.xlane.f32.xlu0 %v1013
        %v1015 = vpop.xlane.xlu0 %1014
        %v1016 = vsel %vm908, %v1012, 0.0
        %1017 = vadd.xlane.f32.xlu0 %v1016
        %v1018 = vpop.xlane.xlu0 %1017
        %v1019 = vrcp.pop %v1015
        %v1020 = vrcp.pop %v1018
        %v1021 = vmul.f32 %v1010, %v1019
        %v1022 = vmul.f32 %v1012, %v1020
        %v1023 = vpack.c.bf16 %v1022, %v1021
        %1024 = vrot.lane.b32.xlu0 %v956, 112
        %v1025 = vpop.permute.xlu0 %1024
        %v1028 = vsel %vm908, %v1023, 0
        %1030 = vmatpush.bf16.msra.mxu0 0
        %1031 = vmatpush.bf16.msra.mxu0 0
        %1032 = vmatpush.bf16.msra.mxu0 0
        %1033 = vmatpush.bf16.msra.mxu0 0
        %1034 = vmatpush.bf16.msra.mxu0 0
        %1035 = vmatpush.bf16.msra.mxu0 0
        %1036 = vmatpush.bf16.msra.mxu0 0
        %1037 = vmatpush.bf16.msra.mxu0 %v1025
        %1038 = vmatmul.bf16.gmra.mxu0 %v1028
        %v1039 = vpop.f32.mrf.mxu0
        %v1040 = vadd.f32 0.0, %v1039
        %v1041 = vpop.f32.mrf.mxu0
        %v1042 = vadd.f32 0.0, %v1041
        %1043 = vdwg.mxu0
        %1046 = vrot.lane.b32.xlu0 %v1040, 16
        %v1047 = vpop.permute.xlu0 %1046
        %1048 = vrot.lane.b32.xlu0 %v1042, 16
        %v1049 = vpop.permute.xlu0 %1048
        %vm1052 = vcmask 261248
        %1053 = vst.msk [vmem:[#allocation2] sm:$0xff] %vm1052, %v1047
        %1054 = vst.msk [vmem:[#allocation2 + $0x8] sm:$0xff] %vm1052, %v1049
        %1055 = vrot.lane.b32.xlu0 %v904, 96
        %v1056 = vpop.permute.xlu0 %1055
        %1057 = vrot.lane.b32.xlu0 %v907, 96
        %v1058 = vpop.permute.xlu0 %1057
        %v1060 = vsel %vm908, %v1056, 0
        %v1063 = vsel %vm908, %v1058, 0
        %1065 = vmatpush.bf16.xpose.msra.mxu0 0
        %1066 = vmatpush.bf16.xpose.msra.mxu0 0
        %1067 = vmatpush.bf16.xpose.msra.mxu0 0
        %1068 = vmatpush.bf16.xpose.msra.mxu0 0
        %1069 = vmatpush.bf16.xpose.msra.mxu0 0
        %1070 = vmatpush.bf16.xpose.msra.mxu0 0
        %1071 = vmatpush.bf16.xpose.msra.mxu0 0
        %1072 = vmatpush.bf16.xpose.msra.mxu0 %v1063
        %1073 = vmatmul.bf16.gmra.mxu0 %v1060
        %v1074 = vpop.f32.mrf.mxu0
        %v1075 = vadd.f32 0.0, %v1074
        %v1076 = vpop.f32.mrf.mxu0
        %v1077 = vadd.f32 0.0, %v1076
        %1078 = vdwg.mxu0
        %v1079 = vsel %vm908, %v1075, -inf
        %1080 = vmax.xlane.f32.xlu0 %v1079
        %v1081 = vpop.xlane.xlu0 %1080
        %v1082 = vsel %vm908, %v1077, -inf
        %1083 = vmax.xlane.f32.xlu0 %v1082
        %v1084 = vpop.xlane.xlu0 %1083
        %v1085 = vsub.f32 %v1075, %v1081
        %v1086 = vsub.f32 %v1077, %v1084
        %v1087 = vmul.f32 %v1085, 1.442695
        %v1088 = vpow.pop %v1087
        %v1089 = vmul.f32 %v1086, 1.442695
        %v1090 = vpow.pop %v1089
        %v1091 = vsel %vm908, %v1088, 0.0
        %1092 = vadd.xlane.f32.xlu0 %v1091
        %v1093 = vpop.xlane.xlu0 %1092
        %v1094 = vsel %vm908, %v1090, 0.0
        %1095 = vadd.xlane.f32.xlu0 %v1094
        %v1096 = vpop.xlane.xlu0 %1095
        %v1097 = vrcp.pop %v1093
        %v1098 = vrcp.pop %v1096
        %v1099 = vmul.f32 %v1088, %v1097
        %v1100 = vmul.f32 %v1090, %v1098
        %v1101 = vpack.c.bf16 %v1100, %v1099
        %1102 = vrot.lane.b32.xlu0 %v956, 96
        %v1103 = vpop.permute.xlu0 %1102
        %v1106 = vsel %vm908, %v1101, 0
        %1108 = vmatpush.bf16.msra.mxu0 0
        %1109 = vmatpush.bf16.msra.mxu0 0
        %1110 = vmatpush.bf16.msra.mxu0 0
        %1111 = vmatpush.bf16.msra.mxu0 0
        %1112 = vmatpush.bf16.msra.mxu0 0
        %1113 = vmatpush.bf16.msra.mxu0 0
        %1114 = vmatpush.bf16.msra.mxu0 0
        %1115 = vmatpush.bf16.msra.mxu0 %v1103
        %1116 = vmatmul.bf16.gmra.mxu0 %v1106
        %v1117 = vpop.f32.mrf.mxu0
        %v1118 = vadd.f32 0.0, %v1117
        %v1119 = vpop.f32.mrf.mxu0
        %v1120 = vadd.f32 0.0, %v1119
        %1121 = vdwg.mxu0
        %1124 = vrot.lane.b32.xlu0 %v1118, 32
        %v1125 = vpop.permute.xlu0 %1124
        %1126 = vrot.lane.b32.xlu0 %v1120, 32
        %v1127 = vpop.permute.xlu0 %1126
        %vm1130 = vcmask 392448
        %1131 = vst.msk [vmem:[#allocation2] sm:$0xff] %vm1130, %v1125
        %1132 = vst.msk [vmem:[#allocation2 + $0x8] sm:$0xff] %vm1130, %v1127
        %1133 = vrot.lane.b32.xlu0 %v904, 80
        %v1134 = vpop.permute.xlu0 %1133
        %1135 = vrot.lane.b32.xlu0 %v907, 80
        %v1136 = vpop.permute.xlu0 %1135
        %v1138 = vsel %vm908, %v1134, 0
        %v1141 = vsel %vm908, %v1136, 0
        %1143 = vmatpush.bf16.xpose.msra.mxu0 0
        %1144 = vmatpush.bf16.xpose.msra.mxu0 0
        %1145 = vmatpush.bf16.xpose.msra.mxu0 0
        %1146 = vmatpush.bf16.xpose.msra.mxu0 0
        %1147 = vmatpush.bf16.xpose.msra.mxu0 0
        %1148 = vmatpush.bf16.xpose.msra.mxu0 0
        %1149 = vmatpush.bf16.xpose.msra.mxu0 0
        %1150 = vmatpush.bf16.xpose.msra.mxu0 %v1141
        %1151 = vmatmul.bf16.gmra.mxu0 %v1138
        %v1152 = vpop.f32.mrf.mxu0
        %v1153 = vadd.f32 0.0, %v1152
        %v1154 = vpop.f32.mrf.mxu0
        %v1155 = vadd.f32 0.0, %v1154
        %1156 = vdwg.mxu0
        %v1157 = vsel %vm908, %v1153, -inf
        %1158 = vmax.xlane.f32.xlu0 %v1157
        %v1159 = vpop.xlane.xlu0 %1158
        %v1160 = vsel %vm908, %v1155, -inf
        %1161 = vmax.xlane.f32.xlu0 %v1160
        %v1162 = vpop.xlane.xlu0 %1161
        %v1163 = vsub.f32 %v1153, %v1159
        %v1164 = vsub.f32 %v1155, %v1162
        %v1165 = vmul.f32 %v1163, 1.442695
        %v1166 = vpow.pop %v1165
        %v1167 = vmul.f32 %v1164, 1.442695
        %v1168 = vpow.pop %v1167
        %v1169 = vsel %vm908, %v1166, 0.0
        %1170 = vadd.xlane.f32.xlu0 %v1169
        %v1171 = vpop.xlane.xlu0 %1170
        %v1172 = vsel %vm908, %v1168, 0.0
        %1173 = vadd.xlane.f32.xlu0 %v1172
        %v1174 = vpop.xlane.xlu0 %1173
        %v1175 = vrcp.pop %v1171
        %v1176 = vrcp.pop %v1174
        %v1177 = vmul.f32 %v1166, %v1175
        %v1178 = vmul.f32 %v1168, %v1176
        %v1179 = vpack.c.bf16 %v1178, %v1177
        %1180 = vrot.lane.b32.xlu0 %v956, 80
        %v1181 = vpop.permute.xlu0 %1180
        %v1184 = vsel %vm908, %v1179, 0
        %1186 = vmatpush.bf16.msra.mxu0 0
        %1187 = vmatpush.bf16.msra.mxu0 0
        %1188 = vmatpush.bf16.msra.mxu0 0
        %1189 = vmatpush.bf16.msra.mxu0 0
        %1190 = vmatpush.bf16.msra.mxu0 0
        %1191 = vmatpush.bf16.msra.mxu0 0
        %1192 = vmatpush.bf16.msra.mxu0 0
        %1193 = vmatpush.bf16.msra.mxu0 %v1181
        %1194 = vmatmul.bf16.gmra.mxu0 %v1184
        %v1195 = vpop.f32.mrf.mxu0
        %v1196 = vadd.f32 0.0, %v1195
        %v1197 = vpop.f32.mrf.mxu0
        %v1198 = vadd.f32 0.0, %v1197
        %1199 = vdwg.mxu0
        %1202 = vrot.lane.b32.xlu0 %v1196, 48
        %v1203 = vpop.permute.xlu0 %1202
        %1204 = vrot.lane.b32.xlu0 %v1198, 48
        %v1205 = vpop.permute.xlu0 %1204
        %vm1208 = vcmask 523648
        %1209 = vst.msk [vmem:[#allocation2] sm:$0xff] %vm1208, %v1203
        %1210 = vst.msk [vmem:[#allocation2 + $0x8] sm:$0xff] %vm1208, %v1205
        %1211 = vrot.lane.b32.xlu0 %v904, 64
        %v1212 = vpop.permute.xlu0 %1211
        %1213 = vrot.lane.b32.xlu0 %v907, 64
        %v1214 = vpop.permute.xlu0 %1213
        %v1216 = vsel %vm908, %v1212, 0
        %v1219 = vsel %vm908, %v1214, 0
        %1221 = vmatpush.bf16.xpose.msra.mxu0 0
        %1222 = vmatpush.bf16.xpose.msra.mxu0 0
        %1223 = vmatpush.bf16.xpose.msra.mxu0 0
        %1224 = vmatpush.bf16.xpose.msra.mxu0 0
        %1225 = vmatpush.bf16.xpose.msra.mxu0 0
        %1226 = vmatpush.bf16.xpose.msra.mxu0 0
        %1227 = vmatpush.bf16.xpose.msra.mxu0 0
        %1228 = vmatpush.bf16.xpose.msra.mxu0 %v1219
        %1229 = vmatmul.bf16.gmra.mxu0 %v1216
        %v1230 = vpop.f32.mrf.mxu0
        %v1231 = vadd.f32 0.0, %v1230
        %v1232 = vpop.f32.mrf.mxu0
        %v1233 = vadd.f32 0.0, %v1232
        %1234 = vdwg.mxu0
        %v1235 = vsel %vm908, %v1231, -inf
        %1236 = vmax.xlane.f32.xlu0 %v1235
        %v1237 = vpop.xlane.xlu0 %1236
        %v1238 = vsel %vm908, %v1233, -inf
        %1239 = vmax.xlane.f32.xlu0 %v1238
        %v1240 = vpop.xlane.xlu0 %1239
        %v1241 = vsub.f32 %v1231, %v1237
        %v1242 = vsub.f32 %v1233, %v1240
        %v1243 = vmul.f32 %v1241, 1.442695
        %v1244 = vpow.pop %v1243
        %v1245 = vmul.f32 %v1242, 1.442695
        %v1246 = vpow.pop %v1245
        %v1247 = vsel %vm908, %v1244, 0.0
        %1248 = vadd.xlane.f32.xlu0 %v1247
        %v1249 = vpop.xlane.xlu0 %1248
        %v1250 = vsel %vm908, %v1246, 0.0
        %1251 = vadd.xlane.f32.xlu0 %v1250
        %v1252 = vpop.xlane.xlu0 %1251
        %v1253 = vrcp.pop %v1249
        %v1254 = vrcp.pop %v1252
        %v1255 = vmul.f32 %v1244, %v1253
        %v1256 = vmul.f32 %v1246, %v1254
        %v1257 = vpack.c.bf16 %v1256, %v1255
        %1258 = vrot.lane.b32.xlu0 %v956, 64
        %v1259 = vpop.permute.xlu0 %1258
        %v1262 = vsel %vm908, %v1257, 0
        %1264 = vmatpush.bf16.msra.mxu0 0
        %1265 = vmatpush.bf16.msra.mxu0 0
        %1266 = vmatpush.bf16.msra.mxu0 0
        %1267 = vmatpush.bf16.msra.mxu0 0
        %1268 = vmatpush.bf16.msra.mxu0 0
        %1269 = vmatpush.bf16.msra.mxu0 0
        %1270 = vmatpush.bf16.msra.mxu0 0
        %1271 = vmatpush.bf16.msra.mxu0 %v1259
        %1272 = vmatmul.bf16.gmra.mxu0 %v1262
        %v1273 = vpop.f32.mrf.mxu0
        %v1274 = vadd.f32 0.0, %v1273
        %v1275 = vpop.f32.mrf.mxu0
        %v1276 = vadd.f32 0.0, %v1275
        %1277 = vdwg.mxu0
        %1280 = vrot.lane.b32.xlu0 %v1274, 64
        %v1281 = vpop.permute.xlu0 %1280
        %1282 = vrot.lane.b32.xlu0 %v1276, 64
        %v1283 = vpop.permute.xlu0 %1282
        %vm1286 = vcmask 654848
        %1287 = vst.msk [vmem:[#allocation2] sm:$0xff] %vm1286, %v1281
        %1288 = vst.msk [vmem:[#allocation2 + $0x8] sm:$0xff] %vm1286, %v1283
        %1289 = vrot.lane.b32.xlu0 %v904, 48
        %v1290 = vpop.permute.xlu0 %1289
        %1291 = vrot.lane.b32.xlu0 %v907, 48
        %v1292 = vpop.permute.xlu0 %1291
        %v1294 = vsel %vm908, %v1290, 0
        %v1297 = vsel %vm908, %v1292, 0
        %1299 = vmatpush.bf16.xpose.msra.mxu0 0
        %1300 = vmatpush.bf16.xpose.msra.mxu0 0
        %1301 = vmatpush.bf16.xpose.msra.mxu0 0
        %1302 = vmatpush.bf16.xpose.msra.mxu0 0
        %1303 = vmatpush.bf16.xpose.msra.mxu0 0
        %1304 = vmatpush.bf16.xpose.msra.mxu0 0
        %1305 = vmatpush.bf16.xpose.msra.mxu0 0
        %1306 = vmatpush.bf16.xpose.msra.mxu0 %v1297
        %1307 = vmatmul.bf16.gmra.mxu0 %v1294
        %v1308 = vpop.f32.mrf.mxu0
        %v1309 = vadd.f32 0.0, %v1308
        %v1310 = vpop.f32.mrf.mxu0
        %v1311 = vadd.f32 0.0, %v1310
        %1312 = vdwg.mxu0
        %v1313 = vsel %vm908, %v1309, -inf
        %1314 = vmax.xlane.f32.xlu0 %v1313
        %v1315 = vpop.xlane.xlu0 %1314
        %v1316 = vsel %vm908, %v1311, -inf
        %1317 = vmax.xlane.f32.xlu0 %v1316
        %v1318 = vpop.xlane.xlu0 %1317
        %v1319 = vsub.f32 %v1309, %v1315
        %v1320 = vsub.f32 %v1311, %v1318
        %v1321 = vmul.f32 %v1319, 1.442695
        %v1322 = vpow.pop %v1321
        %v1323 = vmul.f32 %v1320, 1.442695
        %v1324 = vpow.pop %v1323
        %v1325 = vsel %vm908, %v1322, 0.0
        %1326 = vadd.xlane.f32.xlu0 %v1325
        %v1327 = vpop.xlane.xlu0 %1326
        %v1328 = vsel %vm908, %v1324, 0.0
        %1329 = vadd.xlane.f32.xlu0 %v1328
        %v1330 = vpop.xlane.xlu0 %1329
        %v1331 = vrcp.pop %v1327
        %v1332 = vrcp.pop %v1330
        %v1333 = vmul.f32 %v1322, %v1331
        %v1334 = vmul.f32 %v1324, %v1332
        %v1335 = vpack.c.bf16 %v1334, %v1333
        %1336 = vrot.lane.b32.xlu0 %v956, 48
        %v1337 = vpop.permute.xlu0 %1336
        %v1340 = vsel %vm908, %v1335, 0
        %1342 = vmatpush.bf16.msra.mxu0 0
        %1343 = vmatpush.bf16.msra.mxu0 0
        %1344 = vmatpush.bf16.msra.mxu0 0
        %1345 = vmatpush.bf16.msra.mxu0 0
        %1346 = vmatpush.bf16.msra.mxu0 0
        %1347 = vmatpush.bf16.msra.mxu0 0
        %1348 = vmatpush.bf16.msra.mxu0 0
        %1349 = vmatpush.bf16.msra.mxu0 %v1337
        %1350 = vmatmul.bf16.gmra.mxu0 %v1340
        %v1351 = vpop.f32.mrf.mxu0
        %v1352 = vadd.f32 0.0, %v1351
        %v1353 = vpop.f32.mrf.mxu0
        %v1354 = vadd.f32 0.0, %v1353
        %1355 = vdwg.mxu0
        %1358 = vrot.lane.b32.xlu0 %v1352, 80
        %v1359 = vpop.permute.xlu0 %1358
        %1360 = vrot.lane.b32.xlu0 %v1354, 80
        %v1361 = vpop.permute.xlu0 %1360
        %vm1364 = vcmask 786048
        %1365 = vst.msk [vmem:[#allocation2] sm:$0xff] %vm1364, %v1359
        %1366 = vst.msk [vmem:[#allocation2 + $0x8] sm:$0xff] %vm1364, %v1361
        %1367 = vrot.lane.b32.xlu0 %v904, 32
        %v1368 = vpop.permute.xlu0 %1367
        %1369 = vrot.lane.b32.xlu0 %v907, 32
        %v1370 = vpop.permute.xlu0 %1369
        %v1372 = vsel %vm908, %v1368, 0
        %v1375 = vsel %vm908, %v1370, 0
        %1377 = vmatpush.bf16.xpose.msra.mxu0 0
        %1378 = vmatpush.bf16.xpose.msra.mxu0 0
        %1379 = vmatpush.bf16.xpose.msra.mxu0 0
        %1380 = vmatpush.bf16.xpose.msra.mxu0 0
        %1381 = vmatpush.bf16.xpose.msra.mxu0 0
        %1382 = vmatpush.bf16.xpose.msra.mxu0 0
        %1383 = vmatpush.bf16.xpose.msra.mxu0 0
        %1384 = vmatpush.bf16.xpose.msra.mxu0 %v1375
        %1385 = vmatmul.bf16.gmra.mxu0 %v1372
        %v1386 = vpop.f32.mrf.mxu0
        %v1387 = vadd.f32 0.0, %v1386
        %v1388 = vpop.f32.mrf.mxu0
        %v1389 = vadd.f32 0.0, %v1388
        %1390 = vdwg.mxu0
        %v1391 = vsel %vm908, %v1387, -inf
        %1392 = vmax.xlane.f32.xlu0 %v1391
        %v1393 = vpop.xlane.xlu0 %1392
        %v1394 = vsel %vm908, %v1389, -inf
        %1395 = vmax.xlane.f32.xlu0 %v1394
        %v1396 = vpop.xlane.xlu0 %1395
        %v1397 = vsub.f32 %v1387, %v1393
        %v1398 = vsub.f32 %v1389, %v1396
        %v1399 = vmul.f32 %v1397, 1.442695
        %v1400 = vpow.pop %v1399
        %v1401 = vmul.f32 %v1398, 1.442695
        %v1402 = vpow.pop %v1401
        %v1403 = vsel %vm908, %v1400, 0.0
        %1404 = vadd.xlane.f32.xlu0 %v1403
        %v1405 = vpop.xlane.xlu0 %1404
        %v1406 = vsel %vm908, %v1402, 0.0
        %1407 = vadd.xlane.f32.xlu0 %v1406
        %v1408 = vpop.xlane.xlu0 %1407
        %v1409 = vrcp.pop %v1405
        %v1410 = vrcp.pop %v1408
        %v1411 = vmul.f32 %v1400, %v1409
        %v1412 = vmul.f32 %v1402, %v1410
        %v1413 = vpack.c.bf16 %v1412, %v1411
        %1414 = vrot.lane.b32.xlu0 %v956, 32
        %v1415 = vpop.permute.xlu0 %1414
        %v1418 = vsel %vm908, %v1413, 0
        %1420 = vmatpush.bf16.msra.mxu0 0
        %1421 = vmatpush.bf16.msra.mxu0 0
        %1422 = vmatpush.bf16.msra.mxu0 0
        %1423 = vmatpush.bf16.msra.mxu0 0
        %1424 = vmatpush.bf16.msra.mxu0 0
        %1425 = vmatpush.bf16.msra.mxu0 0
        %1426 = vmatpush.bf16.msra.mxu0 0
        %1427 = vmatpush.bf16.msra.mxu0 %v1415
        %1428 = vmatmul.bf16.gmra.mxu0 %v1418
        %v1429 = vpop.f32.mrf.mxu0
        %v1430 = vadd.f32 0.0, %v1429
        %v1431 = vpop.f32.mrf.mxu0
        %v1432 = vadd.f32 0.0, %v1431
        %1433 = vdwg.mxu0
        %1436 = vrot.lane.b32.xlu0 %v1430, 96
        %v1437 = vpop.permute.xlu0 %1436
        %1438 = vrot.lane.b32.xlu0 %v1432, 96
        %v1439 = vpop.permute.xlu0 %1438
        %vm1442 = vcmask 917248
        %1443 = vst.msk [vmem:[#allocation2] sm:$0xff] %vm1442, %v1437
        %1444 = vst.msk [vmem:[#allocation2 + $0x8] sm:$0xff] %vm1442, %v1439
        %1445 = vrot.lane.b32.xlu0 %v904, 16
        %v1446 = vpop.permute.xlu0 %1445
        %1447 = vrot.lane.b32.xlu0 %v907, 16
        %v1448 = vpop.permute.xlu0 %1447
        %v1450 = vsel %vm908, %v1446, 0
        %v1453 = vsel %vm908, %v1448, 0
        %1455 = vmatpush.bf16.xpose.msra.mxu0 0
        %1456 = vmatpush.bf16.xpose.msra.mxu0 0
        %1457 = vmatpush.bf16.xpose.msra.mxu0 0
        %1458 = vmatpush.bf16.xpose.msra.mxu0 0
        %1459 = vmatpush.bf16.xpose.msra.mxu0 0
        %1460 = vmatpush.bf16.xpose.msra.mxu0 0
        %1461 = vmatpush.bf16.xpose.msra.mxu0 0
        %1462 = vmatpush.bf16.xpose.msra.mxu0 %v1453
        %1463 = vmatmul.bf16.gmra.mxu0 %v1450
        %v1464 = vpop.f32.mrf.mxu0
        %v1465 = vadd.f32 0.0, %v1464
        %v1466 = vpop.f32.mrf.mxu0
        %v1467 = vadd.f32 0.0, %v1466
        %1468 = vdwg.mxu0
        %v1469 = vsel %vm908, %v1465, -inf
        %1470 = vmax.xlane.f32.xlu0 %v1469
        %v1471 = vpop.xlane.xlu0 %1470
        %v1472 = vsel %vm908, %v1467, -inf
        %1473 = vmax.xlane.f32.xlu0 %v1472
        %v1474 = vpop.xlane.xlu0 %1473
        %v1475 = vsub.f32 %v1465, %v1471
        %v1476 = vsub.f32 %v1467, %v1474
        %v1477 = vmul.f32 %v1475, 1.442695
        %v1478 = vpow.pop %v1477
        %v1479 = vmul.f32 %v1476, 1.442695
        %v1480 = vpow.pop %v1479
        %v1481 = vsel %vm908, %v1478, 0.0
        %1482 = vadd.xlane.f32.xlu0 %v1481
        %v1483 = vpop.xlane.xlu0 %1482
        %v1484 = vsel %vm908, %v1480, 0.0
        %1485 = vadd.xlane.f32.xlu0 %v1484
        %v1486 = vpop.xlane.xlu0 %1485
        %v1487 = vrcp.pop %v1483
        %v1488 = vrcp.pop %v1486
        %v1489 = vmul.f32 %v1478, %v1487
        %v1490 = vmul.f32 %v1480, %v1488
        %v1491 = vpack.c.bf16 %v1490, %v1489
        %1492 = vrot.lane.b32.xlu0 %v956, 16
        %v1493 = vpop.permute.xlu0 %1492
        %v1496 = vsel %vm908, %v1491, 0
        %1498 = vmatpush.bf16.msra.mxu0 0
        %1499 = vmatpush.bf16.msra.mxu0 0
        %1500 = vmatpush.bf16.msra.mxu0 0
        %1501 = vmatpush.bf16.msra.mxu0 0
        %1502 = vmatpush.bf16.msra.mxu0 0
        %1503 = vmatpush.bf16.msra.mxu0 0
        %1504 = vmatpush.bf16.msra.mxu0 0
        %1505 = vmatpush.bf16.msra.mxu0 %v1493
        %1506 = vmatmul.bf16.gmra.mxu0 %v1496
        %v1507 = vpop.f32.mrf.mxu0
        %v1508 = vadd.f32 0.0, %v1507
        %v1509 = vpop.f32.mrf.mxu0
        %v1510 = vadd.f32 0.0, %v1509
        %1511 = vdwg.mxu0
        %1514 = vrot.lane.b32.xlu0 %v1508, 112
        %v1515 = vpop.permute.xlu0 %1514
        %1516 = vrot.lane.b32.xlu0 %v1510, 112
        %v1517 = vpop.permute.xlu0 %1516
        %vm1520 = vcmask 1048448
        %1521 = vst.msk [vmem:[#allocation2] sm:$0xff] %vm1520, %v1515
        %1522 = vst.msk [vmem:[#allocation2 + $0x8] sm:$0xff] %vm1520, %v1517
        %v1523 = vld [vmem:[#allocation2] sm:$0xff]
        %v1524 = vld [vmem:[#allocation2 + $0x8] sm:$0xff]
        %v1525 = vld [vmem:[%s633] sm:$0xf]
        %v1526 = vld [vmem:[%s633 + $0x4] sm:$0xf]
        %v1527 = vld [vmem:[%s633 + $0x8] sm:$0xf]
        %v1528 = vld [vmem:[%s633 + $0xc] sm:$0xf]
        %v1529 = vld [vmem:[%s633 + $0x10] sm:$0xf]
        %v1530 = vld [vmem:[%s633 + $0x14] sm:$0xf]
        %v1531 = vld [vmem:[%s633 + $0x18] sm:$0xf]
        %v1532 = vld [vmem:[%s633 + $0x1c] sm:$0xf]
        %v1533 = vld [vmem:[%s633 + $0x20] sm:$0xf]
        %v1534 = vld [vmem:[%s633 + $0x24] sm:$0xf]
        %v1535 = vld [vmem:[%s633 + $0x28] sm:$0xf]
        %v1536 = vld [vmem:[%s633 + $0x2c] sm:$0xf]
        %v1537 = vld [vmem:[%s633 + $0x30] sm:$0xf]
        %v1538 = vld [vmem:[%s633 + $0x34] sm:$0xf]
        %v1539 = vld [vmem:[%s633 + $0x38] sm:$0xf]
        %v1540 = vld [vmem:[%s633 + $0x3c] sm:$0xf]
        %v1541 = vpack.c.bf16 %v1524, %v1523
        %v1542 = vld [vmem:[%s636] sm:$0x1]
        %v1543 = vunpack.c.l.bf16 %v1542
        %v1544 = vperm.slane %v1543, 0
        %v1561 = vunpack.c.l.b16 %v1525
        %v1562 = vunpack.c.l.b16 %v1526
        %v1563 = vunpack.c.l.b16 %v1527
        %v1564 = vunpack.c.l.b16 %v1528
        %v1565 = vunpack.c.l.b16 %v1529
        %v1566 = vunpack.c.l.b16 %v1530
        %v1567 = vunpack.c.l.b16 %v1531
        %v1568 = vunpack.c.l.b16 %v1532
        %v1569 = vunpack.c.l.b16 %v1533
        %v1570 = vunpack.c.l.b16 %v1534
        %v1571 = vunpack.c.l.b16 %v1535
        %v1572 = vunpack.c.l.b16 %v1536
        %v1573 = vunpack.c.l.b16 %v1537
        %v1574 = vunpack.c.l.b16 %v1538
        %v1575 = vunpack.c.l.b16 %v1539
        %v1576 = vunpack.c.l.b16 %v1540
        %v1577 = vpack.c.b16 %v1562, %v1561
        %v1578 = vpack.c.b16 %v1564, %v1563
        %v1579 = vpack.c.b16 %v1566, %v1565
        %v1580 = vpack.c.b16 %v1568, %v1567
        %v1581 = vpack.c.b16 %v1570, %v1569
        %v1582 = vpack.c.b16 %v1572, %v1571
        %v1583 = vpack.c.b16 %v1574, %v1573
        %v1584 = vpack.c.b16 %v1576, %v1575
        %1593 = vmatpush.bf16.msra.mxu0 %v1584
        %1594 = vmatpush.bf16.msra.mxu0 %v1583
        %1595 = vmatpush.bf16.msra.mxu0 %v1582
        %1596 = vmatpush.bf16.msra.mxu0 %v1581
        %1597 = vmatpush.bf16.msra.mxu0 %v1580
        %1598 = vmatpush.bf16.msra.mxu0 %v1579
        %1599 = vmatpush.bf16.msra.mxu0 %v1578
        %1600 = vmatpush.bf16.msra.mxu0 %v1577
        %1601 = vmatmul.bf16.gmra.mxu0 %v1541
        %v1602 = vpop.f32.mrf.mxu0
        %v1603 = vadd.f32 %v1544, %v1602
        %v1604 = vpop.f32.mrf.mxu0
        %v1605 = vadd.f32 %v1544, %v1604
        %1606 = vdwg.mxu0
        %v1607 = vadd.f32 %v679, %v1603
        %v1608 = vadd.f32 %v680, %v1605
        %v1609 = vld [vmem:[%s639] sm:$0x1]
        %v1610 = vld [vmem:[%s642] sm:$0x1]
        %1611 = vadd.xlane.f32.xlu0 %v1607
        %v1612 = vpop.xlane.xlu0 %1611
        %1613 = vadd.xlane.f32.xlu0 %v1608
        %v1614 = vpop.xlane.xlu0 %1613
        %v1615 = vrcp.pop 128.0
        %v1616 = vmul.f32 128.0, %v1615
        %v1617 = vsub.f32 1.0, %v1616
        %v1618 = vmul.f32 %v1615, %v1617
        %v1619 = vadd.f32 %v1615, %v1618
        %vm1620 = vweird.f32 %v1615
        %v1621 = vsel %vm1620, %v1615, %v1619
        %v1622 = vmul.f32 %v1612, %v1621
        %v1623 = vmul.f32 %v1614, %v1621
        %v1624 = vsub.f32 %v1607, %v1622
        %v1625 = vsub.f32 %v1608, %v1623
        %v1626 = vmul.f32 %v1624, %v1624
        %v1627 = vmul.f32 %v1625, %v1625
        %1628 = vadd.xlane.f32.xlu0 %v1626
        %v1629 = vpop.xlane.xlu0 %1628
        %1630 = vadd.xlane.f32.xlu0 %v1627
        %v1631 = vpop.xlane.xlu0 %1630
        %v1632 = vmul.f32 %v1629, %v1621
        %v1633 = vmul.f32 %v1631, %v1621
        %v1634 = vadd.f32 %v1632, 1e-05
        %v1635 = vadd.f32 %v1633, 1e-05
        %v1636 = vrsqrt.pop %v1634
        %v1637 = vmul.f32 %v1636, %v1634
        %v1638 = vmul.f32 %v1637, %v1636
        %v1639 = vmul.f32 0.5, %v1638
        %v1640 = vsub.f32 1.5, %v1639
        %v1641 = vmul.f32 %v1636, %v1640
        %vm1642 = vweird.f32 %v1634
        %vm1643 = vweird.f32 %v1636
        %vm1644 = vmor %vm1642, %vm1643
        %v1645 = vsel %vm1644, %v1636, %v1641
        %v1646 = vrsqrt.pop %v1635
        %v1647 = vmul.f32 %v1646, %v1635
        %v1648 = vmul.f32 %v1647, %v1646
        %v1649 = vmul.f32 0.5, %v1648
        %v1650 = vsub.f32 1.5, %v1649
        %v1651 = vmul.f32 %v1646, %v1650
        %vm1652 = vweird.f32 %v1635
        %vm1653 = vweird.f32 %v1646
        %vm1654 = vmor %vm1652, %vm1653
        %v1655 = vsel %vm1654, %v1646, %v1651
        %v1656 = vmul.f32 %v1624, %v1645
        %v1657 = vmul.f32 %v1625, %v1655
        %v1659 = vperm.slane %v1609, 0
        %v1661 = vmul.f32 %v1656, %v1659
        %v1662 = vmul.f32 %v1657, %v1659
        %v1664 = vperm.slane %v1610, 0
        %v1666 = vadd.f32 %v1661, %v1664
        %v1667 = vadd.f32 %v1662, %v1664
        %v1668 = vld [vmem:[%s647] sm:$0xf]
        %v1669 = vld [vmem:[%s647 + $0x4] sm:$0xf]
        %v1670 = vld [vmem:[%s647 + $0x8] sm:$0xf]
        %v1671 = vld [vmem:[%s647 + $0xc] sm:$0xf]
        %v1672 = vld [vmem:[%s647 + $0x10] sm:$0xf]
        %v1673 = vld [vmem:[%s647 + $0x14] sm:$0xf]
        %v1674 = vld [vmem:[%s647 + $0x18] sm:$0xf]
        %v1675 = vld [vmem:[%s647 + $0x1c] sm:$0xf]
        %v1676 = vld [vmem:[%s647 + $0x20] sm:$0xf]
        %v1677 = vld [vmem:[%s647 + $0x24] sm:$0xf]
        %v1678 = vld [vmem:[%s647 + $0x28] sm:$0xf]
        %v1679 = vld [vmem:[%s647 + $0x2c] sm:$0xf]
        %v1680 = vld [vmem:[%s647 + $0x30] sm:$0xf]
        %v1681 = vld [vmem:[%s647 + $0x34] sm:$0xf]
        %v1682 = vld [vmem:[%s647 + $0x38] sm:$0xf]
        %v1683 = vld [vmem:[%s647 + $0x3c] sm:$0xf]
        %v1684 = vpack.c.bf16 %v1667, %v1666
        %v1685 = vld [vmem:[%s650] sm:$0x1]
        %v1686 = vunpack.c.l.bf16 %v1685
        %v1687 = vperm.slane %v1686, 0
        %v1704 = vunpack.c.l.b16 %v1668
        %v1705 = vunpack.c.l.b16 %v1669
        %v1706 = vunpack.c.l.b16 %v1670
        %v1707 = vunpack.c.l.b16 %v1671
        %v1708 = vunpack.c.l.b16 %v1672
        %v1709 = vunpack.c.l.b16 %v1673
        %v1710 = vunpack.c.l.b16 %v1674
        %v1711 = vunpack.c.l.b16 %v1675
        %v1712 = vunpack.c.l.b16 %v1676
        %v1713 = vunpack.c.l.b16 %v1677
        %v1714 = vunpack.c.l.b16 %v1678
        %v1715 = vunpack.c.l.b16 %v1679
        %v1716 = vunpack.c.l.b16 %v1680
        %v1717 = vunpack.c.l.b16 %v1681
        %v1718 = vunpack.c.l.b16 %v1682
        %v1719 = vunpack.c.l.b16 %v1683
        %v1720 = vpack.c.b16 %v1705, %v1704
        %v1721 = vpack.c.b16 %v1707, %v1706
        %v1722 = vpack.c.b16 %v1709, %v1708
        %v1723 = vpack.c.b16 %v1711, %v1710
        %v1724 = vpack.c.b16 %v1713, %v1712
        %v1725 = vpack.c.b16 %v1715, %v1714
        %v1726 = vpack.c.b16 %v1717, %v1716
        %v1727 = vpack.c.b16 %v1719, %v1718
        %1736 = vmatpush.bf16.msra.mxu0 %v1727
        %1737 = vmatpush.bf16.msra.mxu0 %v1726
        %1738 = vmatpush.bf16.msra.mxu0 %v1725
        %1739 = vmatpush.bf16.msra.mxu0 %v1724
        %1740 = vmatpush.bf16.msra.mxu0 %v1723
        %1741 = vmatpush.bf16.msra.mxu0 %v1722
        %1742 = vmatpush.bf16.msra.mxu0 %v1721
        %1743 = vmatpush.bf16.msra.mxu0 %v1720
        %1744 = vmatmul.bf16.gmra.mxu0 %v1684
        %v1745 = vpop.f32.mrf.mxu0
        %v1746 = vadd.f32 %v1687, %v1745
        %v1747 = vpop.f32.mrf.mxu0
        %v1748 = vadd.f32 %v1687, %v1747
        %1749 = vdwg.mxu0
        %v1750 = vmax.f32 %v1746, 0.0
        %v1751 = vmax.f32 %v1748, 0.0
        %v1752 = vld [vmem:[%s655] sm:$0xf]
        %v1753 = vld [vmem:[%s655 + $0x4] sm:$0xf]
        %v1754 = vld [vmem:[%s655 + $0x8] sm:$0xf]
        %v1755 = vld [vmem:[%s655 + $0xc] sm:$0xf]
        %v1756 = vld [vmem:[%s655 + $0x10] sm:$0xf]
        %v1757 = vld [vmem:[%s655 + $0x14] sm:$0xf]
        %v1758 = vld [vmem:[%s655 + $0x18] sm:$0xf]
        %v1759 = vld [vmem:[%s655 + $0x1c] sm:$0xf]
        %v1760 = vpack.c.bf16 %v1751, %v1750
        %v1761 = vld [vmem:[%s658] sm:$0x1]
        %v1762 = vunpack.c.l.bf16 %v1761
        %v1763 = vperm.slane %v1762, 0
        %v1772 = vunpack.c.l.b16 %v1752
        %v1773 = vunpack.c.l.b16 %v1753
        %v1774 = vunpack.c.l.b16 %v1754
        %v1775 = vunpack.c.l.b16 %v1755
        %v1776 = vunpack.c.l.b16 %v1756
        %v1777 = vunpack.c.l.b16 %v1757
        %v1778 = vunpack.c.l.b16 %v1758
        %v1779 = vunpack.c.l.b16 %v1759
        %v1780 = vpack.c.b16 %v1773, %v1772
        %v1781 = vpack.c.b16 %v1775, %v1774
        %v1782 = vpack.c.b16 %v1777, %v1776
        %v1783 = vpack.c.b16 %v1779, %v1778
        %vm1788 = vcmask 523264
        %v1790 = vsel %vm1788, %v1760, 0
        %1792 = vmatpush.bf16.msra.mxu0 0
        %1793 = vmatpush.bf16.msra.mxu0 0
        %1794 = vmatpush.bf16.msra.mxu0 0
        %1795 = vmatpush.bf16.msra.mxu0 0
        %1796 = vmatpush.bf16.msra.mxu0 %v1783
        %1797 = vmatpush.bf16.msra.mxu0 %v1782
        %1798 = vmatpush.bf16.msra.mxu0 %v1781
        %1799 = vmatpush.bf16.msra.mxu0 %v1780
        %1800 = vmatmul.bf16.gmra.mxu0 %v1790
        %v1801 = vpop.f32.mrf.mxu0
        %v1802 = vadd.f32 %v1763, %v1801
        %v1803 = vpop.f32.mrf.mxu0
        %v1804 = vadd.f32 %v1763, %v1803
        %1805 = vdwg.mxu0
        %v1806 = vadd.f32 %v1666, %v1802
        %v1807 = vadd.f32 %v1667, %v1804
        %v1808 = vld [vmem:[%s661] sm:$0x1]
        %v1809 = vld [vmem:[%s664] sm:$0x1]
        %1810 = vadd.xlane.f32.xlu0 %v1806
        %v1811 = vpop.xlane.xlu0 %1810
        %1812 = vadd.xlane.f32.xlu0 %v1807
        %v1813 = vpop.xlane.xlu0 %1812
        %v1814 = vmul.f32 %v1811, %v1621
        %v1815 = vmul.f32 %v1813, %v1621
        %v1816 = vsub.f32 %v1806, %v1814
        %v1817 = vsub.f32 %v1807, %v1815
        %v1818 = vmul.f32 %v1816, %v1816
        %v1819 = vmul.f32 %v1817, %v1817
        %1820 = vadd.xlane.f32.xlu0 %v1818
        %v1821 = vpop.xlane.xlu0 %1820
        %1822 = vadd.xlane.f32.xlu0 %v1819
        %v1823 = vpop.xlane.xlu0 %1822
        %v1824 = vmul.f32 %v1821, %v1621
        %v1825 = vmul.f32 %v1823, %v1621
        %v1826 = vadd.f32 %v1824, 1e-05
        %v1827 = vadd.f32 %v1825, 1e-05
        %v1828 = vrsqrt.pop %v1826
        %v1829 = vmul.f32 %v1828, %v1826
        %v1830 = vmul.f32 %v1829, %v1828
        %v1831 = vmul.f32 0.5, %v1830
        %v1832 = vsub.f32 1.5, %v1831
        %v1833 = vmul.f32 %v1828, %v1832
        %vm1834 = vweird.f32 %v1826
        %vm1835 = vweird.f32 %v1828
        %vm1836 = vmor %vm1834, %vm1835
        %v1837 = vsel %vm1836, %v1828, %v1833
        %v1838 = vrsqrt.pop %v1827
        %v1839 = vmul.f32 %v1838, %v1827
        %v1840 = vmul.f32 %v1839, %v1838
        %v1841 = vmul.f32 0.5, %v1840
        %v1842 = vsub.f32 1.5, %v1841
        %v1843 = vmul.f32 %v1838, %v1842
        %vm1844 = vweird.f32 %v1827
        %vm1845 = vweird.f32 %v1838
        %vm1846 = vmor %vm1844, %vm1845
        %v1847 = vsel %vm1846, %v1838, %v1843
        %v1848 = vmul.f32 %v1816, %v1837
        %v1849 = vmul.f32 %v1817, %v1847
        %v1851 = vperm.slane %v1808, 0
        %v1853 = vmul.f32 %v1848, %v1851
        %v1854 = vmul.f32 %v1849, %v1851
        %v1856 = vperm.slane %v1809, 0
        %v1858 = vadd.f32 %v1853, %v1856
        %v1859 = vadd.f32 %v1854, %v1856
        %1860 = vst [vmem:[%s669] sm:$0xff] %v1858
        %1861 = vst [vmem:[%s669 + $0x8] sm:$0xff] %v1859
        %p1862 = scmp.lt.s32.totalorder %s31, 1
        %s1863 = scalar_select %p1862, %s31, 1
        %s1864 = smul.addr %s1863, 2
        %s1865 = smul.addr %s1864, 8
        %s1866 = scalar_lea.vmem %s13, %s1865
        // Predicated region
        $region81: #{custom_transformer.2} parent=71 // pred_check
          %p1867 = pneg %p395
        $region82: #{custom_transformer.2} parent=71 // pred_check_branch
          %1869 = sbr.rel (%p1867) target = $region84
        $region83: #{custom_transformer.2} parent=71 // pred_region
          _
        $region84: #{custom_transformer.2} parent=71 // pred_fallthru
          _
      $region72: #{custom_transformer.2} parent=5 // pred_fallthru
        _
      %p1870 = scmp.le.s32.totalorder 2, %s22
      // Predicated region
      $region85: #{custom_transformer.2} parent=5 // pred_check
        %p1871 = pneg %p1870
      $region86: #{custom_transformer.2} parent=5 // pred_check_branch
        %1873 = sbr.rel (%p1871) target = $region88
      $region87: #{custom_transformer.2} parent=5 // pred_region
        %s1874 = ssub.s32 %s22, 2
        // Predicated region
        $region89: #{custom_transformer.2} parent=87 // pred_check
          %p1875 = pneg %p401
        $region90: #{custom_transformer.2} parent=87 // pred_check_branch
          %1877 = sbr.rel (%p1875) target = $region92
        $region91: #{custom_transformer.2} parent=87 // pred_region
          %p1878 = scmp.lt.s32.totalorder %s33, 1
          %s1879 = scalar_select %p1878, %s33, 1
          %s1880 = smul.addr %s1879, 2
          %s1881 = smul.addr %s1880, 8
          %s1882 = scalar_lea.vmem %s13, %s1881
        $region92: #{custom_transformer.2} parent=87 // pred_fallthru
          _
      $region88: #{custom_transformer.2} parent=5 // pred_fallthru
        _
    $region6: #{custom_transformer.2} parent=1 // loop_footer
      %s26 = sadd.s32 1, %s22
    $region7: #{custom_transformer.2} parent=1 // loop_footer_branch
      %21 = sbr.rel target = $region3
    $region8: #{custom_transformer.2} parent=1 // loop_exit
      _
    %1883 = vsyncpa [#allocation4], 1
    %s1884 = scalar_lea.sflag [#allocation4], 1
    %1885 = vsyncpa %s1884, 1

// kernel: custom_transformer.3
$region0: #{custom_transformer.3}
  #allocation0 [shape = 'u32[]', space=smem, size = 0x4, offset = 0x4, fixed_abs, tag = 'smem constant byte address 0x4 - core index']
  #allocation1 [shape = 'u32[72,128]{1,0:T(1,128)}', space=vmem, size = 0x9000, scoped, tag = 'internal scratch']
  #allocation2 [shape = 'f32[8,128]{1,0:T(8,128)}', space=vmem, size = 0x1000, scoped, tag = 'scratch operand']
  %s0 = inlined_call_operand.vmem [shape: f32[2,8,128], index: 0, kind: input, shape index: {}]
  %s1 = inlined_call_operand.vmem [shape: f32[2,16,128], index: 1, kind: input, shape index: {}]
  %s2 = inlined_call_operand.vmem [shape: bf16[128,384], index: 2, kind: input, shape index: {}]
  %s3 = inlined_call_operand.vmem [shape: bf16[1,384], index: 3, kind: input, shape index: {}]
  %s4 = inlined_call_operand.vmem [shape: bf16[128,128], index: 4, kind: input, shape index: {}]
  %s5 = inlined_call_operand.vmem [shape: bf16[1,128], index: 5, kind: input, shape index: {}]
  %s6 = inlined_call_operand.vmem [shape: f32[1,128], index: 6, kind: input, shape index: {}]
  %s7 = inlined_call_operand.vmem [shape: f32[1,128], index: 7, kind: input, shape index: {}]
  %s8 = inlined_call_operand.vmem [shape: bf16[128,384], index: 8, kind: input, shape index: {}]
  %s9 = inlined_call_operand.vmem [shape: bf16[1,384], index: 9, kind: input, shape index: {}]
  %s10 = inlined_call_operand.vmem [shape: bf16[128,128], index: 10, kind: input, shape index: {}]
  %s11 = inlined_call_operand.vmem [shape: bf16[1,128], index: 11, kind: input, shape index: {}]
  %s12 = inlined_call_operand.vmem [shape: f32[1,128], index: 12, kind: input, shape index: {}]
  %s13 = inlined_call_operand.vmem [shape: f32[1,128], index: 13, kind: input, shape index: {}]
  %s14 = inlined_call_operand.vmem [shape: bf16[128,64], index: 14, kind: input, shape index: {}]
  %s15 = inlined_call_operand.vmem [shape: bf16[1,64], index: 15, kind: input, shape index: {}]
  %s16 = inlined_call_operand.vmem [shape: bf16[64,128], index: 16, kind: input, shape index: {}]
  %s17 = inlined_call_operand.vmem [shape: bf16[1,128], index: 17, kind: input, shape index: {}]
  %s18 = inlined_call_operand.vmem [shape: f32[1,128], index: 18, kind: input, shape index: {}]
  %s19 = inlined_call_operand.vmem [shape: f32[1,128], index: 19, kind: input, shape index: {}]
  %s20 = inlined_call_operand.hbm [shape: f32[2,8,128], index: 20, kind: output, shape index: {}]
  %s21 = sld [smem:[#allocation0]]
  $region113: #{custom_transformer.3} parent=0
    _
  %s23 = ssub.s32 1, %s21
  %s24 = scalar_select 0, %s23, %s21
  $region1: #{custom_transformer.3} parent=0
    #allocation3 [shape = 'u8[8192]{0}', space=vmem, size = 0x2000, scoped, tag = 'output window, operand 0']
    #allocation4 [shape = 's32[2]{0}', space=sflag, size = 0x8, scoped, tag = 'scoped memory for custom_transformer.3']
    %25 = vsyncpa [#allocation4], 0
    %s26 = scalar_lea.sflag [#allocation4], 1
    %27 = vsyncpa %s26, 0
    loop: start=0, step=1, limit=4
    $region2: #{custom_transformer.3} parent=1 // loop_pre_header
      _
    $region3: #{custom_transformer.3} parent=1 // loop_header
      %s29 = sphi 0, %s33
      %p30 = scmp.ge.s32.totalorder %s29, 4
      %s39 = sphi 0, %s41
      %s42 = sphi 0, %s39
      %s43 = sphi 0, %s42
      %s59 = sphi 0, %s43
      %s65 = sphi 0, %s67
      %s68 = sphi 0, %s65
      %s69 = sphi 0, %s68
      %s85 = sphi 0, %s69
      %s89 = sphi 0, %s89
      %s91 = sphi 0, %s89
      %s92 = sphi 0, %s91
      %s106 = sphi 0, %s92
      %s110 = sphi 0, %s110
      %s112 = sphi 0, %s110
      %s113 = sphi 0, %s112
      %s127 = sphi 0, %s113
      %s131 = sphi 0, %s131
      %s133 = sphi 0, %s131
      %s134 = sphi 0, %s133
      %s148 = sphi 0, %s134
      %s152 = sphi 0, %s152
      %s154 = sphi 0, %s152
      %s155 = sphi 0, %s154
      %s169 = sphi 0, %s155
      %s173 = sphi 0, %s173
      %s175 = sphi 0, %s173
      %s176 = sphi 0, %s175
      %s190 = sphi 0, %s176
      %s194 = sphi 0, %s194
      %s196 = sphi 0, %s194
      %s197 = sphi 0, %s196
      %s211 = sphi 0, %s197
      %s215 = sphi 0, %s215
      %s217 = sphi 0, %s215
      %s218 = sphi 0, %s217
      %s232 = sphi 0, %s218
      %s236 = sphi 0, %s236
      %s238 = sphi 0, %s236
      %s239 = sphi 0, %s238
      %s253 = sphi 0, %s239
      %s257 = sphi 0, %s257
      %s259 = sphi 0, %s257
      %s260 = sphi 0, %s259
      %s274 = sphi 0, %s260
      %s278 = sphi 0, %s278
      %s280 = sphi 0, %s278
      %s281 = sphi 0, %s280
      %s295 = sphi 0, %s281
      %s299 = sphi 0, %s299
      %s301 = sphi 0, %s299
      %s302 = sphi 0, %s301
      %s316 = sphi 0, %s302
      %s320 = sphi 0, %s320
      %s322 = sphi 0, %s320
      %s323 = sphi 0, %s322
      %s337 = sphi 0, %s323
      %s341 = sphi 0, %s341
      %s343 = sphi 0, %s341
      %s344 = sphi 0, %s343
      %s358 = sphi 0, %s344
      %s362 = sphi 0, %s362
      %s364 = sphi 0, %s362
      %s365 = sphi 0, %s364
      %s379 = sphi 0, %s365
      %s383 = sphi 0, %s383
      %s385 = sphi 0, %s383
      %s386 = sphi 0, %s385
      %s400 = sphi 0, %s386
      %s404 = sphi 0, %s404
      %s406 = sphi 0, %s404
      %s407 = sphi 0, %s406
      %s421 = sphi 0, %s407
      %s425 = sphi 0, %s425
      %s427 = sphi 0, %s425
      %s428 = sphi 0, %s427
      %s442 = sphi 0, %s428
      %s446 = sphi 0, %s446
      %s448 = sphi 0, %s446
      %s449 = sphi 0, %s448
      %s463 = sphi 0, %s449
      %s469 = sphi 0, %s471
      %s472 = sphi 0, %s469
      %s473 = sphi 0, %s472
      %s489 = sphi 0, %s473
    $region4: #{custom_transformer.3} parent=1 // loop_header_branch
      %32 = sbr.rel (%p30) target = $region8
    $region5: #{custom_transformer.3} parent=1 // loop_body
      %s34 = ssub.s32 %s29, 1
      %s35 = ssub.s32 %s29, 2
      %s36 = sadd.s32 %s29, 1
      %s37 = ssub.s32 %s29, %s36
      %p38 = scmp.eq.s32.totalorder %s37, 0
      %s40 = sadd.s32 %s39, 1
      %s41 = scalar_select %p38, %s39, %s40
      %p44 = pneg %p38
      %p45 = scmp.eq.s32.totalorder %s29, 1
      %p46 = por %p44, %p45
      %p47 = scmp.ne.s32.totalorder %s39, %s42
      %p48 = scmp.eq.s32.totalorder %s29, 0
      %p49 = por %p47, %p48
      %p50 = scmp.ne.s32.totalorder %s39, %s42
      %p51 = scmp.eq.s32.totalorder %s34, 1
      %p52 = por %p50, %p51
      %p53 = scmp.ne.s32.totalorder %s42, %s43
      %p54 = scmp.eq.s32.totalorder %s34, 0
      %p55 = por %p53, %p54
      %p56 = scmp.ne.s32.totalorder %s42, %s43
      %p57 = scmp.eq.s32.totalorder %s35, 1
      %p58 = por %p56, %p57
      %p60 = scmp.ne.s32.totalorder %s43, %s59
      %p61 = scmp.eq.s32.totalorder %s35, 0
      %p62 = por %p60, %p61
      %s63 = ssub.s32 %s29, %s36
      %p64 = scmp.eq.s32.totalorder %s63, 0
      %s66 = sadd.s32 %s65, 1
      %s67 = scalar_select %p64, %s65, %s66
      %p70 = pneg %p64
      %p71 = scmp.eq.s32.totalorder %s29, 1
      %p72 = por %p70, %p71
      %p73 = scmp.ne.s32.totalorder %s65, %s68
      %p74 = scmp.eq.s32.totalorder %s29, 0
      %p75 = por %p73, %p74
      %p76 = scmp.ne.s32.totalorder %s65, %s68
      %p77 = scmp.eq.s32.totalorder %s34, 1
      %p78 = por %p76, %p77
      %p79 = scmp.ne.s32.totalorder %s68, %s69
      %p80 = scmp.eq.s32.totalorder %s34, 0
      %p81 = por %p79, %p80
      %p82 = scmp.ne.s32.totalorder %s68, %s69
      %p83 = scmp.eq.s32.totalorder %s35, 1
      %p84 = por %p82, %p83
      %p86 = scmp.ne.s32.totalorder %s69, %s85
      %p87 = scmp.eq.s32.totalorder %s35, 0
      %p88 = por %p86, %p87
      %s90 = sadd.s32 %s89, 1
      %p93 = scmp.eq.s32.totalorder %s29, 1
      %p94 = scmp.ne.s32.totalorder %s89, %s91
      %p95 = scmp.eq.s32.totalorder %s29, 0
      %p96 = por %p94, %p95
      %p97 = scmp.ne.s32.totalorder %s89, %s91
      %p98 = scmp.eq.s32.totalorder %s34, 1
      %p99 = por %p97, %p98
      %p100 = scmp.ne.s32.totalorder %s91, %s92
      %p101 = scmp.eq.s32.totalorder %s34, 0
      %p102 = por %p100, %p101
      %p103 = scmp.ne.s32.totalorder %s91, %s92
      %p104 = scmp.eq.s32.totalorder %s35, 1
      %p105 = por %p103, %p104
      %p107 = scmp.ne.s32.totalorder %s92, %s106
      %p108 = scmp.eq.s32.totalorder %s35, 0
      %p109 = por %p107, %p108
      %s111 = sadd.s32 %s110, 1
      %p114 = scmp.eq.s32.totalorder %s29, 1
      %p115 = scmp.ne.s32.totalorder %s110, %s112
      %p116 = scmp.eq.s32.totalorder %s29, 0
      %p117 = por %p115, %p116
      %p118 = scmp.ne.s32.totalorder %s110, %s112
      %p119 = scmp.eq.s32.totalorder %s34, 1
      %p120 = por %p118, %p119
      %p121 = scmp.ne.s32.totalorder %s112, %s113
      %p122 = scmp.eq.s32.totalorder %s34, 0
      %p123 = por %p121, %p122
      %p124 = scmp.ne.s32.totalorder %s112, %s113
      %p125 = scmp.eq.s32.totalorder %s35, 1
      %p126 = por %p124, %p125
      %p128 = scmp.ne.s32.totalorder %s113, %s127
      %p129 = scmp.eq.s32.totalorder %s35, 0
      %p130 = por %p128, %p129
      %s132 = sadd.s32 %s131, 1
      %p135 = scmp.eq.s32.totalorder %s29, 1
      %p136 = scmp.ne.s32.totalorder %s131, %s133
      %p137 = scmp.eq.s32.totalorder %s29, 0
      %p138 = por %p136, %p137
      %p139 = scmp.ne.s32.totalorder %s131, %s133
      %p140 = scmp.eq.s32.totalorder %s34, 1
      %p141 = por %p139, %p140
      %p142 = scmp.ne.s32.totalorder %s133, %s134
      %p143 = scmp.eq.s32.totalorder %s34, 0
      %p144 = por %p142, %p143
      %p145 = scmp.ne.s32.totalorder %s133, %s134
      %p146 = scmp.eq.s32.totalorder %s35, 1
      %p147 = por %p145, %p146
      %p149 = scmp.ne.s32.totalorder %s134, %s148
      %p150 = scmp.eq.s32.totalorder %s35, 0
      %p151 = por %p149, %p150
      %s153 = sadd.s32 %s152, 1
      %p156 = scmp.eq.s32.totalorder %s29, 1
      %p157 = scmp.ne.s32.totalorder %s152, %s154
      %p158 = scmp.eq.s32.totalorder %s29, 0
      %p159 = por %p157, %p158
      %p160 = scmp.ne.s32.totalorder %s152, %s154
      %p161 = scmp.eq.s32.totalorder %s34, 1
      %p162 = por %p160, %p161
      %p163 = scmp.ne.s32.totalorder %s154, %s155
      %p164 = scmp.eq.s32.totalorder %s34, 0
      %p165 = por %p163, %p164
      %p166 = scmp.ne.s32.totalorder %s154, %s155
      %p167 = scmp.eq.s32.totalorder %s35, 1
      %p168 = por %p166, %p167
      %p170 = scmp.ne.s32.totalorder %s155, %s169
      %p171 = scmp.eq.s32.totalorder %s35, 0
      %p172 = por %p170, %p171
      %s174 = sadd.s32 %s173, 1
      %p177 = scmp.eq.s32.totalorder %s29, 1
      %p178 = scmp.ne.s32.totalorder %s173, %s175
      %p179 = scmp.eq.s32.totalorder %s29, 0
      %p180 = por %p178, %p179
      %p181 = scmp.ne.s32.totalorder %s173, %s175
      %p182 = scmp.eq.s32.totalorder %s34, 1
      %p183 = por %p181, %p182
      %p184 = scmp.ne.s32.totalorder %s175, %s176
      %p185 = scmp.eq.s32.totalorder %s34, 0
      %p186 = por %p184, %p185
      %p187 = scmp.ne.s32.totalorder %s175, %s176
      %p188 = scmp.eq.s32.totalorder %s35, 1
      %p189 = por %p187, %p188
      %p191 = scmp.ne.s32.totalorder %s176, %s190
      %p192 = scmp.eq.s32.totalorder %s35, 0
      %p193 = por %p191, %p192
      %s195 = sadd.s32 %s194, 1
      %p198 = scmp.eq.s32.totalorder %s29, 1
      %p199 = scmp.ne.s32.totalorder %s194, %s196
      %p200 = scmp.eq.s32.totalorder %s29, 0
      %p201 = por %p199, %p200
      %p202 = scmp.ne.s32.totalorder %s194, %s196
      %p203 = scmp.eq.s32.totalorder %s34, 1
      %p204 = por %p202, %p203
      %p205 = scmp.ne.s32.totalorder %s196, %s197
      %p206 = scmp.eq.s32.totalorder %s34, 0
      %p207 = por %p205, %p206
      %p208 = scmp.ne.s32.totalorder %s196, %s197
      %p209 = scmp.eq.s32.totalorder %s35, 1
      %p210 = por %p208, %p209
      %p212 = scmp.ne.s32.totalorder %s197, %s211
      %p213 = scmp.eq.s32.totalorder %s35, 0
      %p214 = por %p212, %p213
      %s216 = sadd.s32 %s215, 1
      %p219 = scmp.eq.s32.totalorder %s29, 1
      %p220 = scmp.ne.s32.totalorder %s215, %s217
      %p221 = scmp.eq.s32.totalorder %s29, 0
      %p222 = por %p220, %p221
      %p223 = scmp.ne.s32.totalorder %s215, %s217
      %p224 = scmp.eq.s32.totalorder %s34, 1
      %p225 = por %p223, %p224
      %p226 = scmp.ne.s32.totalorder %s217, %s218
      %p227 = scmp.eq.s32.totalorder %s34, 0
      %p228 = por %p226, %p227
      %p229 = scmp.ne.s32.totalorder %s217, %s218
      %p230 = scmp.eq.s32.totalorder %s35, 1
      %p231 = por %p229, %p230
      %p233 = scmp.ne.s32.totalorder %s218, %s232
      %p234 = scmp.eq.s32.totalorder %s35, 0
      %p235 = por %p233, %p234
      %s237 = sadd.s32 %s236, 1
      %p240 = scmp.eq.s32.totalorder %s29, 1
      %p241 = scmp.ne.s32.totalorder %s236, %s238
      %p242 = scmp.eq.s32.totalorder %s29, 0
      %p243 = por %p241, %p242
      %p244 = scmp.ne.s32.totalorder %s236, %s238
      %p245 = scmp.eq.s32.totalorder %s34, 1
      %p246 = por %p244, %p245
      %p247 = scmp.ne.s32.totalorder %s238, %s239
      %p248 = scmp.eq.s32.totalorder %s34, 0
      %p249 = por %p247, %p248
      %p250 = scmp.ne.s32.totalorder %s238, %s239
      %p251 = scmp.eq.s32.totalorder %s35, 1
      %p252 = por %p250, %p251
      %p254 = scmp.ne.s32.totalorder %s239, %s253
      %p255 = scmp.eq.s32.totalorder %s35, 0
      %p256 = por %p254, %p255
      %s258 = sadd.s32 %s257, 1
      %p261 = scmp.eq.s32.totalorder %s29, 1
      %p262 = scmp.ne.s32.totalorder %s257, %s259
      %p263 = scmp.eq.s32.totalorder %s29, 0
      %p264 = por %p262, %p263
      %p265 = scmp.ne.s32.totalorder %s257, %s259
      %p266 = scmp.eq.s32.totalorder %s34, 1
      %p267 = por %p265, %p266
      %p268 = scmp.ne.s32.totalorder %s259, %s260
      %p269 = scmp.eq.s32.totalorder %s34, 0
      %p270 = por %p268, %p269
      %p271 = scmp.ne.s32.totalorder %s259, %s260
      %p272 = scmp.eq.s32.totalorder %s35, 1
      %p273 = por %p271, %p272
      %p275 = scmp.ne.s32.totalorder %s260, %s274
      %p276 = scmp.eq.s32.totalorder %s35, 0
      %p277 = por %p275, %p276
      %s279 = sadd.s32 %s278, 1
      %p282 = scmp.eq.s32.totalorder %s29, 1
      %p283 = scmp.ne.s32.totalorder %s278, %s280
      %p284 = scmp.eq.s32.totalorder %s29, 0
      %p285 = por %p283, %p284
      %p286 = scmp.ne.s32.totalorder %s278, %s280
      %p287 = scmp.eq.s32.totalorder %s34, 1
      %p288 = por %p286, %p287
      %p289 = scmp.ne.s32.totalorder %s280, %s281
      %p290 = scmp.eq.s32.totalorder %s34, 0
      %p291 = por %p289, %p290
      %p292 = scmp.ne.s32.totalorder %s280, %s281
      %p293 = scmp.eq.s32.totalorder %s35, 1
      %p294 = por %p292, %p293
      %p296 = scmp.ne.s32.totalorder %s281, %s295
      %p297 = scmp.eq.s32.totalorder %s35, 0
      %p298 = por %p296, %p297
      %s300 = sadd.s32 %s299, 1
      %p303 = scmp.eq.s32.totalorder %s29, 1
      %p304 = scmp.ne.s32.totalorder %s299, %s301
      %p305 = scmp.eq.s32.totalorder %s29, 0
      %p306 = por %p304, %p305
      %p307 = scmp.ne.s32.totalorder %s299, %s301
      %p308 = scmp.eq.s32.totalorder %s34, 1
      %p309 = por %p307, %p308
      %p310 = scmp.ne.s32.totalorder %s301, %s302
      %p311 = scmp.eq.s32.totalorder %s34, 0
      %p312 = por %p310, %p311
      %p313 = scmp.ne.s32.totalorder %s301, %s302
      %p314 = scmp.eq.s32.totalorder %s35, 1
      %p315 = por %p313, %p314
      %p317 = scmp.ne.s32.totalorder %s302, %s316
      %p318 = scmp.eq.s32.totalorder %s35, 0
      %p319 = por %p317, %p318
      %s321 = sadd.s32 %s320, 1
      %p324 = scmp.eq.s32.totalorder %s29, 1
      %p325 = scmp.ne.s32.totalorder %s320, %s322
      %p326 = scmp.eq.s32.totalorder %s29, 0
      %p327 = por %p325, %p326
      %p328 = scmp.ne.s32.totalorder %s320, %s322
      %p329 = scmp.eq.s32.totalorder %s34, 1
      %p330 = por %p328, %p329
      %p331 = scmp.ne.s32.totalorder %s322, %s323
      %p332 = scmp.eq.s32.totalorder %s34, 0
      %p333 = por %p331, %p332
      %p334 = scmp.ne.s32.totalorder %s322, %s323
      %p335 = scmp.eq.s32.totalorder %s35, 1
      %p336 = por %p334, %p335
      %p338 = scmp.ne.s32.totalorder %s323, %s337
      %p339 = scmp.eq.s32.totalorder %s35, 0
      %p340 = por %p338, %p339
      %s342 = sadd.s32 %s341, 1
      %p345 = scmp.eq.s32.totalorder %s29, 1
      %p346 = scmp.ne.s32.totalorder %s341, %s343
      %p347 = scmp.eq.s32.totalorder %s29, 0
      %p348 = por %p346, %p347
      %p349 = scmp.ne.s32.totalorder %s341, %s343
      %p350 = scmp.eq.s32.totalorder %s34, 1
      %p351 = por %p349, %p350
      %p352 = scmp.ne.s32.totalorder %s343, %s344
      %p353 = scmp.eq.s32.totalorder %s34, 0
      %p354 = por %p352, %p353
      %p355 = scmp.ne.s32.totalorder %s343, %s344
      %p356 = scmp.eq.s32.totalorder %s35, 1
      %p357 = por %p355, %p356
      %p359 = scmp.ne.s32.totalorder %s344, %s358
      %p360 = scmp.eq.s32.totalorder %s35, 0
      %p361 = por %p359, %p360
      %s363 = sadd.s32 %s362, 1
      %p366 = scmp.eq.s32.totalorder %s29, 1
      %p367 = scmp.ne.s32.totalorder %s362, %s364
      %p368 = scmp.eq.s32.totalorder %s29, 0
      %p369 = por %p367, %p368
      %p370 = scmp.ne.s32.totalorder %s362, %s364
      %p371 = scmp.eq.s32.totalorder %s34, 1
      %p372 = por %p370, %p371
      %p373 = scmp.ne.s32.totalorder %s364, %s365
      %p374 = scmp.eq.s32.totalorder %s34, 0
      %p375 = por %p373, %p374
      %p376 = scmp.ne.s32.totalorder %s364, %s365
      %p377 = scmp.eq.s32.totalorder %s35, 1
      %p378 = por %p376, %p377
      %p380 = scmp.ne.s32.totalorder %s365, %s379
      %p381 = scmp.eq.s32.totalorder %s35, 0
      %p382 = por %p380, %p381
      %s384 = sadd.s32 %s383, 1
      %p387 = scmp.eq.s32.totalorder %s29, 1
      %p388 = scmp.ne.s32.totalorder %s383, %s385
      %p389 = scmp.eq.s32.totalorder %s29, 0
      %p390 = por %p388, %p389
      %p391 = scmp.ne.s32.totalorder %s383, %s385
      %p392 = scmp.eq.s32.totalorder %s34, 1
      %p393 = por %p391, %p392
      %p394 = scmp.ne.s32.totalorder %s385, %s386
      %p395 = scmp.eq.s32.totalorder %s34, 0
      %p396 = por %p394, %p395
      %p397 = scmp.ne.s32.totalorder %s385, %s386
      %p398 = scmp.eq.s32.totalorder %s35, 1
      %p399 = por %p397, %p398
      %p401 = scmp.ne.s32.totalorder %s386, %s400
      %p402 = scmp.eq.s32.totalorder %s35, 0
      %p403 = por %p401, %p402
      %s405 = sadd.s32 %s404, 1
      %p408 = scmp.eq.s32.totalorder %s29, 1
      %p409 = scmp.ne.s32.totalorder %s404, %s406
      %p410 = scmp.eq.s32.totalorder %s29, 0
      %p411 = por %p409, %p410
      %p412 = scmp.ne.s32.totalorder %s404, %s406
      %p413 = scmp.eq.s32.totalorder %s34, 1
      %p414 = por %p412, %p413
      %p415 = scmp.ne.s32.totalorder %s406, %s407
      %p416 = scmp.eq.s32.totalorder %s34, 0
      %p417 = por %p415, %p416
      %p418 = scmp.ne.s32.totalorder %s406, %s407
      %p419 = scmp.eq.s32.totalorder %s35, 1
      %p420 = por %p418, %p419
      %p422 = scmp.ne.s32.totalorder %s407, %s421
      %p423 = scmp.eq.s32.totalorder %s35, 0
      %p424 = por %p422, %p423
      %s426 = sadd.s32 %s425, 1
      %p429 = scmp.eq.s32.totalorder %s29, 1
      %p430 = scmp.ne.s32.totalorder %s425, %s427
      %p431 = scmp.eq.s32.totalorder %s29, 0
      %p432 = por %p430, %p431
      %p433 = scmp.ne.s32.totalorder %s425, %s427
      %p434 = scmp.eq.s32.totalorder %s34, 1
      %p435 = por %p433, %p434
      %p436 = scmp.ne.s32.totalorder %s427, %s428
      %p437 = scmp.eq.s32.totalorder %s34, 0
      %p438 = por %p436, %p437
      %p439 = scmp.ne.s32.totalorder %s427, %s428
      %p440 = scmp.eq.s32.totalorder %s35, 1
      %p441 = por %p439, %p440
      %p443 = scmp.ne.s32.totalorder %s428, %s442
      %p444 = scmp.eq.s32.totalorder %s35, 0
      %p445 = por %p443, %p444
      %s447 = sadd.s32 %s446, 1
      %p450 = scmp.eq.s32.totalorder %s29, 1
      %p451 = scmp.ne.s32.totalorder %s446, %s448
      %p452 = scmp.eq.s32.totalorder %s29, 0
      %p453 = por %p451, %p452
      %p454 = scmp.ne.s32.totalorder %s446, %s448
      %p455 = scmp.eq.s32.totalorder %s34, 1
      %p456 = por %p454, %p455
      %p457 = scmp.ne.s32.totalorder %s448, %s449
      %p458 = scmp.eq.s32.totalorder %s34, 0
      %p459 = por %p457, %p458
      %p460 = scmp.ne.s32.totalorder %s448, %s449
      %p461 = scmp.eq.s32.totalorder %s35, 1
      %p462 = por %p460, %p461
      %p464 = scmp.ne.s32.totalorder %s449, %s463
      %p465 = scmp.eq.s32.totalorder %s35, 0
      %p466 = por %p464, %p465
      %s467 = ssub.s32 %s29, %s36
      %p468 = scmp.eq.s32.totalorder %s467, 0
      %s470 = sadd.s32 %s469, 1
      %s471 = scalar_select %p468, %s469, %s470
      %p474 = pneg %p468
      %p475 = scmp.eq.s32.totalorder %s29, 1
      %p476 = por %p474, %p475
      %p477 = scmp.ne.s32.totalorder %s469, %s472
      %p478 = scmp.eq.s32.totalorder %s29, 0
      %p479 = por %p477, %p478
      %p480 = scmp.ne.s32.totalorder %s469, %s472
      %p481 = scmp.eq.s32.totalorder %s34, 1
      %p482 = por %p480, %p481
      %p483 = scmp.ne.s32.totalorder %s472, %s473
      %p484 = scmp.eq.s32.totalorder %s34, 0
      %p485 = por %p483, %p484
      %p486 = scmp.ne.s32.totalorder %s472, %s473
      %p487 = scmp.eq.s32.totalorder %s35, 1
      %p488 = por %p486, %p487
      %p490 = scmp.ne.s32.totalorder %s473, %s489
      %p491 = scmp.eq.s32.totalorder %s35, 0
      %p492 = por %p490, %p491
      %p493 = scmp.le.s32.totalorder 1, %s29
      %p494 = scmp.lt.s32.totalorder %s29, 3
      %p495 = pnand %p493, %p494
      %p496 = pneg %p495
      // Predicated region
      $region9: #{custom_transformer.3} parent=5 // pred_check
        _
      $region10: #{custom_transformer.3} parent=5 // pred_check_branch
        %498 = sbr.rel (%p495) target = $region12
      $region11: #{custom_transformer.3} parent=5 // pred_region
        %s499 = ssub.s32 %s29, 1
        // Predicated region
        $region13: #{custom_transformer.3} parent=11 // pred_check
          %p500 = pneg %p102
        $region14: #{custom_transformer.3} parent=11 // pred_check_branch
          %502 = sbr.rel (%p500) target = $region16
        $region15: #{custom_transformer.3} parent=11 // pred_region
          _
        $region16: #{custom_transformer.3} parent=11 // pred_fallthru
          _
        // Predicated region
        $region17: #{custom_transformer.3} parent=11 // pred_check
          %p503 = pneg %p123
        $region18: #{custom_transformer.3} parent=11 // pred_check_branch
          %505 = sbr.rel (%p503) target = $region20
        $region19: #{custom_transformer.3} parent=11 // pred_region
          _
        $region20: #{custom_transformer.3} parent=11 // pred_fallthru
          _
        // Predicated region
        $region21: #{custom_transformer.3} parent=11 // pred_check
          %p506 = pneg %p144
        $region22: #{custom_transformer.3} parent=11 // pred_check_branch
          %508 = sbr.rel (%p506) target = $region24
        $region23: #{custom_transformer.3} parent=11 // pred_region
          _
        $region24: #{custom_transformer.3} parent=11 // pred_fallthru
          _
        // Predicated region
        $region25: #{custom_transformer.3} parent=11 // pred_check
          %p509 = pneg %p165
        $region26: #{custom_transformer.3} parent=11 // pred_check_branch
          %511 = sbr.rel (%p509) target = $region28
        $region27: #{custom_transformer.3} parent=11 // pred_region
          _
        $region28: #{custom_transformer.3} parent=11 // pred_fallthru
          _
        // Predicated region
        $region29: #{custom_transformer.3} parent=11 // pred_check
          %p512 = pneg %p186
        $region30: #{custom_transformer.3} parent=11 // pred_check_branch
          %514 = sbr.rel (%p512) target = $region32
        $region31: #{custom_transformer.3} parent=11 // pred_region
          _
        $region32: #{custom_transformer.3} parent=11 // pred_fallthru
          _
        // Predicated region
        $region33: #{custom_transformer.3} parent=11 // pred_check
          %p515 = pneg %p207
        $region34: #{custom_transformer.3} parent=11 // pred_check_branch
          %517 = sbr.rel (%p515) target = $region36
        $region35: #{custom_transformer.3} parent=11 // pred_region
          _
        $region36: #{custom_transformer.3} parent=11 // pred_fallthru
          _
        // Predicated region
        $region37: #{custom_transformer.3} parent=11 // pred_check
          %p518 = pneg %p228
        $region38: #{custom_transformer.3} parent=11 // pred_check_branch
          %520 = sbr.rel (%p518) target = $region40
        $region39: #{custom_transformer.3} parent=11 // pred_region
          _
        $region40: #{custom_transformer.3} parent=11 // pred_fallthru
          _
        // Predicated region
        $region41: #{custom_transformer.3} parent=11 // pred_check
          %p521 = pneg %p249
        $region42: #{custom_transformer.3} parent=11 // pred_check_branch
          %523 = sbr.rel (%p521) target = $region44
        $region43: #{custom_transformer.3} parent=11 // pred_region
          _
        $region44: #{custom_transformer.3} parent=11 // pred_fallthru
          _
        // Predicated region
        $region45: #{custom_transformer.3} parent=11 // pred_check
          %p524 = pneg %p270
        $region46: #{custom_transformer.3} parent=11 // pred_check_branch
          %526 = sbr.rel (%p524) target = $region48
        $region47: #{custom_transformer.3} parent=11 // pred_region
          _
        $region48: #{custom_transformer.3} parent=11 // pred_fallthru
          _
        // Predicated region
        $region49: #{custom_transformer.3} parent=11 // pred_check
          %p527 = pneg %p291
        $region50: #{custom_transformer.3} parent=11 // pred_check_branch
          %529 = sbr.rel (%p527) target = $region52
        $region51: #{custom_transformer.3} parent=11 // pred_region
          _
        $region52: #{custom_transformer.3} parent=11 // pred_fallthru
          _
        // Predicated region
        $region53: #{custom_transformer.3} parent=11 // pred_check
          %p530 = pneg %p312
        $region54: #{custom_transformer.3} parent=11 // pred_check_branch
          %532 = sbr.rel (%p530) target = $region56
        $region55: #{custom_transformer.3} parent=11 // pred_region
          _
        $region56: #{custom_transformer.3} parent=11 // pred_fallthru
          _
        // Predicated region
        $region57: #{custom_transformer.3} parent=11 // pred_check
          %p533 = pneg %p333
        $region58: #{custom_transformer.3} parent=11 // pred_check_branch
          %535 = sbr.rel (%p533) target = $region60
        $region59: #{custom_transformer.3} parent=11 // pred_region
          _
        $region60: #{custom_transformer.3} parent=11 // pred_fallthru
          _
        // Predicated region
        $region61: #{custom_transformer.3} parent=11 // pred_check
          %p536 = pneg %p354
        $region62: #{custom_transformer.3} parent=11 // pred_check_branch
          %538 = sbr.rel (%p536) target = $region64
        $region63: #{custom_transformer.3} parent=11 // pred_region
          _
        $region64: #{custom_transformer.3} parent=11 // pred_fallthru
          _
        // Predicated region
        $region65: #{custom_transformer.3} parent=11 // pred_check
          %p539 = pneg %p375
        $region66: #{custom_transformer.3} parent=11 // pred_check_branch
          %541 = sbr.rel (%p539) target = $region68
        $region67: #{custom_transformer.3} parent=11 // pred_region
          _
        $region68: #{custom_transformer.3} parent=11 // pred_fallthru
          _
        // Predicated region
        $region69: #{custom_transformer.3} parent=11 // pred_check
          %p542 = pneg %p396
        $region70: #{custom_transformer.3} parent=11 // pred_check_branch
          %544 = sbr.rel (%p542) target = $region72
        $region71: #{custom_transformer.3} parent=11 // pred_region
          _
        $region72: #{custom_transformer.3} parent=11 // pred_fallthru
          _
        // Predicated region
        $region73: #{custom_transformer.3} parent=11 // pred_check
          %p545 = pneg %p417
        $region74: #{custom_transformer.3} parent=11 // pred_check_branch
          %547 = sbr.rel (%p545) target = $region76
        $region75: #{custom_transformer.3} parent=11 // pred_region
          _
        $region76: #{custom_transformer.3} parent=11 // pred_fallthru
          _
        // Predicated region
        $region77: #{custom_transformer.3} parent=11 // pred_check
          %p548 = pneg %p438
        $region78: #{custom_transformer.3} parent=11 // pred_check_branch
          %550 = sbr.rel (%p548) target = $region80
        $region79: #{custom_transformer.3} parent=11 // pred_region
          _
        $region80: #{custom_transformer.3} parent=11 // pred_fallthru
          _
        // Predicated region
        $region81: #{custom_transformer.3} parent=11 // pred_check
          %p551 = pneg %p459
        $region82: #{custom_transformer.3} parent=11 // pred_check_branch
          %553 = sbr.rel (%p551) target = $region84
        $region83: #{custom_transformer.3} parent=11 // pred_region
          _
        $region84: #{custom_transformer.3} parent=11 // pred_fallthru
          _
      $region12: #{custom_transformer.3} parent=5 // pred_fallthru
        _
      %p554 = scmp.lt.s32.totalorder %s29, 2
      // Predicated region
      $region85: #{custom_transformer.3} parent=5 // pred_check
        %p555 = pneg %p554
      $region86: #{custom_transformer.3} parent=5 // pred_check_branch
        %557 = sbr.rel (%p555) target = $region88
      $region87: #{custom_transformer.3} parent=5 // pred_region
        // Predicated region
        $region89: #{custom_transformer.3} parent=87 // pred_check
          %p558 = pneg %p49
        $region90: #{custom_transformer.3} parent=87 // pred_check_branch
          %560 = sbr.rel (%p558) target = $region92
        $region91: #{custom_transformer.3} parent=87 // pred_region
          %p561 = scmp.lt.s32.totalorder %s29, 1
          %s562 = scalar_select %p561, %s29, 1
          %s563 = smul.addr %s562, 8
          %s564 = scalar_lea.vmem %s0, %s563
        $region92: #{custom_transformer.3} parent=87 // pred_fallthru
          _
        // Predicated region
        $region93: #{custom_transformer.3} parent=87 // pred_check
          %p565 = pneg %p75
        $region94: #{custom_transformer.3} parent=87 // pred_check_branch
          %567 = sbr.rel (%p565) target = $region96
        $region95: #{custom_transformer.3} parent=87 // pred_region
          %p568 = scmp.lt.s32.totalorder %s29, 1
          %s569 = scalar_select %p568, %s29, 1
          %s570 = smul.addr %s569, 2
          %s571 = smul.addr %s570, 8
          %s572 = scalar_lea.vmem %s1, %s571
        $region96: #{custom_transformer.3} parent=87 // pred_fallthru
          _
      $region88: #{custom_transformer.3} parent=5 // pred_fallthru
        _
      %p573 = scmp.le.s32.totalorder 1, %s29
      %p574 = scmp.lt.s32.totalorder %s29, 3
      %p575 = pnand %p573, %p574
      %p576 = pneg %p575
      // Predicated region
      $region97: #{custom_transformer.3} parent=5 // pred_check
        _
      $region98: #{custom_transformer.3} parent=5 // pred_check_branch
        %578 = sbr.rel (%p575) target = $region100
      $region99: #{custom_transformer.3} parent=5 // pred_region
        %s579 = ssub.s32 %s29, 1
        %p580 = scmp.lt.s32.totalorder %s34, 1
        %s581 = scalar_select %p580, %s34, 1
        %s582 = smul.addr %s581, 8
        %s583 = scalar_lea.vmem %s0, %s582
        %p584 = pneg %p55
        %p585 = pneg %p52
        %p586 = scmp.lt.s32.totalorder %s34, 1
        %s587 = scalar_select %p586, %s34, 1
        %s588 = smul.addr %s587, 2
        %s589 = smul.addr %s588, 8
        %s590 = scalar_lea.vmem %s1, %s589
        %p591 = pneg %p81
        %p592 = pneg %p78
        %p593 = pneg %p102
        %p594 = pneg %p99
        %p595 = pneg %p123
        %p596 = pneg %p120
        %p597 = pneg %p144
        %p598 = pneg %p141
        %p599 = pneg %p165
        %p600 = pneg %p162
        %p601 = pneg %p186
        %p602 = pneg %p183
        %p603 = pneg %p207
        %p604 = pneg %p204
        %p605 = pneg %p228
        %p606 = pneg %p225
        %p607 = pneg %p249
        %p608 = pneg %p246
        %p609 = pneg %p270
        %p610 = pneg %p267
        %p611 = pneg %p291
        %p612 = pneg %p288
        %p613 = pneg %p312
        %p614 = pneg %p309
        %p615 = pneg %p333
        %p616 = pneg %p330
        %p617 = pneg %p354
        %p618 = pneg %p351
        %p619 = pneg %p375
        %p620 = pneg %p372
        %p621 = pneg %p396
        %p622 = pneg %p393
        %p623 = pneg %p417
        %p624 = pneg %p414
        %p625 = pneg %p438
        %p626 = pneg %p435
        %p627 = pneg %p459
        %p628 = pneg %p456
        %p629 = pneg %p485
        %p630 = pneg %p482
        %s631 = sand.u32 %s472, 1
        %s632 = scalar_lea.sflag [#allocation4], %s631
        %s633 = sand.u32 %s472, 1
        %s634 = smul.addr %s633, 8
        %s635 = scalar_lea.vmem [#allocation3], %s634
        %p636 = scmp.lt.s32.totalorder %s34, 1
        %s637 = scalar_select %p636, %s34, 1
        %s638 = smul.addr %s637, 8
        %s639 = scalar_lea.vmem %s0, %s638
        %p640 = scmp.lt.s32.totalorder %s34, 1
        %s641 = scalar_select %p640, %s34, 1
        %s642 = smul.addr %s641, 2
        %s643 = smul.addr %s642, 8
        %s644 = scalar_lea.vmem %s1, %s643
        %v646 = vld [vmem:[%s639] sm:$0xff]
        %v647 = vld [vmem:[%s644] sm:$0xff]
        %v648 = vld [vmem:[%s644 + $0x8] sm:$0xff]
        %v649 = vld [vmem:[%s2] sm:$0xff]
        %v650 = vld [vmem:[%s2 + $0x8] sm:$0xf]
        %v651 = vld [vmem:[%s2 + $0xc] sm:$0xff]
        %v652 = vld [vmem:[%s2 + $0x14] sm:$0xf]
        %v653 = vld [vmem:[%s2 + $0x18] sm:$0xff]
        %v654 = vld [vmem:[%s2 + $0x20] sm:$0xf]
        %v655 = vld [vmem:[%s2 + $0x24] sm:$0xff]
        %v656 = vld [vmem:[%s2 + $0x2c] sm:$0xf]
        %v657 = vld [vmem:[%s2 + $0x30] sm:$0xff]
        %v658 = vld [vmem:[%s2 + $0x38] sm:$0xf]
        %v659 = vld [vmem:[%s2 + $0x3c] sm:$0xff]
        %v660 = vld [vmem:[%s2 + $0x44] sm:$0xf]
        %v661 = vld [vmem:[%s2 + $0x48] sm:$0xff]
        %v662 = vld [vmem:[%s2 + $0x50] sm:$0xf]
        %v663 = vld [vmem:[%s2 + $0x54] sm:$0xff]
        %v664 = vld [vmem:[%s2 + $0x5c] sm:$0xf]
        %v665 = vld [vmem:[%s2 + $0x60] sm:$0xff]
        %v666 = vld [vmem:[%s2 + $0x68] sm:$0xf]
        %v667 = vld [vmem:[%s2 + $0x6c] sm:$0xff]
        %v668 = vld [vmem:[%s2 + $0x74] sm:$0xf]
        %v669 = vld [vmem:[%s2 + $0x78] sm:$0xff]
        %v670 = vld [vmem:[%s2 + $0x80] sm:$0xf]
        %v671 = vld [vmem:[%s2 + $0x84] sm:$0xff]
        %v672 = vld [vmem:[%s2 + $0x8c] sm:$0xf]
        %v673 = vld [vmem:[%s2 + $0x90] sm:$0xff]
        %v674 = vld [vmem:[%s2 + $0x98] sm:$0xf]
        %v675 = vld [vmem:[%s2 + $0x9c] sm:$0xff]
        %v676 = vld [vmem:[%s2 + $0xa4] sm:$0xf]
        %v677 = vld [vmem:[%s2 + $0xa8] sm:$0xff]
        %v678 = vld [vmem:[%s2 + $0xb0] sm:$0xf]
        %v679 = vld [vmem:[%s2 + $0xb4] sm:$0xff]
        %v680 = vld [vmem:[%s2 + $0xbc] sm:$0xf]
        %v681 = vpack.c.bf16 %v646, %v646
        %v682 = vld [vmem:[%s3] sm:$0x7]
        %v683 = vunpack.c.l.bf16 %v682
        %v685 = vperm.slane %v683, 0
        %v686 = vperm.slane %v683, 2
        %v687 = vperm.slane %v683, 4
        %v691 = vperm.slane %v685, 0
        %v692 = vperm.slane %v686, 0
        %v693 = vperm.slane %v687, 0
        %v726 = vunpack.c.l.b16 %v649
        %v727 = vunpack.c.h.b16 %v649
        %v728 = vunpack.c.l.b16 %v650
        %v729 = vunpack.c.l.b16 %v651
        %v730 = vunpack.c.h.b16 %v651
        %v731 = vunpack.c.l.b16 %v652
        %v732 = vunpack.c.l.b16 %v653
        %v733 = vunpack.c.h.b16 %v653
        %v734 = vunpack.c.l.b16 %v654
        %v735 = vunpack.c.l.b16 %v655
        %v736 = vunpack.c.h.b16 %v655
        %v737 = vunpack.c.l.b16 %v656
        %v738 = vunpack.c.l.b16 %v657
        %v739 = vunpack.c.h.b16 %v657
        %v740 = vunpack.c.l.b16 %v658
        %v741 = vunpack.c.l.b16 %v659
        %v742 = vunpack.c.h.b16 %v659
        %v743 = vunpack.c.l.b16 %v660
        %v744 = vunpack.c.l.b16 %v661
        %v745 = vunpack.c.h.b16 %v661
        %v746 = vunpack.c.l.b16 %v662
        %v747 = vunpack.c.l.b16 %v663
        %v748 = vunpack.c.h.b16 %v663
        %v749 = vunpack.c.l.b16 %v664
        %v750 = vunpack.c.l.b16 %v665
        %v751 = vunpack.c.h.b16 %v665
        %v752 = vunpack.c.l.b16 %v666
        %v753 = vunpack.c.l.b16 %v667
        %v754 = vunpack.c.h.b16 %v667
        %v755 = vunpack.c.l.b16 %v668
        %v756 = vunpack.c.l.b16 %v669
        %v757 = vunpack.c.h.b16 %v669
        %v758 = vunpack.c.l.b16 %v670
        %v759 = vunpack.c.l.b16 %v671
        %v760 = vunpack.c.h.b16 %v671
        %v761 = vunpack.c.l.b16 %v672
        %v762 = vunpack.c.l.b16 %v673
        %v763 = vunpack.c.h.b16 %v673
        %v764 = vunpack.c.l.b16 %v674
        %v765 = vunpack.c.l.b16 %v675
        %v766 = vunpack.c.h.b16 %v675
        %v767 = vunpack.c.l.b16 %v676
        %v768 = vunpack.c.l.b16 %v677
        %v769 = vunpack.c.h.b16 %v677
        %v770 = vunpack.c.l.b16 %v678
        %v771 = vunpack.c.l.b16 %v679
        %v772 = vunpack.c.h.b16 %v679
        %v773 = vunpack.c.l.b16 %v680
        %v774 = vpack.c.b16 %v729, %v726
        %v775 = vpack.c.b16 %v730, %v727
        %v776 = vpack.c.b16 %v731, %v728
        %v777 = vpack.c.b16 %v735, %v732
        %v778 = vpack.c.b16 %v736, %v733
        %v779 = vpack.c.b16 %v737, %v734
        %v780 = vpack.c.b16 %v741, %v738
        %v781 = vpack.c.b16 %v742, %v739
        %v782 = vpack.c.b16 %v743, %v740
        %v783 = vpack.c.b16 %v747, %v744
        %v784 = vpack.c.b16 %v748, %v745
        %v785 = vpack.c.b16 %v749, %v746
        %v786 = vpack.c.b16 %v753, %v750
        %v787 = vpack.c.b16 %v754, %v751
        %v788 = vpack.c.b16 %v755, %v752
        %v789 = vpack.c.b16 %v759, %v756
        %v790 = vpack.c.b16 %v760, %v757
        %v791 = vpack.c.b16 %v761, %v758
        %v792 = vpack.c.b16 %v765, %v762
        %v793 = vpack.c.b16 %v766, %v763
        %v794 = vpack.c.b16 %v767, %v764
        %v795 = vpack.c.b16 %v771, %v768
        %v796 = vpack.c.b16 %v772, %v769
        %v797 = vpack.c.b16 %v773, %v770
        %822 = vmatpush.bf16.msra.mxu0 %v795
        %823 = vmatpush.bf16.msra.mxu0 %v792
        %824 = vmatpush.bf16.msra.mxu0 %v789
        %825 = vmatpush.bf16.msra.mxu0 %v786
        %826 = vmatpush.bf16.msra.mxu0 %v783
        %827 = vmatpush.bf16.msra.mxu0 %v780
        %828 = vmatpush.bf16.msra.mxu0 %v777
        %829 = vmatpush.bf16.msra.mxu0 %v774
        %830 = vmatmul.bf16.gmra.mxu0 %v681
        %v831 = vpop.f32.mrf.mxu0
        %v832 = vadd.f32 %v691, %v831
        %v833 = vpop.f32.mrf.mxu0
        %834 = vdwg.mxu0
        %835 = vmatpush.bf16.msra.mxu0 %v796
        %836 = vmatpush.bf16.msra.mxu0 %v793
        %837 = vmatpush.bf16.msra.mxu0 %v790
        %838 = vmatpush.bf16.msra.mxu0 %v787
        %839 = vmatpush.bf16.msra.mxu0 %v784
        %840 = vmatpush.bf16.msra.mxu0 %v781
        %841 = vmatpush.bf16.msra.mxu0 %v778
        %842 = vmatpush.bf16.msra.mxu0 %v775
        %843 = vmatmul.bf16.gmra.mxu0 %v681
        %v844 = vpop.f32.mrf.mxu0
        %v845 = vadd.f32 %v692, %v844
        %v846 = vpop.f32.mrf.mxu0
        %847 = vdwg.mxu0
        %848 = vmatpush.bf16.msra.mxu0 %v797
        %849 = vmatpush.bf16.msra.mxu0 %v794
        %850 = vmatpush.bf16.msra.mxu0 %v791
        %851 = vmatpush.bf16.msra.mxu0 %v788
        %852 = vmatpush.bf16.msra.mxu0 %v785
        %853 = vmatpush.bf16.msra.mxu0 %v782
        %854 = vmatpush.bf16.msra.mxu0 %v779
        %855 = vmatpush.bf16.msra.mxu0 %v776
        %856 = vmatmul.bf16.gmra.mxu0 %v681
        %v857 = vpop.f32.mrf.mxu0
        %v858 = vadd.f32 %v693, %v857
        %v859 = vpop.f32.mrf.mxu0
        %860 = vdwg.mxu0
        %v861 = vpack.c.bf16 %v845, %v832
        %v862 = vpack.c.bf16 %v858, %v858
        %v864 = vunpack.c.h.b16 %v861
        %v865 = vpack.c.b16 %v864, %v864
        %vm866 = vcmask 130048
        %v868 = vsel %vm866, %v861, 0
        %v871 = vsel %vm866, %v865, 0
        %873 = vmatpush.bf16.xpose.msra.mxu0 0
        %874 = vmatpush.bf16.xpose.msra.mxu0 0
        %875 = vmatpush.bf16.xpose.msra.mxu0 0
        %876 = vmatpush.bf16.xpose.msra.mxu0 0
        %877 = vmatpush.bf16.xpose.msra.mxu0 0
        %878 = vmatpush.bf16.xpose.msra.mxu0 0
        %879 = vmatpush.bf16.xpose.msra.mxu0 0
        %880 = vmatpush.bf16.xpose.msra.mxu0 %v871
        %881 = vmatmul.bf16.gmra.mxu0 %v868
        %v882 = vpop.f32.mrf.mxu0
        %v883 = vadd.f32 0.0, %v882
        %v884 = vpop.f32.mrf.mxu0
        %885 = vdwg.mxu0
        %vm886 = vcmask 64512
        %v887 = vsel %vm886, %v883, -inf
        %888 = vmax.xlane.f32.xlu0 %v887
        %v889 = vpop.xlane.xlu0 %888
        %v890 = vsub.f32 %v883, %v889
        %v891 = vmul.f32 %v890, 1.442695
        %v892 = vpow.pop %v891
        %v893 = vsel %vm886, %v892, 0.0
        %894 = vadd.xlane.f32.xlu0 %v893
        %v895 = vpop.xlane.xlu0 %894
        %v896 = vrcp.pop %v895
        %v897 = vmul.f32 %v892, %v896
        %v898 = vpack.c.bf16 %v897, %v897
        %v900 = vsel %vm886, %v898, 0
        %vm902 = vcmask 1043456
        %v904 = vsel %vm902, %v862, 0
        %906 = vmatpush.bf16.msra.mxu0 0
        %907 = vmatpush.bf16.msra.mxu0 0
        %908 = vmatpush.bf16.msra.mxu0 0
        %909 = vmatpush.bf16.msra.mxu0 0
        %910 = vmatpush.bf16.msra.mxu0 0
        %911 = vmatpush.bf16.msra.mxu0 0
        %912 = vmatpush.bf16.msra.mxu0 0
        %913 = vmatpush.bf16.msra.mxu0 %v904
        %914 = vmatmul.bf16.gmra.mxu0 %v900
        %v915 = vpop.f32.mrf.mxu0
        %v916 = vadd.f32 0.0, %v915
        %v917 = vpop.f32.mrf.mxu0
        %918 = vdwg.mxu0
        %919 = vst.msk [vmem:[#allocation2] sm:$0xff] %vm866, %v916
        %v920 = vunpack.c.l.b16 %v861
        %v921 = vpack.c.b16 %v920, %v920
        %922 = vrot.lane.b32.xlu0 %v921, 112
        %v923 = vpop.permute.xlu0 %922
        %924 = vrot.lane.b32.xlu0 %v865, 112
        %v925 = vpop.permute.xlu0 %924
        %v927 = vsel %vm866, %v923, 0
        %v930 = vsel %vm866, %v925, 0
        %932 = vmatpush.bf16.xpose.msra.mxu0 0
        %933 = vmatpush.bf16.xpose.msra.mxu0 0
        %934 = vmatpush.bf16.xpose.msra.mxu0 0
        %935 = vmatpush.bf16.xpose.msra.mxu0 0
        %936 = vmatpush.bf16.xpose.msra.mxu0 0
        %937 = vmatpush.bf16.xpose.msra.mxu0 0
        %938 = vmatpush.bf16.xpose.msra.mxu0 0
        %939 = vmatpush.bf16.xpose.msra.mxu0 %v930
        %940 = vmatmul.bf16.gmra.mxu0 %v927
        %v941 = vpop.f32.mrf.mxu0
        %v942 = vadd.f32 0.0, %v941
        %v943 = vpop.f32.mrf.mxu0
        %944 = vdwg.mxu0
        %v945 = vsel %vm886, %v942, -inf
        %946 = vmax.xlane.f32.xlu0 %v945
        %v947 = vpop.xlane.xlu0 %946
        %v948 = vsub.f32 %v942, %v947
        %v949 = vmul.f32 %v948, 1.442695
        %v950 = vpow.pop %v949
        %v951 = vsel %vm886, %v950, 0.0
        %952 = vadd.xlane.f32.xlu0 %v951
        %v953 = vpop.xlane.xlu0 %952
        %v954 = vrcp.pop %v953
        %v955 = vmul.f32 %v950, %v954
        %v956 = vpack.c.bf16 %v955, %v955
        %v958 = vunpack.c.l.b16 %v862
        %v959 = vpack.c.b16 %v958, %v958
        %960 = vrot.lane.b32.xlu0 %v959, 112
        %v961 = vpop.permute.xlu0 %960
        %v963 = vsel %vm886, %v956, 0
        %v966 = vsel %vm902, %v961, 0
        %968 = vmatpush.bf16.msra.mxu0 0
        %969 = vmatpush.bf16.msra.mxu0 0
        %970 = vmatpush.bf16.msra.mxu0 0
        %971 = vmatpush.bf16.msra.mxu0 0
        %972 = vmatpush.bf16.msra.mxu0 0
        %973 = vmatpush.bf16.msra.mxu0 0
        %974 = vmatpush.bf16.msra.mxu0 0
        %975 = vmatpush.bf16.msra.mxu0 %v966
        %976 = vmatmul.bf16.gmra.mxu0 %v963
        %v977 = vpop.f32.mrf.mxu0
        %v978 = vadd.f32 0.0, %v977
        %v979 = vpop.f32.mrf.mxu0
        %980 = vdwg.mxu0
        %982 = vrot.lane.b32.xlu0 %v978, 16
        %v983 = vpop.permute.xlu0 %982
        %vm985 = vcmask 261248
        %986 = vst.msk [vmem:[#allocation2] sm:$0xff] %vm985, %v983
        %987 = vrot.lane.b32.xlu0 %v921, 96
        %v988 = vpop.permute.xlu0 %987
        %989 = vrot.lane.b32.xlu0 %v865, 96
        %v990 = vpop.permute.xlu0 %989
        %v992 = vsel %vm866, %v988, 0
        %v995 = vsel %vm866, %v990, 0
        %997 = vmatpush.bf16.xpose.msra.mxu0 0
        %998 = vmatpush.bf16.xpose.msra.mxu0 0
        %999 = vmatpush.bf16.xpose.msra.mxu0 0
        %1000 = vmatpush.bf16.xpose.msra.mxu0 0
        %1001 = vmatpush.bf16.xpose.msra.mxu0 0
        %1002 = vmatpush.bf16.xpose.msra.mxu0 0
        %1003 = vmatpush.bf16.xpose.msra.mxu0 0
        %1004 = vmatpush.bf16.xpose.msra.mxu0 %v995
        %1005 = vmatmul.bf16.gmra.mxu0 %v992
        %v1006 = vpop.f32.mrf.mxu0
        %v1007 = vadd.f32 0.0, %v1006
        %v1008 = vpop.f32.mrf.mxu0
        %1009 = vdwg.mxu0
        %v1010 = vsel %vm886, %v1007, -inf
        %1011 = vmax.xlane.f32.xlu0 %v1010
        %v1012 = vpop.xlane.xlu0 %1011
        %v1013 = vsub.f32 %v1007, %v1012
        %v1014 = vmul.f32 %v1013, 1.442695
        %v1015 = vpow.pop %v1014
        %v1016 = vsel %vm886, %v1015, 0.0
        %1017 = vadd.xlane.f32.xlu0 %v1016
        %v1018 = vpop.xlane.xlu0 %1017
        %v1019 = vrcp.pop %v1018
        %v1020 = vmul.f32 %v1015, %v1019
        %v1021 = vpack.c.bf16 %v1020, %v1020
        %1022 = vrot.lane.b32.xlu0 %v959, 96
        %v1023 = vpop.permute.xlu0 %1022
        %v1025 = vsel %vm886, %v1021, 0
        %v1028 = vsel %vm902, %v1023, 0
        %1030 = vmatpush.bf16.msra.mxu0 0
        %1031 = vmatpush.bf16.msra.mxu0 0
        %1032 = vmatpush.bf16.msra.mxu0 0
        %1033 = vmatpush.bf16.msra.mxu0 0
        %1034 = vmatpush.bf16.msra.mxu0 0
        %1035 = vmatpush.bf16.msra.mxu0 0
        %1036 = vmatpush.bf16.msra.mxu0 0
        %1037 = vmatpush.bf16.msra.mxu0 %v1028
        %1038 = vmatmul.bf16.gmra.mxu0 %v1025
        %v1039 = vpop.f32.mrf.mxu0
        %v1040 = vadd.f32 0.0, %v1039
        %v1041 = vpop.f32.mrf.mxu0
        %1042 = vdwg.mxu0
        %1044 = vrot.lane.b32.xlu0 %v1040, 32
        %v1045 = vpop.permute.xlu0 %1044
        %vm1047 = vcmask 392448
        %1048 = vst.msk [vmem:[#allocation2] sm:$0xff] %vm1047, %v1045
        %1049 = vrot.lane.b32.xlu0 %v921, 80
        %v1050 = vpop.permute.xlu0 %1049
        %1051 = vrot.lane.b32.xlu0 %v865, 80
        %v1052 = vpop.permute.xlu0 %1051
        %v1054 = vsel %vm866, %v1050, 0
        %v1057 = vsel %vm866, %v1052, 0
        %1059 = vmatpush.bf16.xpose.msra.mxu0 0
        %1060 = vmatpush.bf16.xpose.msra.mxu0 0
        %1061 = vmatpush.bf16.xpose.msra.mxu0 0
        %1062 = vmatpush.bf16.xpose.msra.mxu0 0
        %1063 = vmatpush.bf16.xpose.msra.mxu0 0
        %1064 = vmatpush.bf16.xpose.msra.mxu0 0
        %1065 = vmatpush.bf16.xpose.msra.mxu0 0
        %1066 = vmatpush.bf16.xpose.msra.mxu0 %v1057
        %1067 = vmatmul.bf16.gmra.mxu0 %v1054
        %v1068 = vpop.f32.mrf.mxu0
        %v1069 = vadd.f32 0.0, %v1068
        %v1070 = vpop.f32.mrf.mxu0
        %1071 = vdwg.mxu0
        %v1072 = vsel %vm886, %v1069, -inf
        %1073 = vmax.xlane.f32.xlu0 %v1072
        %v1074 = vpop.xlane.xlu0 %1073
        %v1075 = vsub.f32 %v1069, %v1074
        %v1076 = vmul.f32 %v1075, 1.442695
        %v1077 = vpow.pop %v1076
        %v1078 = vsel %vm886, %v1077, 0.0
        %1079 = vadd.xlane.f32.xlu0 %v1078
        %v1080 = vpop.xlane.xlu0 %1079
        %v1081 = vrcp.pop %v1080
        %v1082 = vmul.f32 %v1077, %v1081
        %v1083 = vpack.c.bf16 %v1082, %v1082
        %1084 = vrot.lane.b32.xlu0 %v959, 80
        %v1085 = vpop.permute.xlu0 %1084
        %v1087 = vsel %vm886, %v1083, 0
        %v1090 = vsel %vm902, %v1085, 0
        %1092 = vmatpush.bf16.msra.mxu0 0
        %1093 = vmatpush.bf16.msra.mxu0 0
        %1094 = vmatpush.bf16.msra.mxu0 0
        %1095 = vmatpush.bf16.msra.mxu0 0
        %1096 = vmatpush.bf16.msra.mxu0 0
        %1097 = vmatpush.bf16.msra.mxu0 0
        %1098 = vmatpush.bf16.msra.mxu0 0
        %1099 = vmatpush.bf16.msra.mxu0 %v1090
        %1100 = vmatmul.bf16.gmra.mxu0 %v1087
        %v1101 = vpop.f32.mrf.mxu0
        %v1102 = vadd.f32 0.0, %v1101
        %v1103 = vpop.f32.mrf.mxu0
        %1104 = vdwg.mxu0
        %1106 = vrot.lane.b32.xlu0 %v1102, 48
        %v1107 = vpop.permute.xlu0 %1106
        %vm1109 = vcmask 523648
        %1110 = vst.msk [vmem:[#allocation2] sm:$0xff] %vm1109, %v1107
        %1111 = vrot.lane.b32.xlu0 %v921, 64
        %v1112 = vpop.permute.xlu0 %1111
        %1113 = vrot.lane.b32.xlu0 %v865, 64
        %v1114 = vpop.permute.xlu0 %1113
        %v1116 = vsel %vm866, %v1112, 0
        %v1119 = vsel %vm866, %v1114, 0
        %1121 = vmatpush.bf16.xpose.msra.mxu0 0
        %1122 = vmatpush.bf16.xpose.msra.mxu0 0
        %1123 = vmatpush.bf16.xpose.msra.mxu0 0
        %1124 = vmatpush.bf16.xpose.msra.mxu0 0
        %1125 = vmatpush.bf16.xpose.msra.mxu0 0
        %1126 = vmatpush.bf16.xpose.msra.mxu0 0
        %1127 = vmatpush.bf16.xpose.msra.mxu0 0
        %1128 = vmatpush.bf16.xpose.msra.mxu0 %v1119
        %1129 = vmatmul.bf16.gmra.mxu0 %v1116
        %v1130 = vpop.f32.mrf.mxu0
        %v1131 = vadd.f32 0.0, %v1130
        %v1132 = vpop.f32.mrf.mxu0
        %1133 = vdwg.mxu0
        %v1134 = vsel %vm886, %v1131, -inf
        %1135 = vmax.xlane.f32.xlu0 %v1134
        %v1136 = vpop.xlane.xlu0 %1135
        %v1137 = vsub.f32 %v1131, %v1136
        %v1138 = vmul.f32 %v1137, 1.442695
        %v1139 = vpow.pop %v1138
        %v1140 = vsel %vm886, %v1139, 0.0
        %1141 = vadd.xlane.f32.xlu0 %v1140
        %v1142 = vpop.xlane.xlu0 %1141
        %v1143 = vrcp.pop %v1142
        %v1144 = vmul.f32 %v1139, %v1143
        %v1145 = vpack.c.bf16 %v1144, %v1144
        %1146 = vrot.lane.b32.xlu0 %v959, 64
        %v1147 = vpop.permute.xlu0 %1146
        %v1149 = vsel %vm886, %v1145, 0
        %v1152 = vsel %vm902, %v1147, 0
        %1154 = vmatpush.bf16.msra.mxu0 0
        %1155 = vmatpush.bf16.msra.mxu0 0
        %1156 = vmatpush.bf16.msra.mxu0 0
        %1157 = vmatpush.bf16.msra.mxu0 0
        %1158 = vmatpush.bf16.msra.mxu0 0
        %1159 = vmatpush.bf16.msra.mxu0 0
        %1160 = vmatpush.bf16.msra.mxu0 0
        %1161 = vmatpush.bf16.msra.mxu0 %v1152
        %1162 = vmatmul.bf16.gmra.mxu0 %v1149
        %v1163 = vpop.f32.mrf.mxu0
        %v1164 = vadd.f32 0.0, %v1163
        %v1165 = vpop.f32.mrf.mxu0
        %1166 = vdwg.mxu0
        %1168 = vrot.lane.b32.xlu0 %v1164, 64
        %v1169 = vpop.permute.xlu0 %1168
        %vm1171 = vcmask 654848
        %1172 = vst.msk [vmem:[#allocation2] sm:$0xff] %vm1171, %v1169
        %1173 = vrot.lane.b32.xlu0 %v921, 48
        %v1174 = vpop.permute.xlu0 %1173
        %1175 = vrot.lane.b32.xlu0 %v865, 48
        %v1176 = vpop.permute.xlu0 %1175
        %v1178 = vsel %vm866, %v1174, 0
        %v1181 = vsel %vm866, %v1176, 0
        %1183 = vmatpush.bf16.xpose.msra.mxu0 0
        %1184 = vmatpush.bf16.xpose.msra.mxu0 0
        %1185 = vmatpush.bf16.xpose.msra.mxu0 0
        %1186 = vmatpush.bf16.xpose.msra.mxu0 0
        %1187 = vmatpush.bf16.xpose.msra.mxu0 0
        %1188 = vmatpush.bf16.xpose.msra.mxu0 0
        %1189 = vmatpush.bf16.xpose.msra.mxu0 0
        %1190 = vmatpush.bf16.xpose.msra.mxu0 %v1181
        %1191 = vmatmul.bf16.gmra.mxu0 %v1178
        %v1192 = vpop.f32.mrf.mxu0
        %v1193 = vadd.f32 0.0, %v1192
        %v1194 = vpop.f32.mrf.mxu0
        %1195 = vdwg.mxu0
        %v1196 = vsel %vm886, %v1193, -inf
        %1197 = vmax.xlane.f32.xlu0 %v1196
        %v1198 = vpop.xlane.xlu0 %1197
        %v1199 = vsub.f32 %v1193, %v1198
        %v1200 = vmul.f32 %v1199, 1.442695
        %v1201 = vpow.pop %v1200
        %v1202 = vsel %vm886, %v1201, 0.0
        %1203 = vadd.xlane.f32.xlu0 %v1202
        %v1204 = vpop.xlane.xlu0 %1203
        %v1205 = vrcp.pop %v1204
        %v1206 = vmul.f32 %v1201, %v1205
        %v1207 = vpack.c.bf16 %v1206, %v1206
        %1208 = vrot.lane.b32.xlu0 %v959, 48
        %v1209 = vpop.permute.xlu0 %1208
        %v1211 = vsel %vm886, %v1207, 0
        %v1214 = vsel %vm902, %v1209, 0
        %1216 = vmatpush.bf16.msra.mxu0 0
        %1217 = vmatpush.bf16.msra.mxu0 0
        %1218 = vmatpush.bf16.msra.mxu0 0
        %1219 = vmatpush.bf16.msra.mxu0 0
        %1220 = vmatpush.bf16.msra.mxu0 0
        %1221 = vmatpush.bf16.msra.mxu0 0
        %1222 = vmatpush.bf16.msra.mxu0 0
        %1223 = vmatpush.bf16.msra.mxu0 %v1214
        %1224 = vmatmul.bf16.gmra.mxu0 %v1211
        %v1225 = vpop.f32.mrf.mxu0
        %v1226 = vadd.f32 0.0, %v1225
        %v1227 = vpop.f32.mrf.mxu0
        %1228 = vdwg.mxu0
        %1230 = vrot.lane.b32.xlu0 %v1226, 80
        %v1231 = vpop.permute.xlu0 %1230
        %vm1233 = vcmask 786048
        %1234 = vst.msk [vmem:[#allocation2] sm:$0xff] %vm1233, %v1231
        %1235 = vrot.lane.b32.xlu0 %v921, 32
        %v1236 = vpop.permute.xlu0 %1235
        %1237 = vrot.lane.b32.xlu0 %v865, 32
        %v1238 = vpop.permute.xlu0 %1237
        %v1240 = vsel %vm866, %v1236, 0
        %v1243 = vsel %vm866, %v1238, 0
        %1245 = vmatpush.bf16.xpose.msra.mxu0 0
        %1246 = vmatpush.bf16.xpose.msra.mxu0 0
        %1247 = vmatpush.bf16.xpose.msra.mxu0 0
        %1248 = vmatpush.bf16.xpose.msra.mxu0 0
        %1249 = vmatpush.bf16.xpose.msra.mxu0 0
        %1250 = vmatpush.bf16.xpose.msra.mxu0 0
        %1251 = vmatpush.bf16.xpose.msra.mxu0 0
        %1252 = vmatpush.bf16.xpose.msra.mxu0 %v1243
        %1253 = vmatmul.bf16.gmra.mxu0 %v1240
        %v1254 = vpop.f32.mrf.mxu0
        %v1255 = vadd.f32 0.0, %v1254
        %v1256 = vpop.f32.mrf.mxu0
        %1257 = vdwg.mxu0
        %v1258 = vsel %vm886, %v1255, -inf
        %1259 = vmax.xlane.f32.xlu0 %v1258
        %v1260 = vpop.xlane.xlu0 %1259
        %v1261 = vsub.f32 %v1255, %v1260
        %v1262 = vmul.f32 %v1261, 1.442695
        %v1263 = vpow.pop %v1262
        %v1264 = vsel %vm886, %v1263, 0.0
        %1265 = vadd.xlane.f32.xlu0 %v1264
        %v1266 = vpop.xlane.xlu0 %1265
        %v1267 = vrcp.pop %v1266
        %v1268 = vmul.f32 %v1263, %v1267
        %v1269 = vpack.c.bf16 %v1268, %v1268
        %1270 = vrot.lane.b32.xlu0 %v959, 32
        %v1271 = vpop.permute.xlu0 %1270
        %v1273 = vsel %vm886, %v1269, 0
        %v1276 = vsel %vm902, %v1271, 0
        %1278 = vmatpush.bf16.msra.mxu0 0
        %1279 = vmatpush.bf16.msra.mxu0 0
        %1280 = vmatpush.bf16.msra.mxu0 0
        %1281 = vmatpush.bf16.msra.mxu0 0
        %1282 = vmatpush.bf16.msra.mxu0 0
        %1283 = vmatpush.bf16.msra.mxu0 0
        %1284 = vmatpush.bf16.msra.mxu0 0
        %1285 = vmatpush.bf16.msra.mxu0 %v1276
        %1286 = vmatmul.bf16.gmra.mxu0 %v1273
        %v1287 = vpop.f32.mrf.mxu0
        %v1288 = vadd.f32 0.0, %v1287
        %v1289 = vpop.f32.mrf.mxu0
        %1290 = vdwg.mxu0
        %1292 = vrot.lane.b32.xlu0 %v1288, 96
        %v1293 = vpop.permute.xlu0 %1292
        %vm1295 = vcmask 917248
        %1296 = vst.msk [vmem:[#allocation2] sm:$0xff] %vm1295, %v1293
        %1297 = vrot.lane.b32.xlu0 %v921, 16
        %v1298 = vpop.permute.xlu0 %1297
        %1299 = vrot.lane.b32.xlu0 %v865, 16
        %v1300 = vpop.permute.xlu0 %1299
        %v1302 = vsel %vm866, %v1298, 0
        %v1305 = vsel %vm866, %v1300, 0
        %1307 = vmatpush.bf16.xpose.msra.mxu0 0
        %1308 = vmatpush.bf16.xpose.msra.mxu0 0
        %1309 = vmatpush.bf16.xpose.msra.mxu0 0
        %1310 = vmatpush.bf16.xpose.msra.mxu0 0
        %1311 = vmatpush.bf16.xpose.msra.mxu0 0
        %1312 = vmatpush.bf16.xpose.msra.mxu0 0
        %1313 = vmatpush.bf16.xpose.msra.mxu0 0
        %1314 = vmatpush.bf16.xpose.msra.mxu0 %v1305
        %1315 = vmatmul.bf16.gmra.mxu0 %v1302
        %v1316 = vpop.f32.mrf.mxu0
        %v1317 = vadd.f32 0.0, %v1316
        %v1318 = vpop.f32.mrf.mxu0
        %1319 = vdwg.mxu0
        %v1320 = vsel %vm886, %v1317, -inf
        %1321 = vmax.xlane.f32.xlu0 %v1320
        %v1322 = vpop.xlane.xlu0 %1321
        %v1323 = vsub.f32 %v1317, %v1322
        %v1324 = vmul.f32 %v1323, 1.442695
        %v1325 = vpow.pop %v1324
        %v1326 = vsel %vm886, %v1325, 0.0
        %1327 = vadd.xlane.f32.xlu0 %v1326
        %v1328 = vpop.xlane.xlu0 %1327
        %v1329 = vrcp.pop %v1328
        %v1330 = vmul.f32 %v1325, %v1329
        %v1331 = vpack.c.bf16 %v1330, %v1330
        %1332 = vrot.lane.b32.xlu0 %v959, 16
        %v1333 = vpop.permute.xlu0 %1332
        %v1335 = vsel %vm886, %v1331, 0
        %v1338 = vsel %vm902, %v1333, 0
        %1340 = vmatpush.bf16.msra.mxu0 0
        %1341 = vmatpush.bf16.msra.mxu0 0
        %1342 = vmatpush.bf16.msra.mxu0 0
        %1343 = vmatpush.bf16.msra.mxu0 0
        %1344 = vmatpush.bf16.msra.mxu0 0
        %1345 = vmatpush.bf16.msra.mxu0 0
        %1346 = vmatpush.bf16.msra.mxu0 0
        %1347 = vmatpush.bf16.msra.mxu0 %v1338
        %1348 = vmatmul.bf16.gmra.mxu0 %v1335
        %v1349 = vpop.f32.mrf.mxu0
        %v1350 = vadd.f32 0.0, %v1349
        %v1351 = vpop.f32.mrf.mxu0
        %1352 = vdwg.mxu0
        %1354 = vrot.lane.b32.xlu0 %v1350, 112
        %v1355 = vpop.permute.xlu0 %1354
        %vm1357 = vcmask 1048448
        %1358 = vst.msk [vmem:[#allocation2] sm:$0xff] %vm1357, %v1355
        %v1359 = vld [vmem:[#allocation2] sm:$0xff]
        %v1360 = vld [vmem:[%s4] sm:$0xf]
        %v1361 = vld [vmem:[%s4 + $0x4] sm:$0xf]
        %v1362 = vld [vmem:[%s4 + $0x8] sm:$0xf]
        %v1363 = vld [vmem:[%s4 + $0xc] sm:$0xf]
        %v1364 = vld [vmem:[%s4 + $0x10] sm:$0xf]
        %v1365 = vld [vmem:[%s4 + $0x14] sm:$0xf]
        %v1366 = vld [vmem:[%s4 + $0x18] sm:$0xf]
        %v1367 = vld [vmem:[%s4 + $0x1c] sm:$0xf]
        %v1368 = vld [vmem:[%s4 + $0x20] sm:$0xf]
        %v1369 = vld [vmem:[%s4 + $0x24] sm:$0xf]
        %v1370 = vld [vmem:[%s4 + $0x28] sm:$0xf]
        %v1371 = vld [vmem:[%s4 + $0x2c] sm:$0xf]
        %v1372 = vld [vmem:[%s4 + $0x30] sm:$0xf]
        %v1373 = vld [vmem:[%s4 + $0x34] sm:$0xf]
        %v1374 = vld [vmem:[%s4 + $0x38] sm:$0xf]
        %v1375 = vld [vmem:[%s4 + $0x3c] sm:$0xf]
        %v1376 = vpack.c.bf16 %v1359, %v1359
        %v1377 = vld [vmem:[%s5] sm:$0x1]
        %v1378 = vunpack.c.l.bf16 %v1377
        %v1379 = vperm.slane %v1378, 0
        %v1396 = vunpack.c.l.b16 %v1360
        %v1397 = vunpack.c.l.b16 %v1361
        %v1398 = vunpack.c.l.b16 %v1362
        %v1399 = vunpack.c.l.b16 %v1363
        %v1400 = vunpack.c.l.b16 %v1364
        %v1401 = vunpack.c.l.b16 %v1365
        %v1402 = vunpack.c.l.b16 %v1366
        %v1403 = vunpack.c.l.b16 %v1367
        %v1404 = vunpack.c.l.b16 %v1368
        %v1405 = vunpack.c.l.b16 %v1369
        %v1406 = vunpack.c.l.b16 %v1370
        %v1407 = vunpack.c.l.b16 %v1371
        %v1408 = vunpack.c.l.b16 %v1372
        %v1409 = vunpack.c.l.b16 %v1373
        %v1410 = vunpack.c.l.b16 %v1374
        %v1411 = vunpack.c.l.b16 %v1375
        %v1412 = vpack.c.b16 %v1397, %v1396
        %v1413 = vpack.c.b16 %v1399, %v1398
        %v1414 = vpack.c.b16 %v1401, %v1400
        %v1415 = vpack.c.b16 %v1403, %v1402
        %v1416 = vpack.c.b16 %v1405, %v1404
        %v1417 = vpack.c.b16 %v1407, %v1406
        %v1418 = vpack.c.b16 %v1409, %v1408
        %v1419 = vpack.c.b16 %v1411, %v1410
        %1428 = vmatpush.bf16.msra.mxu0 %v1419
        %1429 = vmatpush.bf16.msra.mxu0 %v1418
        %1430 = vmatpush.bf16.msra.mxu0 %v1417
        %1431 = vmatpush.bf16.msra.mxu0 %v1416
        %1432 = vmatpush.bf16.msra.mxu0 %v1415
        %1433 = vmatpush.bf16.msra.mxu0 %v1414
        %1434 = vmatpush.bf16.msra.mxu0 %v1413
        %1435 = vmatpush.bf16.msra.mxu0 %v1412
        %1436 = vmatmul.bf16.gmra.mxu0 %v1376
        %v1437 = vpop.f32.mrf.mxu0
        %v1438 = vadd.f32 %v1379, %v1437
        %v1439 = vpop.f32.mrf.mxu0
        %1440 = vdwg.mxu0
        %v1441 = vadd.f32 %v646, %v1438
        %v1442 = vld [vmem:[%s6] sm:$0x1]
        %v1443 = vld [vmem:[%s7] sm:$0x1]
        %1444 = vadd.xlane.f32.xlu0 %v1441
        %v1445 = vpop.xlane.xlu0 %1444
        %v1446 = vrcp.pop 128.0
        %v1447 = vmul.f32 128.0, %v1446
        %v1448 = vsub.f32 1.0, %v1447
        %v1449 = vmul.f32 %v1446, %v1448
        %v1450 = vadd.f32 %v1446, %v1449
        %vm1451 = vweird.f32 %v1446
        %v1452 = vsel %vm1451, %v1446, %v1450
        %v1453 = vmul.f32 %v1445, %v1452
        %v1454 = vsub.f32 %v1441, %v1453
        %v1455 = vmul.f32 %v1454, %v1454
        %1456 = vadd.xlane.f32.xlu0 %v1455
        %v1457 = vpop.xlane.xlu0 %1456
        %v1458 = vmul.f32 %v1457, %v1452
        %v1459 = vadd.f32 %v1458, 1e-05
        %v1460 = vrsqrt.pop %v1459
        %v1461 = vmul.f32 %v1460, %v1459
        %v1462 = vmul.f32 %v1461, %v1460
        %v1463 = vmul.f32 0.5, %v1462
        %v1464 = vsub.f32 1.5, %v1463
        %v1465 = vmul.f32 %v1460, %v1464
        %vm1466 = vweird.f32 %v1459
        %vm1467 = vweird.f32 %v1460
        %vm1468 = vmor %vm1466, %vm1467
        %v1469 = vsel %vm1468, %v1460, %v1465
        %v1470 = vmul.f32 %v1454, %v1469
        %v1472 = vperm.slane %v1442, 0
        %v1474 = vmul.f32 %v1470, %v1472
        %v1476 = vperm.slane %v1443, 0
        %v1478 = vadd.f32 %v1474, %v1476
        %v1479 = vld [vmem:[%s8] sm:$0xff]
        %v1480 = vld [vmem:[%s8 + $0x8] sm:$0xf]
        %v1481 = vld [vmem:[%s8 + $0xc] sm:$0xff]
        %v1482 = vld [vmem:[%s8 + $0x14] sm:$0xf]
        %v1483 = vld [vmem:[%s8 + $0x18] sm:$0xff]
        %v1484 = vld [vmem:[%s8 + $0x20] sm:$0xf]
        %v1485 = vld [vmem:[%s8 + $0x24] sm:$0xff]
        %v1486 = vld [vmem:[%s8 + $0x2c] sm:$0xf]
        %v1487 = vld [vmem:[%s8 + $0x30] sm:$0xff]
        %v1488 = vld [vmem:[%s8 + $0x38] sm:$0xf]
        %v1489 = vld [vmem:[%s8 + $0x3c] sm:$0xff]
        %v1490 = vld [vmem:[%s8 + $0x44] sm:$0xf]
        %v1491 = vld [vmem:[%s8 + $0x48] sm:$0xff]
        %v1492 = vld [vmem:[%s8 + $0x50] sm:$0xf]
        %v1493 = vld [vmem:[%s8 + $0x54] sm:$0xff]
        %v1494 = vld [vmem:[%s8 + $0x5c] sm:$0xf]
        %v1495 = vld [vmem:[%s8 + $0x60] sm:$0xff]
        %v1496 = vld [vmem:[%s8 + $0x68] sm:$0xf]
        %v1497 = vld [vmem:[%s8 + $0x6c] sm:$0xff]
        %v1498 = vld [vmem:[%s8 + $0x74] sm:$0xf]
        %v1499 = vld [vmem:[%s8 + $0x78] sm:$0xff]
        %v1500 = vld [vmem:[%s8 + $0x80] sm:$0xf]
        %v1501 = vld [vmem:[%s8 + $0x84] sm:$0xff]
        %v1502 = vld [vmem:[%s8 + $0x8c] sm:$0xf]
        %v1503 = vld [vmem:[%s8 + $0x90] sm:$0xff]
        %v1504 = vld [vmem:[%s8 + $0x98] sm:$0xf]
        %v1505 = vld [vmem:[%s8 + $0x9c] sm:$0xff]
        %v1506 = vld [vmem:[%s8 + $0xa4] sm:$0xf]
        %v1507 = vld [vmem:[%s8 + $0xa8] sm:$0xff]
        %v1508 = vld [vmem:[%s8 + $0xb0] sm:$0xf]
        %v1509 = vld [vmem:[%s8 + $0xb4] sm:$0xff]
        %v1510 = vld [vmem:[%s8 + $0xbc] sm:$0xf]
        %v1511 = vld [vmem:[%s9] sm:$0x7]
        %v1512 = vpack.c.bf16 %v1478, %v1478
        %v1513 = vunpack.c.l.bf16 %v1511
        %v1514 = vperm.slane %v1513, 0
        %v1531 = vunpack.c.l.b16 %v1479
        %v1532 = vunpack.c.l.b16 %v1481
        %v1533 = vunpack.c.l.b16 %v1483
        %v1534 = vunpack.c.l.b16 %v1485
        %v1535 = vunpack.c.l.b16 %v1487
        %v1536 = vunpack.c.l.b16 %v1489
        %v1537 = vunpack.c.l.b16 %v1491
        %v1538 = vunpack.c.l.b16 %v1493
        %v1539 = vunpack.c.l.b16 %v1495
        %v1540 = vunpack.c.l.b16 %v1497
        %v1541 = vunpack.c.l.b16 %v1499
        %v1542 = vunpack.c.l.b16 %v1501
        %v1543 = vunpack.c.l.b16 %v1503
        %v1544 = vunpack.c.l.b16 %v1505
        %v1545 = vunpack.c.l.b16 %v1507
        %v1546 = vunpack.c.l.b16 %v1509
        %v1547 = vpack.c.b16 %v1532, %v1531
        %v1548 = vpack.c.b16 %v1534, %v1533
        %v1549 = vpack.c.b16 %v1536, %v1535
        %v1550 = vpack.c.b16 %v1538, %v1537
        %v1551 = vpack.c.b16 %v1540, %v1539
        %v1552 = vpack.c.b16 %v1542, %v1541
        %v1553 = vpack.c.b16 %v1544, %v1543
        %v1554 = vpack.c.b16 %v1546, %v1545
        %1563 = vmatpush.bf16.msra.mxu0 %v1554
        %1564 = vmatpush.bf16.msra.mxu0 %v1553
        %1565 = vmatpush.bf16.msra.mxu0 %v1552
        %1566 = vmatpush.bf16.msra.mxu0 %v1551
        %1567 = vmatpush.bf16.msra.mxu0 %v1550
        %1568 = vmatpush.bf16.msra.mxu0 %v1549
        %1569 = vmatpush.bf16.msra.mxu0 %v1548
        %1570 = vmatpush.bf16.msra.mxu0 %v1547
        %1571 = vmatmul.bf16.gmra.mxu0 %v1512
        %v1572 = vpop.f32.mrf.mxu0
        %v1573 = vadd.f32 %v1514, %v1572
        %v1574 = vpop.f32.mrf.mxu0
        %1575 = vdwg.mxu0
        %v1576 = vpack.c.bf16 %v1573, %v1573
        %v1577 = vpack.c.bf16 %v648, %v647
        %v1579 = vrot.slane %v1511, 1
        %v1581 = vunpack.c.l.bf16 %v1579
        %v1582 = vperm.slane %v1581, 0
        %v1583 = vunpack.c.h.b16 %v1479
        %v1584 = vunpack.c.h.b16 %v1481
        %v1585 = vunpack.c.h.b16 %v1483
        %v1586 = vunpack.c.h.b16 %v1485
        %v1587 = vunpack.c.h.b16 %v1487
        %v1588 = vunpack.c.h.b16 %v1489
        %v1589 = vunpack.c.h.b16 %v1491
        %v1590 = vunpack.c.h.b16 %v1493
        %v1591 = vunpack.c.h.b16 %v1495
        %v1592 = vunpack.c.h.b16 %v1497
        %v1593 = vunpack.c.h.b16 %v1499
        %v1594 = vunpack.c.h.b16 %v1501
        %v1595 = vunpack.c.h.b16 %v1503
        %v1596 = vunpack.c.h.b16 %v1505
        %v1597 = vunpack.c.h.b16 %v1507
        %v1598 = vunpack.c.h.b16 %v1509
        %v1599 = vpack.c.b16 %v1584, %v1583
        %v1600 = vpack.c.b16 %v1586, %v1585
        %v1601 = vpack.c.b16 %v1588, %v1587
        %v1602 = vpack.c.b16 %v1590, %v1589
        %v1603 = vpack.c.b16 %v1592, %v1591
        %v1604 = vpack.c.b16 %v1594, %v1593
        %v1605 = vpack.c.b16 %v1596, %v1595
        %v1606 = vpack.c.b16 %v1598, %v1597
        %1615 = vmatpush.bf16.msra.mxu0 %v1606
        %1616 = vmatpush.bf16.msra.mxu0 %v1605
        %1617 = vmatpush.bf16.msra.mxu0 %v1604
        %1618 = vmatpush.bf16.msra.mxu0 %v1603
        %1619 = vmatpush.bf16.msra.mxu0 %v1602
        %1620 = vmatpush.bf16.msra.mxu0 %v1601
        %1621 = vmatpush.bf16.msra.mxu0 %v1600
        %1622 = vmatpush.bf16.msra.mxu0 %v1599
        %1623 = vmatmul.bf16.gmra.mxu0 %v1577
        %v1624 = vpop.f32.mrf.mxu0
        %v1625 = vadd.f32 %v1582, %v1624
        %v1626 = vpop.f32.mrf.mxu0
        %v1627 = vadd.f32 %v1582, %v1626
        %1628 = vdwg.mxu0
        %v1629 = vpack.c.bf16 %v1625, %v1625
        %v1630 = vpack.c.bf16 %v1627, %v1627
        %v1631 = vrot.slane %v1511, 2
        %v1633 = vunpack.c.l.bf16 %v1631
        %v1634 = vperm.slane %v1633, 0
        %v1651 = vunpack.c.l.b16 %v1480
        %v1652 = vunpack.c.l.b16 %v1482
        %v1653 = vunpack.c.l.b16 %v1484
        %v1654 = vunpack.c.l.b16 %v1486
        %v1655 = vunpack.c.l.b16 %v1488
        %v1656 = vunpack.c.l.b16 %v1490
        %v1657 = vunpack.c.l.b16 %v1492
        %v1658 = vunpack.c.l.b16 %v1494
        %v1659 = vunpack.c.l.b16 %v1496
        %v1660 = vunpack.c.l.b16 %v1498
        %v1661 = vunpack.c.l.b16 %v1500
        %v1662 = vunpack.c.l.b16 %v1502
        %v1663 = vunpack.c.l.b16 %v1504
        %v1664 = vunpack.c.l.b16 %v1506
        %v1665 = vunpack.c.l.b16 %v1508
        %v1666 = vunpack.c.l.b16 %v1510
        %v1667 = vpack.c.b16 %v1652, %v1651
        %v1668 = vpack.c.b16 %v1654, %v1653
        %v1669 = vpack.c.b16 %v1656, %v1655
        %v1670 = vpack.c.b16 %v1658, %v1657
        %v1671 = vpack.c.b16 %v1660, %v1659
        %v1672 = vpack.c.b16 %v1662, %v1661
        %v1673 = vpack.c.b16 %v1664, %v1663
        %v1674 = vpack.c.b16 %v1666, %v1665
        %1683 = vmatpush.bf16.msra.mxu0 %v1674
        %1684 = vmatpush.bf16.msra.mxu0 %v1673
        %1685 = vmatpush.bf16.msra.mxu0 %v1672
        %1686 = vmatpush.bf16.msra.mxu0 %v1671
        %1687 = vmatpush.bf16.msra.mxu0 %v1670
        %1688 = vmatpush.bf16.msra.mxu0 %v1669
        %1689 = vmatpush.bf16.msra.mxu0 %v1668
        %1690 = vmatpush.bf16.msra.mxu0 %v1667
        %1691 = vmatmul.bf16.gmra.mxu0 %v1577
        %v1692 = vpop.f32.mrf.mxu0
        %v1693 = vadd.f32 %v1634, %v1692
        %v1694 = vpop.f32.mrf.mxu0
        %v1695 = vadd.f32 %v1634, %v1694
        %1696 = vdwg.mxu0
        %v1697 = vpack.c.bf16 %v1693, %v1693
        %v1698 = vpack.c.bf16 %v1695, %v1695
        %v1701 = vunpack.c.l.b16 %v1629
        %v1702 = vunpack.c.l.b16 %v1630
        %v1703 = vpack.c.b16 %v1702, %v1701
        %v1705 = vsel %vm866, %v1576, 0
        %v1708 = vsel %vm866, %v1703, 0
        %1710 = vmatpush.bf16.xpose.msra.mxu0 0
        %1711 = vmatpush.bf16.xpose.msra.mxu0 0
        %1712 = vmatpush.bf16.xpose.msra.mxu0 0
        %1713 = vmatpush.bf16.xpose.msra.mxu0 0
        %1714 = vmatpush.bf16.xpose.msra.mxu0 0
        %1715 = vmatpush.bf16.xpose.msra.mxu0 0
        %1716 = vmatpush.bf16.xpose.msra.mxu0 0
        %1717 = vmatpush.bf16.xpose.msra.mxu0 %v1708
        %1718 = vmatmul.bf16.gmra.mxu0 %v1705
        %v1719 = vpop.f32.mrf.mxu0
        %v1720 = vadd.f32 0.0, %v1719
        %v1721 = vpop.f32.mrf.mxu0
        %1722 = vdwg.mxu0
        %v1723 = vsel %vm866, %v1720, -inf
        %1724 = vmax.xlane.f32.xlu0 %v1723
        %v1725 = vpop.xlane.xlu0 %1724
        %v1726 = vsub.f32 %v1720, %v1725
        %v1727 = vmul.f32 %v1726, 1.442695
        %v1728 = vpow.pop %v1727
        %v1729 = vsel %vm866, %v1728, 0.0
        %1730 = vadd.xlane.f32.xlu0 %v1729
        %v1731 = vpop.xlane.xlu0 %1730
        %v1732 = vrcp.pop %v1731
        %v1733 = vmul.f32 %v1728, %v1732
        %v1734 = vpack.c.bf16 %v1733, %v1733
        %v1737 = vunpack.c.l.b16 %v1697
        %v1738 = vunpack.c.l.b16 %v1698
        %v1739 = vpack.c.b16 %v1738, %v1737
        %v1742 = vsel %vm866, %v1734, 0
        %1744 = vmatpush.bf16.msra.mxu0 0
        %1745 = vmatpush.bf16.msra.mxu0 0
        %1746 = vmatpush.bf16.msra.mxu0 0
        %1747 = vmatpush.bf16.msra.mxu0 0
        %1748 = vmatpush.bf16.msra.mxu0 0
        %1749 = vmatpush.bf16.msra.mxu0 0
        %1750 = vmatpush.bf16.msra.mxu0 0
        %1751 = vmatpush.bf16.msra.mxu0 %v1739
        %1752 = vmatmul.bf16.gmra.mxu0 %v1742
        %v1753 = vpop.f32.mrf.mxu0
        %v1754 = vadd.f32 0.0, %v1753
        %v1755 = vpop.f32.mrf.mxu0
        %1756 = vdwg.mxu0
        %1757 = vst.msk [vmem:[#allocation2] sm:$0xff] %vm866, %v1754
        %v1759 = vunpack.c.l.b16 %v1576
        %v1760 = vpack.c.b16 %v1759, %v1759
        %1761 = vrot.lane.b32.xlu0 %v1760, 112
        %v1762 = vpop.permute.xlu0 %1761
        %1763 = vrot.lane.b32.xlu0 %v1703, 112
        %v1764 = vpop.permute.xlu0 %1763
        %v1766 = vsel %vm866, %v1762, 0
        %v1769 = vsel %vm866, %v1764, 0
        %1771 = vmatpush.bf16.xpose.msra.mxu0 0
        %1772 = vmatpush.bf16.xpose.msra.mxu0 0
        %1773 = vmatpush.bf16.xpose.msra.mxu0 0
        %1774 = vmatpush.bf16.xpose.msra.mxu0 0
        %1775 = vmatpush.bf16.xpose.msra.mxu0 0
        %1776 = vmatpush.bf16.xpose.msra.mxu0 0
        %1777 = vmatpush.bf16.xpose.msra.mxu0 0
        %1778 = vmatpush.bf16.xpose.msra.mxu0 %v1769
        %1779 = vmatmul.bf16.gmra.mxu0 %v1766
        %v1780 = vpop.f32.mrf.mxu0
        %v1781 = vadd.f32 0.0, %v1780
        %v1782 = vpop.f32.mrf.mxu0
        %1783 = vdwg.mxu0
        %v1784 = vsel %vm866, %v1781, -inf
        %1785 = vmax.xlane.f32.xlu0 %v1784
        %v1786 = vpop.xlane.xlu0 %1785
        %v1787 = vsub.f32 %v1781, %v1786
        %v1788 = vmul.f32 %v1787, 1.442695
        %v1789 = vpow.pop %v1788
        %v1790 = vsel %vm866, %v1789, 0.0
        %1791 = vadd.xlane.f32.xlu0 %v1790
        %v1792 = vpop.xlane.xlu0 %1791
        %v1793 = vrcp.pop %v1792
        %v1794 = vmul.f32 %v1789, %v1793
        %v1795 = vpack.c.bf16 %v1794, %v1794
        %1796 = vrot.lane.b32.xlu0 %v1739, 112
        %v1797 = vpop.permute.xlu0 %1796
        %v1800 = vsel %vm866, %v1795, 0
        %1802 = vmatpush.bf16.msra.mxu0 0
        %1803 = vmatpush.bf16.msra.mxu0 0
        %1804 = vmatpush.bf16.msra.mxu0 0
        %1805 = vmatpush.bf16.msra.mxu0 0
        %1806 = vmatpush.bf16.msra.mxu0 0
        %1807 = vmatpush.bf16.msra.mxu0 0
        %1808 = vmatpush.bf16.msra.mxu0 0
        %1809 = vmatpush.bf16.msra.mxu0 %v1797
        %1810 = vmatmul.bf16.gmra.mxu0 %v1800
        %v1811 = vpop.f32.mrf.mxu0
        %v1812 = vadd.f32 0.0, %v1811
        %v1813 = vpop.f32.mrf.mxu0
        %1814 = vdwg.mxu0
        %1816 = vrot.lane.b32.xlu0 %v1812, 16
        %v1817 = vpop.permute.xlu0 %1816
        %1819 = vst.msk [vmem:[#allocation2] sm:$0xff] %vm985, %v1817
        %1820 = vrot.lane.b32.xlu0 %v1760, 96
        %v1821 = vpop.permute.xlu0 %1820
        %1822 = vrot.lane.b32.xlu0 %v1703, 96
        %v1823 = vpop.permute.xlu0 %1822
        %v1825 = vsel %vm866, %v1821, 0
        %v1828 = vsel %vm866, %v1823, 0
        %1830 = vmatpush.bf16.xpose.msra.mxu0 0
        %1831 = vmatpush.bf16.xpose.msra.mxu0 0
        %1832 = vmatpush.bf16.xpose.msra.mxu0 0
        %1833 = vmatpush.bf16.xpose.msra.mxu0 0
        %1834 = vmatpush.bf16.xpose.msra.mxu0 0
        %1835 = vmatpush.bf16.xpose.msra.mxu0 0
        %1836 = vmatpush.bf16.xpose.msra.mxu0 0
        %1837 = vmatpush.bf16.xpose.msra.mxu0 %v1828
        %1838 = vmatmul.bf16.gmra.mxu0 %v1825
        %v1839 = vpop.f32.mrf.mxu0
        %v1840 = vadd.f32 0.0, %v1839
        %v1841 = vpop.f32.mrf.mxu0
        %1842 = vdwg.mxu0
        %v1843 = vsel %vm866, %v1840, -inf
        %1844 = vmax.xlane.f32.xlu0 %v1843
        %v1845 = vpop.xlane.xlu0 %1844
        %v1846 = vsub.f32 %v1840, %v1845
        %v1847 = vmul.f32 %v1846, 1.442695
        %v1848 = vpow.pop %v1847
        %v1849 = vsel %vm866, %v1848, 0.0
        %1850 = vadd.xlane.f32.xlu0 %v1849
        %v1851 = vpop.xlane.xlu0 %1850
        %v1852 = vrcp.pop %v1851
        %v1853 = vmul.f32 %v1848, %v1852
        %v1854 = vpack.c.bf16 %v1853, %v1853
        %1855 = vrot.lane.b32.xlu0 %v1739, 96
        %v1856 = vpop.permute.xlu0 %1855
        %v1859 = vsel %vm866, %v1854, 0
        %1861 = vmatpush.bf16.msra.mxu0 0
        %1862 = vmatpush.bf16.msra.mxu0 0
        %1863 = vmatpush.bf16.msra.mxu0 0
        %1864 = vmatpush.bf16.msra.mxu0 0
        %1865 = vmatpush.bf16.msra.mxu0 0
        %1866 = vmatpush.bf16.msra.mxu0 0
        %1867 = vmatpush.bf16.msra.mxu0 0
        %1868 = vmatpush.bf16.msra.mxu0 %v1856
        %1869 = vmatmul.bf16.gmra.mxu0 %v1859
        %v1870 = vpop.f32.mrf.mxu0
        %v1871 = vadd.f32 0.0, %v1870
        %v1872 = vpop.f32.mrf.mxu0
        %1873 = vdwg.mxu0
        %1875 = vrot.lane.b32.xlu0 %v1871, 32
        %v1876 = vpop.permute.xlu0 %1875
        %1878 = vst.msk [vmem:[#allocation2] sm:$0xff] %vm1047, %v1876
        %1879 = vrot.lane.b32.xlu0 %v1760, 80
        %v1880 = vpop.permute.xlu0 %1879
        %1881 = vrot.lane.b32.xlu0 %v1703, 80
        %v1882 = vpop.permute.xlu0 %1881
        %v1884 = vsel %vm866, %v1880, 0
        %v1887 = vsel %vm866, %v1882, 0
        %1889 = vmatpush.bf16.xpose.msra.mxu0 0
        %1890 = vmatpush.bf16.xpose.msra.mxu0 0
        %1891 = vmatpush.bf16.xpose.msra.mxu0 0
        %1892 = vmatpush.bf16.xpose.msra.mxu0 0
        %1893 = vmatpush.bf16.xpose.msra.mxu0 0
        %1894 = vmatpush.bf16.xpose.msra.mxu0 0
        %1895 = vmatpush.bf16.xpose.msra.mxu0 0
        %1896 = vmatpush.bf16.xpose.msra.mxu0 %v1887
        %1897 = vmatmul.bf16.gmra.mxu0 %v1884
        %v1898 = vpop.f32.mrf.mxu0
        %v1899 = vadd.f32 0.0, %v1898
        %v1900 = vpop.f32.mrf.mxu0
        %1901 = vdwg.mxu0
        %v1902 = vsel %vm866, %v1899, -inf
        %1903 = vmax.xlane.f32.xlu0 %v1902
        %v1904 = vpop.xlane.xlu0 %1903
        %v1905 = vsub.f32 %v1899, %v1904
        %v1906 = vmul.f32 %v1905, 1.442695
        %v1907 = vpow.pop %v1906
        %v1908 = vsel %vm866, %v1907, 0.0
        %1909 = vadd.xlane.f32.xlu0 %v1908
        %v1910 = vpop.xlane.xlu0 %1909
        %v1911 = vrcp.pop %v1910
        %v1912 = vmul.f32 %v1907, %v1911
        %v1913 = vpack.c.bf16 %v1912, %v1912
        %1914 = vrot.lane.b32.xlu0 %v1739, 80
        %v1915 = vpop.permute.xlu0 %1914
        %v1918 = vsel %vm866, %v1913, 0
        %1920 = vmatpush.bf16.msra.mxu0 0
        %1921 = vmatpush.bf16.msra.mxu0 0
        %1922 = vmatpush.bf16.msra.mxu0 0
        %1923 = vmatpush.bf16.msra.mxu0 0
        %1924 = vmatpush.bf16.msra.mxu0 0
        %1925 = vmatpush.bf16.msra.mxu0 0
        %1926 = vmatpush.bf16.msra.mxu0 0
        %1927 = vmatpush.bf16.msra.mxu0 %v1915
        %1928 = vmatmul.bf16.gmra.mxu0 %v1918
        %v1929 = vpop.f32.mrf.mxu0
        %v1930 = vadd.f32 0.0, %v1929
        %v1931 = vpop.f32.mrf.mxu0
        %1932 = vdwg.mxu0
        %1934 = vrot.lane.b32.xlu0 %v1930, 48
        %v1935 = vpop.permute.xlu0 %1934
        %1937 = vst.msk [vmem:[#allocation2] sm:$0xff] %vm1109, %v1935
        %1938 = vrot.lane.b32.xlu0 %v1760, 64
        %v1939 = vpop.permute.xlu0 %1938
        %1940 = vrot.lane.b32.xlu0 %v1703, 64
        %v1941 = vpop.permute.xlu0 %1940
        %v1943 = vsel %vm866, %v1939, 0
        %v1946 = vsel %vm866, %v1941, 0
        %1948 = vmatpush.bf16.xpose.msra.mxu0 0
        %1949 = vmatpush.bf16.xpose.msra.mxu0 0
        %1950 = vmatpush.bf16.xpose.msra.mxu0 0
        %1951 = vmatpush.bf16.xpose.msra.mxu0 0
        %1952 = vmatpush.bf16.xpose.msra.mxu0 0
        %1953 = vmatpush.bf16.xpose.msra.mxu0 0
        %1954 = vmatpush.bf16.xpose.msra.mxu0 0
        %1955 = vmatpush.bf16.xpose.msra.mxu0 %v1946
        %1956 = vmatmul.bf16.gmra.mxu0 %v1943
        %v1957 = vpop.f32.mrf.mxu0
        %v1958 = vadd.f32 0.0, %v1957
        %v1959 = vpop.f32.mrf.mxu0
        %1960 = vdwg.mxu0
        %v1961 = vsel %vm866, %v1958, -inf
        %1962 = vmax.xlane.f32.xlu0 %v1961
        %v1963 = vpop.xlane.xlu0 %1962
        %v1964 = vsub.f32 %v1958, %v1963
        %v1965 = vmul.f32 %v1964, 1.442695
        %v1966 = vpow.pop %v1965
        %v1967 = vsel %vm866, %v1966, 0.0
        %1968 = vadd.xlane.f32.xlu0 %v1967
        %v1969 = vpop.xlane.xlu0 %1968
        %v1970 = vrcp.pop %v1969
        %v1971 = vmul.f32 %v1966, %v1970
        %v1972 = vpack.c.bf16 %v1971, %v1971
        %1973 = vrot.lane.b32.xlu0 %v1739, 64
        %v1974 = vpop.permute.xlu0 %1973
        %v1977 = vsel %vm866, %v1972, 0
        %1979 = vmatpush.bf16.msra.mxu0 0
        %1980 = vmatpush.bf16.msra.mxu0 0
        %1981 = vmatpush.bf16.msra.mxu0 0
        %1982 = vmatpush.bf16.msra.mxu0 0
        %1983 = vmatpush.bf16.msra.mxu0 0
        %1984 = vmatpush.bf16.msra.mxu0 0
        %1985 = vmatpush.bf16.msra.mxu0 0
        %1986 = vmatpush.bf16.msra.mxu0 %v1974
        %1987 = vmatmul.bf16.gmra.mxu0 %v1977
        %v1988 = vpop.f32.mrf.mxu0
        %v1989 = vadd.f32 0.0, %v1988
        %v1990 = vpop.f32.mrf.mxu0
        %1991 = vdwg.mxu0
        %1993 = vrot.lane.b32.xlu0 %v1989, 64
        %v1994 = vpop.permute.xlu0 %1993
        %1996 = vst.msk [vmem:[#allocation2] sm:$0xff] %vm1171, %v1994
        %1997 = vrot.lane.b32.xlu0 %v1760, 48
        %v1998 = vpop.permute.xlu0 %1997
        %1999 = vrot.lane.b32.xlu0 %v1703, 48
        %v2000 = vpop.permute.xlu0 %1999
        %v2002 = vsel %vm866, %v1998, 0
        %v2005 = vsel %vm866, %v2000, 0
        %2007 = vmatpush.bf16.xpose.msra.mxu0 0
        %2008 = vmatpush.bf16.xpose.msra.mxu0 0
        %2009 = vmatpush.bf16.xpose.msra.mxu0 0
        %2010 = vmatpush.bf16.xpose.msra.mxu0 0
        %2011 = vmatpush.bf16.xpose.msra.mxu0 0
        %2012 = vmatpush.bf16.xpose.msra.mxu0 0
        %2013 = vmatpush.bf16.xpose.msra.mxu0 0
        %2014 = vmatpush.bf16.xpose.msra.mxu0 %v2005
        %2015 = vmatmul.bf16.gmra.mxu0 %v2002
        %v2016 = vpop.f32.mrf.mxu0
        %v2017 = vadd.f32 0.0, %v2016
        %v2018 = vpop.f32.mrf.mxu0
        %2019 = vdwg.mxu0
        %v2020 = vsel %vm866, %v2017, -inf
        %2021 = vmax.xlane.f32.xlu0 %v2020
        %v2022 = vpop.xlane.xlu0 %2021
        %v2023 = vsub.f32 %v2017, %v2022
        %v2024 = vmul.f32 %v2023, 1.442695
        %v2025 = vpow.pop %v2024
        %v2026 = vsel %vm866, %v2025, 0.0
        %2027 = vadd.xlane.f32.xlu0 %v2026
        %v2028 = vpop.xlane.xlu0 %2027
        %v2029 = vrcp.pop %v2028
        %v2030 = vmul.f32 %v2025, %v2029
        %v2031 = vpack.c.bf16 %v2030, %v2030
        %2032 = vrot.lane.b32.xlu0 %v1739, 48
        %v2033 = vpop.permute.xlu0 %2032
        %v2036 = vsel %vm866, %v2031, 0
        %2038 = vmatpush.bf16.msra.mxu0 0
        %2039 = vmatpush.bf16.msra.mxu0 0
        %2040 = vmatpush.bf16.msra.mxu0 0
        %2041 = vmatpush.bf16.msra.mxu0 0
        %2042 = vmatpush.bf16.msra.mxu0 0
        %2043 = vmatpush.bf16.msra.mxu0 0
        %2044 = vmatpush.bf16.msra.mxu0 0
        %2045 = vmatpush.bf16.msra.mxu0 %v2033
        %2046 = vmatmul.bf16.gmra.mxu0 %v2036
        %v2047 = vpop.f32.mrf.mxu0
        %v2048 = vadd.f32 0.0, %v2047
        %v2049 = vpop.f32.mrf.mxu0
        %2050 = vdwg.mxu0
        %2052 = vrot.lane.b32.xlu0 %v2048, 80
        %v2053 = vpop.permute.xlu0 %2052
        %2055 = vst.msk [vmem:[#allocation2] sm:$0xff] %vm1233, %v2053
        %2056 = vrot.lane.b32.xlu0 %v1760, 32
        %v2057 = vpop.permute.xlu0 %2056
        %2058 = vrot.lane.b32.xlu0 %v1703, 32
        %v2059 = vpop.permute.xlu0 %2058
        %v2061 = vsel %vm866, %v2057, 0
        %v2064 = vsel %vm866, %v2059, 0
        %2066 = vmatpush.bf16.xpose.msra.mxu0 0
        %2067 = vmatpush.bf16.xpose.msra.mxu0 0
        %2068 = vmatpush.bf16.xpose.msra.mxu0 0
        %2069 = vmatpush.bf16.xpose.msra.mxu0 0
        %2070 = vmatpush.bf16.xpose.msra.mxu0 0
        %2071 = vmatpush.bf16.xpose.msra.mxu0 0
        %2072 = vmatpush.bf16.xpose.msra.mxu0 0
        %2073 = vmatpush.bf16.xpose.msra.mxu0 %v2064
        %2074 = vmatmul.bf16.gmra.mxu0 %v2061
        %v2075 = vpop.f32.mrf.mxu0
        %v2076 = vadd.f32 0.0, %v2075
        %v2077 = vpop.f32.mrf.mxu0
        %2078 = vdwg.mxu0
        %v2079 = vsel %vm866, %v2076, -inf
        %2080 = vmax.xlane.f32.xlu0 %v2079
        %v2081 = vpop.xlane.xlu0 %2080
        %v2082 = vsub.f32 %v2076, %v2081
        %v2083 = vmul.f32 %v2082, 1.442695
        %v2084 = vpow.pop %v2083
        %v2085 = vsel %vm866, %v2084, 0.0
        %2086 = vadd.xlane.f32.xlu0 %v2085
        %v2087 = vpop.xlane.xlu0 %2086
        %v2088 = vrcp.pop %v2087
        %v2089 = vmul.f32 %v2084, %v2088
        %v2090 = vpack.c.bf16 %v2089, %v2089
        %2091 = vrot.lane.b32.xlu0 %v1739, 32
        %v2092 = vpop.permute.xlu0 %2091
        %v2095 = vsel %vm866, %v2090, 0
        %2097 = vmatpush.bf16.msra.mxu0 0
        %2098 = vmatpush.bf16.msra.mxu0 0
        %2099 = vmatpush.bf16.msra.mxu0 0
        %2100 = vmatpush.bf16.msra.mxu0 0
        %2101 = vmatpush.bf16.msra.mxu0 0
        %2102 = vmatpush.bf16.msra.mxu0 0
        %2103 = vmatpush.bf16.msra.mxu0 0
        %2104 = vmatpush.bf16.msra.mxu0 %v2092
        %2105 = vmatmul.bf16.gmra.mxu0 %v2095
        %v2106 = vpop.f32.mrf.mxu0
        %v2107 = vadd.f32 0.0, %v2106
        %v2108 = vpop.f32.mrf.mxu0
        %2109 = vdwg.mxu0
        %2111 = vrot.lane.b32.xlu0 %v2107, 96
        %v2112 = vpop.permute.xlu0 %2111
        %2114 = vst.msk [vmem:[#allocation2] sm:$0xff] %vm1295, %v2112
        %2115 = vrot.lane.b32.xlu0 %v1760, 16
        %v2116 = vpop.permute.xlu0 %2115
        %2117 = vrot.lane.b32.xlu0 %v1703, 16
        %v2118 = vpop.permute.xlu0 %2117
        %v2120 = vsel %vm866, %v2116, 0
        %v2123 = vsel %vm866, %v2118, 0
        %2125 = vmatpush.bf16.xpose.msra.mxu0 0
        %2126 = vmatpush.bf16.xpose.msra.mxu0 0
        %2127 = vmatpush.bf16.xpose.msra.mxu0 0
        %2128 = vmatpush.bf16.xpose.msra.mxu0 0
        %2129 = vmatpush.bf16.xpose.msra.mxu0 0
        %2130 = vmatpush.bf16.xpose.msra.mxu0 0
        %2131 = vmatpush.bf16.xpose.msra.mxu0 0
        %2132 = vmatpush.bf16.xpose.msra.mxu0 %v2123
        %2133 = vmatmul.bf16.gmra.mxu0 %v2120
        %v2134 = vpop.f32.mrf.mxu0
        %v2135 = vadd.f32 0.0, %v2134
        %v2136 = vpop.f32.mrf.mxu0
        %2137 = vdwg.mxu0
        %v2138 = vsel %vm866, %v2135, -inf
        %2139 = vmax.xlane.f32.xlu0 %v2138
        %v2140 = vpop.xlane.xlu0 %2139
        %v2141 = vsub.f32 %v2135, %v2140
        %v2142 = vmul.f32 %v2141, 1.442695
        %v2143 = vpow.pop %v2142
        %v2144 = vsel %vm866, %v2143, 0.0
        %2145 = vadd.xlane.f32.xlu0 %v2144
        %v2146 = vpop.xlane.xlu0 %2145
        %v2147 = vrcp.pop %v2146
        %v2148 = vmul.f32 %v2143, %v2147
        %v2149 = vpack.c.bf16 %v2148, %v2148
        %2150 = vrot.lane.b32.xlu0 %v1739, 16
        %v2151 = vpop.permute.xlu0 %2150
        %v2154 = vsel %vm866, %v2149, 0
        %2156 = vmatpush.bf16.msra.mxu0 0
        %2157 = vmatpush.bf16.msra.mxu0 0
        %2158 = vmatpush.bf16.msra.mxu0 0
        %2159 = vmatpush.bf16.msra.mxu0 0
        %2160 = vmatpush.bf16.msra.mxu0 0
        %2161 = vmatpush.bf16.msra.mxu0 0
        %2162 = vmatpush.bf16.msra.mxu0 0
        %2163 = vmatpush.bf16.msra.mxu0 %v2151
        %2164 = vmatmul.bf16.gmra.mxu0 %v2154
        %v2165 = vpop.f32.mrf.mxu0
        %v2166 = vadd.f32 0.0, %v2165
        %v2167 = vpop.f32.mrf.mxu0
        %2168 = vdwg.mxu0
        %2170 = vrot.lane.b32.xlu0 %v2166, 112
        %v2171 = vpop.permute.xlu0 %2170
        %2173 = vst.msk [vmem:[#allocation2] sm:$0xff] %vm1357, %v2171
        %v2174 = vld [vmem:[#allocation2] sm:$0xff]
        %v2175 = vld [vmem:[%s10] sm:$0xf]
        %v2176 = vld [vmem:[%s10 + $0x4] sm:$0xf]
        %v2177 = vld [vmem:[%s10 + $0x8] sm:$0xf]
        %v2178 = vld [vmem:[%s10 + $0xc] sm:$0xf]
        %v2179 = vld [vmem:[%s10 + $0x10] sm:$0xf]
        %v2180 = vld [vmem:[%s10 + $0x14] sm:$0xf]
        %v2181 = vld [vmem:[%s10 + $0x18] sm:$0xf]
        %v2182 = vld [vmem:[%s10 + $0x1c] sm:$0xf]
        %v2183 = vld [vmem:[%s10 + $0x20] sm:$0xf]
        %v2184 = vld [vmem:[%s10 + $0x24] sm:$0xf]
        %v2185 = vld [vmem:[%s10 + $0x28] sm:$0xf]
        %v2186 = vld [vmem:[%s10 + $0x2c] sm:$0xf]
        %v2187 = vld [vmem:[%s10 + $0x30] sm:$0xf]
        %v2188 = vld [vmem:[%s10 + $0x34] sm:$0xf]
        %v2189 = vld [vmem:[%s10 + $0x38] sm:$0xf]
        %v2190 = vld [vmem:[%s10 + $0x3c] sm:$0xf]
        %v2191 = vpack.c.bf16 %v2174, %v2174
        %v2192 = vld [vmem:[%s11] sm:$0x1]
        %v2193 = vunpack.c.l.bf16 %v2192
        %v2194 = vperm.slane %v2193, 0
        %v2211 = vunpack.c.l.b16 %v2175
        %v2212 = vunpack.c.l.b16 %v2176
        %v2213 = vunpack.c.l.b16 %v2177
        %v2214 = vunpack.c.l.b16 %v2178
        %v2215 = vunpack.c.l.b16 %v2179
        %v2216 = vunpack.c.l.b16 %v2180
        %v2217 = vunpack.c.l.b16 %v2181
        %v2218 = vunpack.c.l.b16 %v2182
        %v2219 = vunpack.c.l.b16 %v2183
        %v2220 = vunpack.c.l.b16 %v2184
        %v2221 = vunpack.c.l.b16 %v2185
        %v2222 = vunpack.c.l.b16 %v2186
        %v2223 = vunpack.c.l.b16 %v2187
        %v2224 = vunpack.c.l.b16 %v2188
        %v2225 = vunpack.c.l.b16 %v2189
        %v2226 = vunpack.c.l.b16 %v2190
        %v2227 = vpack.c.b16 %v2212, %v2211
        %v2228 = vpack.c.b16 %v2214, %v2213
        %v2229 = vpack.c.b16 %v2216, %v2215
        %v2230 = vpack.c.b16 %v2218, %v2217
        %v2231 = vpack.c.b16 %v2220, %v2219
        %v2232 = vpack.c.b16 %v2222, %v2221
        %v2233 = vpack.c.b16 %v2224, %v2223
        %v2234 = vpack.c.b16 %v2226, %v2225
        %2243 = vmatpush.bf16.msra.mxu0 %v2234
        %2244 = vmatpush.bf16.msra.mxu0 %v2233
        %2245 = vmatpush.bf16.msra.mxu0 %v2232
        %2246 = vmatpush.bf16.msra.mxu0 %v2231
        %2247 = vmatpush.bf16.msra.mxu0 %v2230
        %2248 = vmatpush.bf16.msra.mxu0 %v2229
        %2249 = vmatpush.bf16.msra.mxu0 %v2228
        %2250 = vmatpush.bf16.msra.mxu0 %v2227
        %2251 = vmatmul.bf16.gmra.mxu0 %v2191
        %v2252 = vpop.f32.mrf.mxu0
        %v2253 = vadd.f32 %v2194, %v2252
        %v2254 = vpop.f32.mrf.mxu0
        %2255 = vdwg.mxu0
        %v2256 = vadd.f32 %v1478, %v2253
        %v2257 = vld [vmem:[%s12] sm:$0x1]
        %v2258 = vld [vmem:[%s13] sm:$0x1]
        %2259 = vadd.xlane.f32.xlu0 %v2256
        %v2260 = vpop.xlane.xlu0 %2259
        %v2261 = vmul.f32 %v2260, %v1452
        %v2262 = vsub.f32 %v2256, %v2261
        %v2263 = vmul.f32 %v2262, %v2262
        %2264 = vadd.xlane.f32.xlu0 %v2263
        %v2265 = vpop.xlane.xlu0 %2264
        %v2266 = vmul.f32 %v2265, %v1452
        %v2267 = vadd.f32 %v2266, 1e-05
        %v2268 = vrsqrt.pop %v2267
        %v2269 = vmul.f32 %v2268, %v2267
        %v2270 = vmul.f32 %v2269, %v2268
        %v2271 = vmul.f32 0.5, %v2270
        %v2272 = vsub.f32 1.5, %v2271
        %v2273 = vmul.f32 %v2268, %v2272
        %vm2274 = vweird.f32 %v2267
        %vm2275 = vweird.f32 %v2268
        %vm2276 = vmor %vm2274, %vm2275
        %v2277 = vsel %vm2276, %v2268, %v2273
        %v2278 = vmul.f32 %v2262, %v2277
        %v2280 = vperm.slane %v2257, 0
        %v2282 = vmul.f32 %v2278, %v2280
        %v2284 = vperm.slane %v2258, 0
        %v2286 = vadd.f32 %v2282, %v2284
        %v2287 = vld [vmem:[%s14] sm:$0xf]
        %v2288 = vld [vmem:[%s14 + $0x4] sm:$0xf]
        %v2289 = vld [vmem:[%s14 + $0x8] sm:$0xf]
        %v2290 = vld [vmem:[%s14 + $0xc] sm:$0xf]
        %v2291 = vld [vmem:[%s14 + $0x10] sm:$0xf]
        %v2292 = vld [vmem:[%s14 + $0x14] sm:$0xf]
        %v2293 = vld [vmem:[%s14 + $0x18] sm:$0xf]
        %v2294 = vld [vmem:[%s14 + $0x1c] sm:$0xf]
        %v2295 = vld [vmem:[%s14 + $0x20] sm:$0xf]
        %v2296 = vld [vmem:[%s14 + $0x24] sm:$0xf]
        %v2297 = vld [vmem:[%s14 + $0x28] sm:$0xf]
        %v2298 = vld [vmem:[%s14 + $0x2c] sm:$0xf]
        %v2299 = vld [vmem:[%s14 + $0x30] sm:$0xf]
        %v2300 = vld [vmem:[%s14 + $0x34] sm:$0xf]
        %v2301 = vld [vmem:[%s14 + $0x38] sm:$0xf]
        %v2302 = vld [vmem:[%s14 + $0x3c] sm:$0xf]
        %v2303 = vpack.c.bf16 %v2286, %v2286
        %v2304 = vld [vmem:[%s15] sm:$0x1]
        %v2305 = vunpack.c.l.bf16 %v2304
        %v2306 = vperm.slane %v2305, 0
        %v2323 = vunpack.c.l.b16 %v2287
        %v2324 = vunpack.c.l.b16 %v2288
        %v2325 = vunpack.c.l.b16 %v2289
        %v2326 = vunpack.c.l.b16 %v2290
        %v2327 = vunpack.c.l.b16 %v2291
        %v2328 = vunpack.c.l.b16 %v2292
        %v2329 = vunpack.c.l.b16 %v2293
        %v2330 = vunpack.c.l.b16 %v2294
        %v2331 = vunpack.c.l.b16 %v2295
        %v2332 = vunpack.c.l.b16 %v2296
        %v2333 = vunpack.c.l.b16 %v2297
        %v2334 = vunpack.c.l.b16 %v2298
        %v2335 = vunpack.c.l.b16 %v2299
        %v2336 = vunpack.c.l.b16 %v2300
        %v2337 = vunpack.c.l.b16 %v2301
        %v2338 = vunpack.c.l.b16 %v2302
        %v2339 = vpack.c.b16 %v2324, %v2323
        %v2340 = vpack.c.b16 %v2326, %v2325
        %v2341 = vpack.c.b16 %v2328, %v2327
        %v2342 = vpack.c.b16 %v2330, %v2329
        %v2343 = vpack.c.b16 %v2332, %v2331
        %v2344 = vpack.c.b16 %v2334, %v2333
        %v2345 = vpack.c.b16 %v2336, %v2335
        %v2346 = vpack.c.b16 %v2338, %v2337
        %2355 = vmatpush.bf16.msra.mxu0 %v2346
        %2356 = vmatpush.bf16.msra.mxu0 %v2345
        %2357 = vmatpush.bf16.msra.mxu0 %v2344
        %2358 = vmatpush.bf16.msra.mxu0 %v2343
        %2359 = vmatpush.bf16.msra.mxu0 %v2342
        %2360 = vmatpush.bf16.msra.mxu0 %v2341
        %2361 = vmatpush.bf16.msra.mxu0 %v2340
        %2362 = vmatpush.bf16.msra.mxu0 %v2339
        %2363 = vmatmul.bf16.gmra.mxu0 %v2303
        %v2364 = vpop.f32.mrf.mxu0
        %v2365 = vadd.f32 %v2306, %v2364
        %v2366 = vpop.f32.mrf.mxu0
        %2367 = vdwg.mxu0
        %v2368 = vmax.f32 %v2365, 0.0
        %v2369 = vld [vmem:[%s16] sm:$0xf]
        %v2370 = vld [vmem:[%s16 + $0x4] sm:$0xf]
        %v2371 = vld [vmem:[%s16 + $0x8] sm:$0xf]
        %v2372 = vld [vmem:[%s16 + $0xc] sm:$0xf]
        %v2373 = vld [vmem:[%s16 + $0x10] sm:$0xf]
        %v2374 = vld [vmem:[%s16 + $0x14] sm:$0xf]
        %v2375 = vld [vmem:[%s16 + $0x18] sm:$0xf]
        %v2376 = vld [vmem:[%s16 + $0x1c] sm:$0xf]
        %v2377 = vpack.c.bf16 %v2368, %v2368
        %v2378 = vld [vmem:[%s17] sm:$0x1]
        %v2379 = vunpack.c.l.bf16 %v2378
        %v2380 = vperm.slane %v2379, 0
        %v2389 = vunpack.c.l.b16 %v2369
        %v2390 = vunpack.c.l.b16 %v2370
        %v2391 = vunpack.c.l.b16 %v2371
        %v2392 = vunpack.c.l.b16 %v2372
        %v2393 = vunpack.c.l.b16 %v2373
        %v2394 = vunpack.c.l.b16 %v2374
        %v2395 = vunpack.c.l.b16 %v2375
        %v2396 = vunpack.c.l.b16 %v2376
        %v2397 = vpack.c.b16 %v2390, %v2389
        %v2398 = vpack.c.b16 %v2392, %v2391
        %v2399 = vpack.c.b16 %v2394, %v2393
        %v2400 = vpack.c.b16 %v2396, %v2395
        %vm2405 = vcmask 523264
        %v2407 = vsel %vm2405, %v2377, 0
        %2409 = vmatpush.bf16.msra.mxu0 0
        %2410 = vmatpush.bf16.msra.mxu0 0
        %2411 = vmatpush.bf16.msra.mxu0 0
        %2412 = vmatpush.bf16.msra.mxu0 0
        %2413 = vmatpush.bf16.msra.mxu0 %v2400
        %2414 = vmatpush.bf16.msra.mxu0 %v2399
        %2415 = vmatpush.bf16.msra.mxu0 %v2398
        %2416 = vmatpush.bf16.msra.mxu0 %v2397
        %2417 = vmatmul.bf16.gmra.mxu0 %v2407
        %v2418 = vpop.f32.mrf.mxu0
        %v2419 = vadd.f32 %v2380, %v2418
        %v2420 = vpop.f32.mrf.mxu0
        %2421 = vdwg.mxu0
        %v2422 = vadd.f32 %v2286, %v2419
        %v2423 = vld [vmem:[%s18] sm:$0x1]
        %v2424 = vld [vmem:[%s19] sm:$0x1]
        %2425 = vadd.xlane.f32.xlu0 %v2422
        %v2426 = vpop.xlane.xlu0 %2425
        %v2427 = vmul.f32 %v2426, %v1452
        %v2428 = vsub.f32 %v2422, %v2427
        %v2429 = vmul.f32 %v2428, %v2428
        %2430 = vadd.xlane.f32.xlu0 %v2429
        %v2431 = vpop.xlane.xlu0 %2430
        %v2432 = vmul.f32 %v2431, %v1452
        %v2433 = vadd.f32 %v2432, 1e-05
        %v2434 = vrsqrt.pop %v2433
        %v2435 = vmul.f32 %v2434, %v2433
        %v2436 = vmul.f32 %v2435, %v2434
        %v2437 = vmul.f32 0.5, %v2436
        %v2438 = vsub.f32 1.5, %v2437
        %v2439 = vmul.f32 %v2434, %v2438
        %vm2440 = vweird.f32 %v2433
        %vm2441 = vweird.f32 %v2434
        %vm2442 = vmor %vm2440, %vm2441
        %v2443 = vsel %vm2442, %v2434, %v2439
        %v2444 = vmul.f32 %v2428, %v2443
        %v2446 = vperm.slane %v2423, 0
        %v2448 = vmul.f32 %v2444, %v2446
        %v2450 = vperm.slane %v2424, 0
        %v2452 = vadd.f32 %v2448, %v2450
        %2453 = vst [vmem:[%s635] sm:$0xff] %v2452
        %s2454 = sand.u32 %s472, 1
        %s2455 = scalar_lea.sflag [#allocation4], %s2454
        %s2456 = sand.u32 %s472, 1
        %s2457 = smul.addr %s2456, 8
        %s2458 = scalar_lea.vmem [#allocation3], %s2457
        // Predicated region
        $region101: #{custom_transformer.3} parent=99 // pred_check
          %p2459 = pneg %p482
        $region102: #{custom_transformer.3} parent=99 // pred_check_branch
          %2461 = sbr.rel (%p2459) target = $region104
        $region103: #{custom_transformer.3} parent=99 // pred_region
          %2463 = vsyncadd %s2455, 0
          %s2464 = smul.addr %s34, 8
          %s2465 = scalar_lea.hbm %s20, %s2464
          %s2467 = sshll.u32 %s2458, 4
          %s2468 = int_to_ptr.vmem [resolvable:$true] %s2467
          %s2469 = sshll.u32 %s2465, 4
          %s2470 = int_to_ptr.hbm [resolvable:$true] %s2469
          %2472 = dma.vmem_to_hbm [thread:$0]  %s2468, 128, %s2470, %s2455
        $region104: #{custom_transformer.3} parent=99 // pred_fallthru
          _
      $region100: #{custom_transformer.3} parent=5 // pred_fallthru
        _
      %p2473 = scmp.le.s32.totalorder 2, %s29
      // Predicated region
      $region105: #{custom_transformer.3} parent=5 // pred_check
        %p2474 = pneg %p2473
      $region106: #{custom_transformer.3} parent=5 // pred_check_branch
        %2476 = sbr.rel (%p2474) target = $region108
      $region107: #{custom_transformer.3} parent=5 // pred_region
        %s2477 = ssub.s32 %s29, 2
        // Predicated region
        $region109: #{custom_transformer.3} parent=107 // pred_check
          %p2478 = pneg %p488
        $region110: #{custom_transformer.3} parent=107 // pred_check_branch
          %2480 = sbr.rel (%p2478) target = $region112
        $region111: #{custom_transformer.3} parent=107 // pred_region
          %s2481 = sand.u32 %s473, 1
          %s2482 = scalar_lea.sflag [#allocation4], %s2481
          %s2483 = sand.u32 %s473, 1
          %s2484 = smul.addr %s2483, 8
          %s2485 = scalar_lea.vmem [#allocation3], %s2484
          %2487 = dma.done %s2482, 128
        $region112: #{custom_transformer.3} parent=107 // pred_fallthru
          _
      $region108: #{custom_transformer.3} parent=5 // pred_fallthru
        _
    $region6: #{custom_transformer.3} parent=1 // loop_footer
      %s33 = sadd.s32 1, %s29
    $region7: #{custom_transformer.3} parent=1 // loop_footer_branch
      %28 = sbr.rel target = $region3
    $region8: #{custom_transformer.3} parent=1 // loop_exit
      _
    %2488 = vsyncpa [#allocation4], 1
    %s2489 = scalar_lea.sflag [#allocation4], 1
    %2490 = vsyncpa %s2489, 1

</llo_original>
